<compile_context>
chip_gen: v6e
topology: v6e:2x2x1
jax: 0.10.0
libtpu: 0.0.40
codegen_flags: <defaults>
</compile_context>

<pallas_src>
import functools

import jax
import jax.numpy as jnp
from jax.experimental import pallas as pl
from jax.experimental.pallas import tpu as pltpu

# ----------------------------- config (small test shapes) --------------------
B = 2          # batch
S_IMG = 8      # image tokens (incl. CLS) entering forward()
N_PRO = 4      # number of visual prompt tokens (torch default 12)
LAYERS = 4     # number of transformer resblocks
LAYER_P = 4    # prompt-replacement depth (torch default 12)
D = 32         # hidden width
H = 4          # attention heads
HD = D // H    # head dim
MLP = 4 * D    # MLP hidden width
P_OUT = 16     # output projection dim (visual.proj)
EPS = 1e-5     # nn.LayerNorm default


# --------------------------- kernel helpers ----------------------------------
def _ln(x, w, b):
    """LayerNorm over the last dim, statistics in f32."""
    x = x.astype(jnp.float32)
    mu = jnp.mean(x, axis=-1, keepdims=True)
    var = jnp.mean((x - mu) ** 2, axis=-1, keepdims=True)
    return (x - mu) * jax.lax.rsqrt(var + EPS) * w.astype(jnp.float32) \
        + b.astype(jnp.float32)


def _bf16(x):
    return x.astype(jnp.bfloat16)


# ------------------------------ fused kernel ---------------------------------
def encoder_kernel(x_img_ref, ctx_ref, prepost_ref, proj_ref,
                   attn_w_ref, w1_ref, w2_ref, norm_ref, bias_ref,
                   o_ref, x_scr,
                   *, batch, num_heads, head_dim, s_img, n_pro, layer_p):
    l = pl.program_id(0)
    n_layers = pl.num_programs(0)
    d = x_scr.shape[1]
    s_tot = s_img + n_pro
    three_d = 3 * d

    # ---- layer 0: tokens = ln_pre(cat([image tokens, prompts(layer 0)])) ----
    @pl.when(l == 0)
    def _():
        pre_w = prepost_ref[0:1, :]
        pre_b = prepost_ref[1:2, :]
        for b in range(batch):
            r0 = b * s_tot
            x_scr[r0:r0 + s_img, :] = _ln(x_img_ref[b], pre_w, pre_b)
            x_scr[r0 + s_img:r0 + s_tot, :] = _ln(ctx_ref[b, 0], pre_w, pre_b)

    # ---- layers 1..layer_p-1: swap in this layer's prompts (raw, no ln_pre) --
    @pl.when(jnp.logical_and(l >= 1, l < layer_p))
    def _():
        for b in range(batch):
            r0 = b * s_tot
            x_scr[r0 + s_img:r0 + s_tot, :] = ctx_ref[b, 0].astype(jnp.float32)

    # ---- per-layer parameters (merged blobs) ----
    aw = attn_w_ref[0]                          # (D, 4D) bf16
    w_qkv = aw[:, :three_d]                     # (D, 3D)
    w_out = aw[:, three_d:]                     # (D, D)
    nv = norm_ref[0]                            # (6, D) f32
    ln1_w, ln1_b = nv[0:1], nv[1:2]
    ln2_w, ln2_b = nv[2:3], nv[3:4]
    bo, b2 = nv[4:5], nv[5:6]
    bias = bias_ref[0]                          # (1, 3D + MLP) f32
    b_qkv = bias[:, :three_d]
    b_fc1 = bias[:, three_d:]

    x = x_scr[...]                              # (B*S_tot, D) f32
    scale = 1.0 / (head_dim ** 0.5)

    # ---- attention: x = x + attn(ln_1(x)) ----
    h = _bf16(_ln(x, ln1_w, ln1_b))                                   # (B*S, D)
    qkv = jnp.dot(h, w_qkv, preferred_element_type=jnp.float32) + b_qkv  # (B*S, 3D)

    ctx_rows = []
    for b in range(batch):                       # static unroll (within-batch attn)
        r0 = b * s_tot
        rows = qkv[r0:r0 + s_tot, :]             # (S, 3D)
        head_ctx = []
        for hh in range(num_heads):              # per-head score matmuls (inherent)
            c0 = hh * head_dim
            q = _bf16(rows[:, c0:c0 + head_dim])
            k = _bf16(rows[:, d + c0:d + c0 + head_dim])
            v = _bf16(rows[:, 2 * d + c0:2 * d + c0 + head_dim])
            s = jnp.einsum('qe,ke->qk', q, k,
                           preferred_element_type=jnp.float32) * scale
            s = s - jnp.max(s, axis=-1, keepdims=True)
            p = jnp.exp(s)
            p = p * pl.reciprocal(jnp.sum(p, axis=-1, keepdims=True), approx=True)
            head_ctx.append(jnp.dot(_bf16(p), v,
                                    preferred_element_type=jnp.float32))
        ctx_rows.append(jnp.concatenate(head_ctx, axis=-1))          # (S, D)
    ctx_all = jnp.concatenate(ctx_rows, axis=0)                      # (B*S, D)

    # single lane-dense out-proj matmul; head reduction folded into the MXU K dim
    x = x + jnp.dot(_bf16(ctx_all), w_out,
                    preferred_element_type=jnp.float32) + bo

    # ---- MLP: x = x + c_proj(QuickGELU(c_fc(ln_2(x)))) ----
    h2 = _bf16(_ln(x, ln2_w, ln2_b))
    m = jnp.dot(h2, w1_ref[0], preferred_element_type=jnp.float32) + b_fc1
    m = m * jax.nn.sigmoid(1.702 * m)
    x = x + jnp.dot(_bf16(m), w2_ref[0], preferred_element_type=jnp.float32) + b2

    x_scr[...] = x

    # ---- last layer: ln_post on the CLS token of each batch elem, then proj --
    @pl.when(l == n_layers - 1)
    def _():
        cls = jnp.concatenate(
            [x[b * s_tot:b * s_tot + 1, :] for b in range(batch)], axis=0)  # (B, D)
        post_w = prepost_ref[2:3, :]
        post_b = prepost_ref[3:4, :]
        hc = _bf16(_ln(cls, post_w, post_b))
        o_ref[...] = jnp.dot(hc, proj_ref[...],
                             preferred_element_type=jnp.float32
                             ).astype(o_ref.dtype)


# ------------------------------ wrapper ---------------------------------------
@jax.jit
def vision_encoder_forward(x, ctx_v, params):
    """Mirrors VisionEncoder.forward (batch-first layout), one fused kernel."""
    b, s_img, d = x.shape
    layer_p, n_pro = ctx_v.shape[1], ctx_v.shape[2]
    n_layers, _, mlp = params["mlp_w1"].shape
    s_tot = s_img + n_pro
    p_out = params["proj"].shape[1]

    x_spec = pl.BlockSpec((b, s_img, d), lambda l: (0, 0, 0))
    ctx_spec = pl.BlockSpec((b, 1, n_pro, d),
                            lambda l: (0, jnp.minimum(l, layer_p - 1), 0, 0))
    pp_spec = pl.BlockSpec((4, d), lambda l: (0, 0))
    proj_spec = pl.BlockSpec((d, p_out), lambda l: (0, 0))
    attn_spec = pl.BlockSpec((1, d, 4 * d), lambda l: (l, 0, 0))
    w1_spec = pl.BlockSpec((1, d, mlp), lambda l: (l, 0, 0))
    w2_spec = pl.BlockSpec((1, mlp, d), lambda l: (l, 0, 0))
    nv_spec = pl.BlockSpec((1, 6, d), lambda l: (l, 0, 0))
    bias_spec = pl.BlockSpec((1, 1, 3 * d + mlp), lambda l: (l, 0, 0))
    out_spec = pl.BlockSpec((b, p_out), lambda l: (0, 0))

    out = pl.pallas_call(
        functools.partial(encoder_kernel, batch=b, num_heads=H, head_dim=d // H,
                          s_img=s_img, n_pro=n_pro, layer_p=layer_p),
        out_shape=jax.ShapeDtypeStruct((b, p_out), x.dtype),
        grid=(n_layers,),
        in_specs=[x_spec, ctx_spec, pp_spec, proj_spec,
                  attn_spec, w1_spec, w2_spec, nv_spec, bias_spec],
        out_specs=out_spec,
        scratch_shapes=[pltpu.VMEM((b * s_tot, d), jnp.float32)],
        compiler_params=pltpu.CompilerParams(
            dimension_semantics=("arbitrary",),      # layer axis carries x_scr
            vmem_limit_bytes=32 * 1024 * 1024),      # budget for bf16 weights
    )(x, ctx_v, params["prepost"], params["proj"],
      params["attn_w"], params["mlp_w1"], params["mlp_w2"],
      params["norm_vec"], params["bias_wide"])
    return out


# --------------------------- parameter init -----------------------------------
def init_params(key):
    """Random CLIP-like params, pre-packed/pre-cast into the kernel's operand blobs.

    NOTE: matmul weights are stored as the transpose of torch's
    in_proj_weight / out_proj.weight / c_fc.weight / c_proj.weight; loading a
    real checkpoint requires one transpose per weight.
    """
    f32 = jnp.float32
    ks = jax.random.split(key, 12)

    def normal(k, shape, scale=0.02):
        return (scale * jax.random.normal(k, shape)).astype(f32)

    w_qkv = normal(ks[0], (LAYERS, D, 3 * D))        # = in_proj_weight.T
    w_out = normal(ks[1], (LAYERS, D, D))            # = out_proj.weight.T
    w_fc1 = normal(ks[2], (LAYERS, D, MLP))          # = c_fc.weight.T
    w_fc2 = normal(ks[3], (LAYERS, MLP, D))          # = c_proj.weight.T
    proj = normal(ks[4], (D, P_OUT))

    ln1_w = 1.0 + normal(ks[5], (LAYERS, D), 0.05)
    ln1_b = normal(ks[5], (LAYERS, D), 0.05)
    ln2_w = 1.0 + normal(ks[6], (LAYERS, D), 0.05)
    ln2_b = normal(ks[6], (LAYERS, D), 0.05)
    bo = normal(ks[7], (LAYERS, D), 0.05)
    b2 = normal(ks[7], (LAYERS, D), 0.05)
    b_qkv = normal(ks[8], (LAYERS, 3 * D), 0.05)
    b_fc1 = normal(ks[9], (LAYERS, MLP), 0.05)

    pre_w = 1.0 + normal(ks[10], (D,), 0.05)
    pre_b = normal(ks[10], (D,), 0.05)
    post_w = 1.0 + normal(ks[11], (D,), 0.05)
    post_b = normal(ks[11], (D,), 0.05)

    return dict(
        # bf16 matmul weights (halves DMA bytes and double-buffered VMEM)
        attn_w=jnp.concatenate([w_qkv, w_out], axis=-1).astype(jnp.bfloat16),
        mlp_w1=w_fc1.astype(jnp.bfloat16),
        mlp_w2=w_fc2.astype(jnp.bfloat16),
        # f32 LN params / narrow biases, merged into few blobs
        norm_vec=jnp.stack([ln1_w, ln1_b, ln2_w, ln2_b, bo, b2], axis=1),   # (L,6,D)
        bias_wide=jnp.concatenate([b_qkv, b_fc1], axis=-1)[:, None, :],     # (L,1,3D+MLP)
        prepost=jnp.stack([pre_w, pre_b, post_w, post_b], axis=0),          # (4,D)
        proj=proj.astype(jnp.bfloat16),                                     # (D,P_OUT)
    )


# ------------------------------- main ------------------------------------------
if __name__ == "__main__":
    key = jax.random.PRNGKey(0)
    k_x, k_ctx, k_p = jax.random.split(key, 3)

    # x: token embeddings entering VisionEncoder.forward  [B, S_img, D]
    x = jax.random.normal(k_x, (B, S_IMG, D), dtype=jnp.float32)
    # ctx_v: per-layer visual prompts                     [B, LAYER_P, N_PRO, D]
    ctx_v = jax.random.normal(k_ctx, (B, LAYER_P, N_PRO, D), dtype=jnp.float32)

    params = init_params(k_p)

    out = vision_encoder_forward(x, ctx_v, params)
    out = jax.block_until_ready(out)

    assert out.shape == (B, P_OUT), out.shape
    assert bool(jnp.all(jnp.isfinite(out)))
    print("KERNEL_OK")
</pallas_src>

<mosaic_0001>
module attributes {stable_mosaic.version = 11 : i64} {
  func.func @encoder_kernel(%arg0: i32, %arg1: memref<2x8x32xf32, #tpu.memory_space<vmem>>, %arg2: memref<2x1x4x32xf32, #tpu.memory_space<vmem>>, %arg3: memref<4x32xf32, #tpu.memory_space<vmem>>, %arg4: memref<32x16xbf16, #tpu.memory_space<vmem>>, %arg5: memref<1x32x128xbf16, #tpu.memory_space<vmem>>, %arg6: memref<1x32x128xbf16, #tpu.memory_space<vmem>>, %arg7: memref<1x128x32xbf16, #tpu.memory_space<vmem>>, %arg8: memref<1x6x32xf32, #tpu.memory_space<vmem>>, %arg9: memref<1x1x224xf32, #tpu.memory_space<vmem>>, %arg10: memref<2x16xf32, #tpu.memory_space<vmem>>, %arg11: memref<24x32xf32, #tpu.memory_space<vmem>>) attributes {dimension_semantics = [#tpu.dimension_semantics<arbitrary>], iteration_bounds = array<i64: 4>, scalar_prefetch = 0 : i64, scratch_operands = 1 : i64, tpu.core_type = #tpu.core_type<tc>, window_params = [{pipeline_mode = #tpu.pipeline_mode<synchronous>, transform_indices = @transform_0, window_bounds = array<i64: 2, 8, 32>}, {transform_indices = @transform_1, window_bounds = array<i64: 2, 1, 4, 32>}, {pipeline_mode = #tpu.pipeline_mode<synchronous>, transform_indices = @transform_2, window_bounds = array<i64: 4, 32>}, {pipeline_mode = #tpu.pipeline_mode<synchronous>, transform_indices = @transform_3, window_bounds = array<i64: 32, 16>}, {transform_indices = @transform_4, window_bounds = array<i64: 1, 32, 128>}, {transform_indices = @transform_5, window_bounds = array<i64: 1, 32, 128>}, {transform_indices = @transform_6, window_bounds = array<i64: 1, 128, 32>}, {transform_indices = @transform_7, window_bounds = array<i64: 1, 6, 32>}, {transform_indices = @transform_8, window_bounds = array<i64: 1, 1, 224>}, {pipeline_mode = #tpu.pipeline_mode<synchronous>, transform_indices = @transform_9, window_bounds = array<i64: 2, 16>}]} {
    %c0_i32 = arith.constant 0 : i32
    %0 = arith.cmpi eq, %arg0, %c0_i32 : i32
    %1 = arith.extui %0 : i1 to i32
    %c0_i32_0 = arith.constant 0 : i32
    %2 = arith.cmpi ne, %1, %c0_i32_0 : i32
    scf.if %2 {
      %c0_76 = arith.constant 0 : index
      %c0_77 = arith.constant 0 : index
      %276 = vector.load %arg3[%c0_76, %c0_77] : memref<4x32xf32, #tpu.memory_space<vmem>>, vector<1x32xf32>
      %c1 = arith.constant 1 : index
      %c0_78 = arith.constant 0 : index
      %277 = vector.load %arg3[%c1, %c0_78] : memref<4x32xf32, #tpu.memory_space<vmem>>, vector<1x32xf32>
      %c0_79 = arith.constant 0 : index
      %c0_80 = arith.constant 0 : index
      %c0_81 = arith.constant 0 : index
      %278 = vector.load %arg1[%c0_79, %c0_80, %c0_81] : memref<2x8x32xf32, #tpu.memory_space<vmem>>, vector<1x8x32xf32>
      %279 = vector.shape_cast %278 : vector<1x8x32xf32> to vector<8x32xf32>
      %cst_82 = arith.constant dense<0.000000e+00> : vector<8xf32>
      %280 = vector.multi_reduction <add>, %279, %cst_82 [1] : vector<8x32xf32> to vector<8xf32>
      %281 = vector.shape_cast %280 : vector<8xf32> to vector<8x1xf32>
      %cst_83 = arith.constant 3.200000e+01 : f32
      %282 = vector.broadcast %cst_83 : f32 to vector<8x1xf32>
      %283 = arith.divf %281, %282 : vector<8x1xf32>
      %284 = vector.broadcast %283 : vector<8x1xf32> to vector<8x32xf32>
      %285 = arith.subf %279, %284 : vector<8x32xf32>
      %286 = arith.mulf %285, %285 : vector<8x32xf32>
      %cst_84 = arith.constant dense<0.000000e+00> : vector<8xf32>
      %287 = vector.multi_reduction <add>, %286, %cst_84 [1] : vector<8x32xf32> to vector<8xf32>
      %288 = vector.shape_cast %287 : vector<8xf32> to vector<8x1xf32>
      %cst_85 = arith.constant 3.200000e+01 : f32
      %289 = vector.broadcast %cst_85 : f32 to vector<8x1xf32>
      %290 = arith.divf %288, %289 : vector<8x1xf32>
      %291 = vector.broadcast %283 : vector<8x1xf32> to vector<8x32xf32>
      %292 = arith.subf %279, %291 : vector<8x32xf32>
      %cst_86 = arith.constant 9.99999974E-6 : f32
      %293 = vector.broadcast %cst_86 : f32 to vector<8x1xf32>
      %294 = arith.addf %290, %293 : vector<8x1xf32>
      %295 = math.rsqrt %294 : vector<8x1xf32>
      %296 = vector.broadcast %295 : vector<8x1xf32> to vector<8x32xf32>
      %297 = arith.mulf %292, %296 : vector<8x32xf32>
      %298 = vector.broadcast %276 : vector<1x32xf32> to vector<8x32xf32>
      %299 = arith.mulf %297, %298 : vector<8x32xf32>
      %300 = vector.broadcast %277 : vector<1x32xf32> to vector<8x32xf32>
      %301 = arith.addf %299, %300 : vector<8x32xf32>
      %c0_87 = arith.constant 0 : index
      %c0_88 = arith.constant 0 : index
      %302 = vector.load %arg11[%c0_87, %c0_88] : memref<24x32xf32, #tpu.memory_space<vmem>>, vector<8x32xf32>
      tpu.vector_store %arg11[%c0_87, %c0_88], %301 {strides = array<i32>} : memref<24x32xf32, #tpu.memory_space<vmem>>, vector<8x32xf32>,
      %c0_89 = arith.constant 0 : index
      %c0_90 = arith.constant 0 : index
      %c0_91 = arith.constant 0 : index
      %c0_92 = arith.constant 0 : index
      %303 = vector.load %arg2[%c0_89, %c0_90, %c0_91, %c0_92] : memref<2x1x4x32xf32, #tpu.memory_space<vmem>>, vector<1x1x4x32xf32>
      %304 = vector.shape_cast %303 : vector<1x1x4x32xf32> to vector<4x32xf32>
      %cst_93 = arith.constant dense<0.000000e+00> : vector<4xf32>
      %305 = vector.multi_reduction <add>, %304, %cst_93 [1] : vector<4x32xf32> to vector<4xf32>
      %306 = vector.shape_cast %305 : vector<4xf32> to vector<4x1xf32>
      %cst_94 = arith.constant 3.200000e+01 : f32
      %307 = vector.broadcast %cst_94 : f32 to vector<4x1xf32>
      %308 = arith.divf %306, %307 : vector<4x1xf32>
      %309 = vector.broadcast %308 : vector<4x1xf32> to vector<4x32xf32>
      %310 = arith.subf %304, %309 : vector<4x32xf32>
      %311 = arith.mulf %310, %310 : vector<4x32xf32>
      %cst_95 = arith.constant dense<0.000000e+00> : vector<4xf32>
      %312 = vector.multi_reduction <add>, %311, %cst_95 [1] : vector<4x32xf32> to vector<4xf32>
      %313 = vector.shape_cast %312 : vector<4xf32> to vector<4x1xf32>
      %cst_96 = arith.constant 3.200000e+01 : f32
      %314 = vector.broadcast %cst_96 : f32 to vector<4x1xf32>
      %315 = arith.divf %313, %314 : vector<4x1xf32>
      %316 = vector.broadcast %308 : vector<4x1xf32> to vector<4x32xf32>
      %317 = arith.subf %304, %316 : vector<4x32xf32>
      %cst_97 = arith.constant 9.99999974E-6 : f32
      %318 = vector.broadcast %cst_97 : f32 to vector<4x1xf32>
      %319 = arith.addf %315, %318 : vector<4x1xf32>
      %320 = math.rsqrt %319 : vector<4x1xf32>
      %321 = vector.broadcast %320 : vector<4x1xf32> to vector<4x32xf32>
      %322 = arith.mulf %317, %321 : vector<4x32xf32>
      %323 = vector.broadcast %276 : vector<1x32xf32> to vector<4x32xf32>
      %324 = arith.mulf %322, %323 : vector<4x32xf32>
      %325 = vector.broadcast %277 : vector<1x32xf32> to vector<4x32xf32>
      %326 = arith.addf %324, %325 : vector<4x32xf32>
      %c8 = arith.constant 8 : index
      %c0_98 = arith.constant 0 : index
      %327 = vector.load %arg11[%c8, %c0_98] : memref<24x32xf32, #tpu.memory_space<vmem>>, vector<4x32xf32>
      tpu.vector_store %arg11[%c8, %c0_98], %326 {strides = array<i32>} : memref<24x32xf32, #tpu.memory_space<vmem>>, vector<4x32xf32>,
      %c1_99 = arith.constant 1 : index
      %c0_100 = arith.constant 0 : index
      %c0_101 = arith.constant 0 : index
      %328 = vector.load %arg1[%c1_99, %c0_100, %c0_101] : memref<2x8x32xf32, #tpu.memory_space<vmem>>, vector<1x8x32xf32>
      %329 = vector.shape_cast %328 : vector<1x8x32xf32> to vector<8x32xf32>
      %cst_102 = arith.constant dense<0.000000e+00> : vector<8xf32>
      %330 = vector.multi_reduction <add>, %329, %cst_102 [1] : vector<8x32xf32> to vector<8xf32>
      %331 = vector.shape_cast %330 : vector<8xf32> to vector<8x1xf32>
      %cst_103 = arith.constant 3.200000e+01 : f32
      %332 = vector.broadcast %cst_103 : f32 to vector<8x1xf32>
      %333 = arith.divf %331, %332 : vector<8x1xf32>
      %334 = vector.broadcast %333 : vector<8x1xf32> to vector<8x32xf32>
      %335 = arith.subf %329, %334 : vector<8x32xf32>
      %336 = arith.mulf %335, %335 : vector<8x32xf32>
      %cst_104 = arith.constant dense<0.000000e+00> : vector<8xf32>
      %337 = vector.multi_reduction <add>, %336, %cst_104 [1] : vector<8x32xf32> to vector<8xf32>
      %338 = vector.shape_cast %337 : vector<8xf32> to vector<8x1xf32>
      %cst_105 = arith.constant 3.200000e+01 : f32
      %339 = vector.broadcast %cst_105 : f32 to vector<8x1xf32>
      %340 = arith.divf %338, %339 : vector<8x1xf32>
      %341 = vector.broadcast %333 : vector<8x1xf32> to vector<8x32xf32>
      %342 = arith.subf %329, %341 : vector<8x32xf32>
      %cst_106 = arith.constant 9.99999974E-6 : f32
      %343 = vector.broadcast %cst_106 : f32 to vector<8x1xf32>
      %344 = arith.addf %340, %343 : vector<8x1xf32>
      %345 = math.rsqrt %344 : vector<8x1xf32>
      %346 = vector.broadcast %345 : vector<8x1xf32> to vector<8x32xf32>
      %347 = arith.mulf %342, %346 : vector<8x32xf32>
      %348 = vector.broadcast %276 : vector<1x32xf32> to vector<8x32xf32>
      %349 = arith.mulf %347, %348 : vector<8x32xf32>
      %350 = vector.broadcast %277 : vector<1x32xf32> to vector<8x32xf32>
      %351 = arith.addf %349, %350 : vector<8x32xf32>
      %c12 = arith.constant 12 : index
      %c0_107 = arith.constant 0 : index
      %352 = vector.load %arg11[%c12, %c0_107] : memref<24x32xf32, #tpu.memory_space<vmem>>, vector<8x32xf32>
      tpu.vector_store %arg11[%c12, %c0_107], %351 {strides = array<i32>} : memref<24x32xf32, #tpu.memory_space<vmem>>, vector<8x32xf32>,
      %c1_108 = arith.constant 1 : index
      %c0_109 = arith.constant 0 : index
      %c0_110 = arith.constant 0 : index
      %c0_111 = arith.constant 0 : index
      %353 = vector.load %arg2[%c1_108, %c0_109, %c0_110, %c0_111] : memref<2x1x4x32xf32, #tpu.memory_space<vmem>>, vector<1x1x4x32xf32>
      %354 = vector.shape_cast %353 : vector<1x1x4x32xf32> to vector<4x32xf32>
      %cst_112 = arith.constant dense<0.000000e+00> : vector<4xf32>
      %355 = vector.multi_reduction <add>, %354, %cst_112 [1] : vector<4x32xf32> to vector<4xf32>
      %356 = vector.shape_cast %355 : vector<4xf32> to vector<4x1xf32>
      %cst_113 = arith.constant 3.200000e+01 : f32
      %357 = vector.broadcast %cst_113 : f32 to vector<4x1xf32>
      %358 = arith.divf %356, %357 : vector<4x1xf32>
      %359 = vector.broadcast %358 : vector<4x1xf32> to vector<4x32xf32>
      %360 = arith.subf %354, %359 : vector<4x32xf32>
      %361 = arith.mulf %360, %360 : vector<4x32xf32>
      %cst_114 = arith.constant dense<0.000000e+00> : vector<4xf32>
      %362 = vector.multi_reduction <add>, %361, %cst_114 [1] : vector<4x32xf32> to vector<4xf32>
      %363 = vector.shape_cast %362 : vector<4xf32> to vector<4x1xf32>
      %cst_115 = arith.constant 3.200000e+01 : f32
      %364 = vector.broadcast %cst_115 : f32 to vector<4x1xf32>
      %365 = arith.divf %363, %364 : vector<4x1xf32>
      %366 = vector.broadcast %358 : vector<4x1xf32> to vector<4x32xf32>
      %367 = arith.subf %354, %366 : vector<4x32xf32>
      %cst_116 = arith.constant 9.99999974E-6 : f32
      %368 = vector.broadcast %cst_116 : f32 to vector<4x1xf32>
      %369 = arith.addf %365, %368 : vector<4x1xf32>
      %370 = math.rsqrt %369 : vector<4x1xf32>
      %371 = vector.broadcast %370 : vector<4x1xf32> to vector<4x32xf32>
      %372 = arith.mulf %367, %371 : vector<4x32xf32>
      %373 = vector.broadcast %276 : vector<1x32xf32> to vector<4x32xf32>
      %374 = arith.mulf %372, %373 : vector<4x32xf32>
      %375 = vector.broadcast %277 : vector<1x32xf32> to vector<4x32xf32>
      %376 = arith.addf %374, %375 : vector<4x32xf32>
      %c20 = arith.constant 20 : index
      %c0_117 = arith.constant 0 : index
      %377 = vector.load %arg11[%c20, %c0_117] : memref<24x32xf32, #tpu.memory_space<vmem>>, vector<4x32xf32>
      tpu.vector_store %arg11[%c20, %c0_117], %376 {strides = array<i32>} : memref<24x32xf32, #tpu.memory_space<vmem>>, vector<4x32xf32>,
    } else {
    }
    %c1_i32 = arith.constant 1 : i32
    %3 = arith.cmpi sge, %arg0, %c1_i32 : i32
    %c4_i32 = arith.constant 4 : i32
    %4 = arith.cmpi slt, %arg0, %c4_i32 : i32
    %5 = arith.andi %3, %4 : i1
    %6 = arith.extui %5 : i1 to i32
    %c0_i32_1 = arith.constant 0 : i32
    %7 = arith.cmpi ne, %6, %c0_i32_1 : i32
    scf.if %7 {
      %c0_76 = arith.constant 0 : index
      %c0_77 = arith.constant 0 : index
      %c0_78 = arith.constant 0 : index
      %c0_79 = arith.constant 0 : index
      %276 = vector.load %arg2[%c0_76, %c0_77, %c0_78, %c0_79] : memref<2x1x4x32xf32, #tpu.memory_space<vmem>>, vector<1x1x4x32xf32>
      %277 = vector.shape_cast %276 : vector<1x1x4x32xf32> to vector<4x32xf32>
      %c8 = arith.constant 8 : index
      %c0_80 = arith.constant 0 : index
      %278 = vector.load %arg11[%c8, %c0_80] : memref<24x32xf32, #tpu.memory_space<vmem>>, vector<4x32xf32>
      tpu.vector_store %arg11[%c8, %c0_80], %277 {strides = array<i32>} : memref<24x32xf32, #tpu.memory_space<vmem>>, vector<4x32xf32>,
      %c1 = arith.constant 1 : index
      %c0_81 = arith.constant 0 : index
      %c0_82 = arith.constant 0 : index
      %c0_83 = arith.constant 0 : index
      %279 = vector.load %arg2[%c1, %c0_81, %c0_82, %c0_83] : memref<2x1x4x32xf32, #tpu.memory_space<vmem>>, vector<1x1x4x32xf32>
      %280 = vector.shape_cast %279 : vector<1x1x4x32xf32> to vector<4x32xf32>
      %c20 = arith.constant 20 : index
      %c0_84 = arith.constant 0 : index
      %281 = vector.load %arg11[%c20, %c0_84] : memref<24x32xf32, #tpu.memory_space<vmem>>, vector<4x32xf32>
      tpu.vector_store %arg11[%c20, %c0_84], %280 {strides = array<i32>} : memref<24x32xf32, #tpu.memory_space<vmem>>, vector<4x32xf32>,
    } else {
    }
    %c0 = arith.constant 0 : index
    %c0_2 = arith.constant 0 : index
    %c0_3 = arith.constant 0 : index
    %8 = vector.load %arg5[%c0, %c0_2, %c0_3] : memref<1x32x128xbf16, #tpu.memory_space<vmem>>, vector<1x32x128xbf16>
    %9 = vector.shape_cast %8 : vector<1x32x128xbf16> to vector<32x128xbf16>
    %10 = vector.extract_strided_slice %9 {offsets = [0, 0], sizes = [32, 96], strides = [1, 1]} : vector<32x128xbf16> to vector<32x96xbf16>
    %11 = vector.extract_strided_slice %9 {offsets = [0, 96], sizes = [32, 32], strides = [1, 1]} : vector<32x128xbf16> to vector<32x32xbf16>
    %c0_4 = arith.constant 0 : index
    %c0_5 = arith.constant 0 : index
    %c0_6 = arith.constant 0 : index
    %12 = vector.load %arg8[%c0_4, %c0_5, %c0_6] : memref<1x6x32xf32, #tpu.memory_space<vmem>>, vector<1x6x32xf32>
    %13 = vector.shape_cast %12 : vector<1x6x32xf32> to vector<6x32xf32>
    %14 = vector.extract_strided_slice %13 {offsets = [0, 0], sizes = [1, 32], strides = [1, 1]} : vector<6x32xf32> to vector<1x32xf32>
    %15 = vector.extract_strided_slice %13 {offsets = [1, 0], sizes = [1, 32], strides = [1, 1]} : vector<6x32xf32> to vector<1x32xf32>
    %16 = vector.extract_strided_slice %13 {offsets = [2, 0], sizes = [1, 32], strides = [1, 1]} : vector<6x32xf32> to vector<1x32xf32>
    %17 = vector.extract_strided_slice %13 {offsets = [3, 0], sizes = [1, 32], strides = [1, 1]} : vector<6x32xf32> to vector<1x32xf32>
    %18 = vector.extract_strided_slice %13 {offsets = [4, 0], sizes = [1, 32], strides = [1, 1]} : vector<6x32xf32> to vector<1x32xf32>
    %19 = vector.extract_strided_slice %13 {offsets = [5, 0], sizes = [1, 32], strides = [1, 1]} : vector<6x32xf32> to vector<1x32xf32>
    %c0_7 = arith.constant 0 : index
    %c0_8 = arith.constant 0 : index
    %c0_9 = arith.constant 0 : index
    %20 = vector.load %arg9[%c0_7, %c0_8, %c0_9] : memref<1x1x224xf32, #tpu.memory_space<vmem>>, vector<1x1x224xf32>
    %21 = vector.shape_cast %20 : vector<1x1x224xf32> to vector<1x224xf32>
    %22 = vector.extract_strided_slice %21 {offsets = [0, 0], sizes = [1, 96], strides = [1, 1]} : vector<1x224xf32> to vector<1x96xf32>
    %23 = vector.extract_strided_slice %21 {offsets = [0, 96], sizes = [1, 128], strides = [1, 1]} : vector<1x224xf32> to vector<1x128xf32>
    %c0_10 = arith.constant 0 : index
    %c0_11 = arith.constant 0 : index
    %24 = vector.load %arg11[%c0_10, %c0_11] : memref<24x32xf32, #tpu.memory_space<vmem>>, vector<24x32xf32>
    %cst = arith.constant dense<0.000000e+00> : vector<24xf32>
    %25 = vector.multi_reduction <add>, %24, %cst [1] : vector<24x32xf32> to vector<24xf32>
    %26 = vector.shape_cast %25 : vector<24xf32> to vector<24x1xf32>
    %cst_12 = arith.constant 3.200000e+01 : f32
    %27 = vector.broadcast %cst_12 : f32 to vector<24x1xf32>
    %28 = arith.divf %26, %27 : vector<24x1xf32>
    %29 = vector.broadcast %28 : vector<24x1xf32> to vector<24x32xf32>
    %30 = arith.subf %24, %29 : vector<24x32xf32>
    %31 = arith.mulf %30, %30 : vector<24x32xf32>
    %cst_13 = arith.constant dense<0.000000e+00> : vector<24xf32>
    %32 = vector.multi_reduction <add>, %31, %cst_13 [1] : vector<24x32xf32> to vector<24xf32>
    %33 = vector.shape_cast %32 : vector<24xf32> to vector<24x1xf32>
    %cst_14 = arith.constant 3.200000e+01 : f32
    %34 = vector.broadcast %cst_14 : f32 to vector<24x1xf32>
    %35 = arith.divf %33, %34 : vector<24x1xf32>
    %36 = vector.broadcast %28 : vector<24x1xf32> to vector<24x32xf32>
    %37 = arith.subf %24, %36 : vector<24x32xf32>
    %cst_15 = arith.constant 9.99999974E-6 : f32
    %38 = vector.broadcast %cst_15 : f32 to vector<24x1xf32>
    %39 = arith.addf %35, %38 : vector<24x1xf32>
    %40 = math.rsqrt %39 : vector<24x1xf32>
    %41 = vector.broadcast %40 : vector<24x1xf32> to vector<24x32xf32>
    %42 = arith.mulf %37, %41 : vector<24x32xf32>
    %43 = vector.broadcast %14 : vector<1x32xf32> to vector<24x32xf32>
    %44 = arith.mulf %42, %43 : vector<24x32xf32>
    %45 = vector.broadcast %15 : vector<1x32xf32> to vector<24x32xf32>
    %46 = arith.addf %44, %45 : vector<24x32xf32>
    %47 = arith.truncf %46 : vector<24x32xf32> to vector<24x32xbf16>
    %cst_16 = arith.constant dense<0.000000e+00> : vector<24x96xf32>
    %48 = tpu.matmul %47, %10, %cst_16 {dimension_numbers = #tpu.dot_dimension_numbers<[1], [0], [0], [1], [0, 0, 1, 1], [], []>} : vector<24x32xbf16>, vector<32x96xbf16>, vector<24x96xf32> -> vector<24x96xf32>
    %49 = vector.broadcast %22 : vector<1x96xf32> to vector<24x96xf32>
    %50 = arith.addf %48, %49 : vector<24x96xf32>
    %51 = vector.extract_strided_slice %50 {offsets = [0, 0], sizes = [12, 96], strides = [1, 1]} : vector<24x96xf32> to vector<12x96xf32>
    %52 = vector.extract_strided_slice %51 {offsets = [0, 0], sizes = [12, 8], strides = [1, 1]} : vector<12x96xf32> to vector<12x8xf32>
    %53 = arith.truncf %52 : vector<12x8xf32> to vector<12x8xbf16>
    %54 = vector.extract_strided_slice %51 {offsets = [0, 32], sizes = [12, 8], strides = [1, 1]} : vector<12x96xf32> to vector<12x8xf32>
    %55 = arith.truncf %54 : vector<12x8xf32> to vector<12x8xbf16>
    %56 = vector.extract_strided_slice %51 {offsets = [0, 64], sizes = [12, 8], strides = [1, 1]} : vector<12x96xf32> to vector<12x8xf32>
    %57 = arith.truncf %56 : vector<12x8xf32> to vector<12x8xbf16>
    "tpu.trace_start"() <{level = 10 : i32, message = "qe,ke->qk"}> : () -> ()
    %cst_17 = arith.constant dense<0.000000e+00> : vector<12x12xf32>
    %58 = tpu.matmul %53, %55, %cst_17 {dimension_numbers = #tpu.dot_dimension_numbers<[1], [1], [0], [0], [0, 0, 1, 0], [], []>} : vector<12x8xbf16>, vector<12x8xbf16>, vector<12x12xf32> -> vector<12x12xf32>
    "tpu.trace_stop"() : () -> ()
    %cst_18 = arith.constant 0.353553385 : f32
    %59 = vector.broadcast %cst_18 : f32 to vector<12x12xf32>
    %60 = arith.mulf %58, %59 : vector<12x12xf32>
    %cst_19 = arith.constant dense<0xFF800000> : vector<12xf32>
    %61 = vector.multi_reduction <maximumf>, %60, %cst_19 [1] : vector<12x12xf32> to vector<12xf32>
    %62 = vector.shape_cast %61 : vector<12xf32> to vector<12x1xf32>
    %63 = vector.broadcast %62 : vector<12x1xf32> to vector<12x12xf32>
    %64 = arith.subf %60, %63 : vector<12x12xf32>
    %65 = math.exp %64 : vector<12x12xf32>
    %cst_20 = arith.constant dense<0.000000e+00> : vector<12xf32>
    %66 = vector.multi_reduction <add>, %65, %cst_20 [1] : vector<12x12xf32> to vector<12xf32>
    %67 = vector.shape_cast %66 : vector<12xf32> to vector<12x1xf32>
    %68 = tpu.reciprocal %67 {approx = true} : vector<12x1xf32> -> vector<12x1xf32>
    %69 = vector.broadcast %68 : vector<12x1xf32> to vector<12x12xf32>
    %70 = arith.mulf %65, %69 : vector<12x12xf32>
    %71 = arith.truncf %70 : vector<12x12xf32> to vector<12x12xbf16>
    %cst_21 = arith.constant dense<0.000000e+00> : vector<12x8xf32>
    %72 = tpu.matmul %71, %57, %cst_21 {dimension_numbers = #tpu.dot_dimension_numbers<[1], [0], [0], [1], [0, 0, 1, 1], [], []>} : vector<12x12xbf16>, vector<12x8xbf16>, vector<12x8xf32> -> vector<12x8xf32>
    %73 = vector.extract_strided_slice %51 {offsets = [0, 8], sizes = [12, 8], strides = [1, 1]} : vector<12x96xf32> to vector<12x8xf32>
    %74 = arith.truncf %73 : vector<12x8xf32> to vector<12x8xbf16>
    %75 = vector.extract_strided_slice %51 {offsets = [0, 40], sizes = [12, 8], strides = [1, 1]} : vector<12x96xf32> to vector<12x8xf32>
    %76 = arith.truncf %75 : vector<12x8xf32> to vector<12x8xbf16>
    %77 = vector.extract_strided_slice %51 {offsets = [0, 72], sizes = [12, 8], strides = [1, 1]} : vector<12x96xf32> to vector<12x8xf32>
    %78 = arith.truncf %77 : vector<12x8xf32> to vector<12x8xbf16>
    "tpu.trace_start"() <{level = 10 : i32, message = "qe,ke->qk"}> : () -> ()
    %cst_22 = arith.constant dense<0.000000e+00> : vector<12x12xf32>
    %79 = tpu.matmul %74, %76, %cst_22 {dimension_numbers = #tpu.dot_dimension_numbers<[1], [1], [0], [0], [0, 0, 1, 0], [], []>} : vector<12x8xbf16>, vector<12x8xbf16>, vector<12x12xf32> -> vector<12x12xf32>
    "tpu.trace_stop"() : () -> ()
    %cst_23 = arith.constant 0.353553385 : f32
    %80 = vector.broadcast %cst_23 : f32 to vector<12x12xf32>
    %81 = arith.mulf %79, %80 : vector<12x12xf32>
    %cst_24 = arith.constant dense<0xFF800000> : vector<12xf32>
    %82 = vector.multi_reduction <maximumf>, %81, %cst_24 [1] : vector<12x12xf32> to vector<12xf32>
    %83 = vector.shape_cast %82 : vector<12xf32> to vector<12x1xf32>
    %84 = vector.broadcast %83 : vector<12x1xf32> to vector<12x12xf32>
    %85 = arith.subf %81, %84 : vector<12x12xf32>
    %86 = math.exp %85 : vector<12x12xf32>
    %cst_25 = arith.constant dense<0.000000e+00> : vector<12xf32>
    %87 = vector.multi_reduction <add>, %86, %cst_25 [1] : vector<12x12xf32> to vector<12xf32>
    %88 = vector.shape_cast %87 : vector<12xf32> to vector<12x1xf32>
    %89 = tpu.reciprocal %88 {approx = true} : vector<12x1xf32> -> vector<12x1xf32>
    %90 = vector.broadcast %89 : vector<12x1xf32> to vector<12x12xf32>
    %91 = arith.mulf %86, %90 : vector<12x12xf32>
    %92 = arith.truncf %91 : vector<12x12xf32> to vector<12x12xbf16>
    %cst_26 = arith.constant dense<0.000000e+00> : vector<12x8xf32>
    %93 = tpu.matmul %92, %78, %cst_26 {dimension_numbers = #tpu.dot_dimension_numbers<[1], [0], [0], [1], [0, 0, 1, 1], [], []>} : vector<12x12xbf16>, vector<12x8xbf16>, vector<12x8xf32> -> vector<12x8xf32>
    %94 = vector.extract_strided_slice %51 {offsets = [0, 16], sizes = [12, 8], strides = [1, 1]} : vector<12x96xf32> to vector<12x8xf32>
    %95 = arith.truncf %94 : vector<12x8xf32> to vector<12x8xbf16>
    %96 = vector.extract_strided_slice %51 {offsets = [0, 48], sizes = [12, 8], strides = [1, 1]} : vector<12x96xf32> to vector<12x8xf32>
    %97 = arith.truncf %96 : vector<12x8xf32> to vector<12x8xbf16>
    %98 = vector.extract_strided_slice %51 {offsets = [0, 80], sizes = [12, 8], strides = [1, 1]} : vector<12x96xf32> to vector<12x8xf32>
    %99 = arith.truncf %98 : vector<12x8xf32> to vector<12x8xbf16>
    "tpu.trace_start"() <{level = 10 : i32, message = "qe,ke->qk"}> : () -> ()
    %cst_27 = arith.constant dense<0.000000e+00> : vector<12x12xf32>
    %100 = tpu.matmul %95, %97, %cst_27 {dimension_numbers = #tpu.dot_dimension_numbers<[1], [1], [0], [0], [0, 0, 1, 0], [], []>} : vector<12x8xbf16>, vector<12x8xbf16>, vector<12x12xf32> -> vector<12x12xf32>
    "tpu.trace_stop"() : () -> ()
    %cst_28 = arith.constant 0.353553385 : f32
    %101 = vector.broadcast %cst_28 : f32 to vector<12x12xf32>
    %102 = arith.mulf %100, %101 : vector<12x12xf32>
    %cst_29 = arith.constant dense<0xFF800000> : vector<12xf32>
    %103 = vector.multi_reduction <maximumf>, %102, %cst_29 [1] : vector<12x12xf32> to vector<12xf32>
    %104 = vector.shape_cast %103 : vector<12xf32> to vector<12x1xf32>
    %105 = vector.broadcast %104 : vector<12x1xf32> to vector<12x12xf32>
    %106 = arith.subf %102, %105 : vector<12x12xf32>
    %107 = math.exp %106 : vector<12x12xf32>
    %cst_30 = arith.constant dense<0.000000e+00> : vector<12xf32>
    %108 = vector.multi_reduction <add>, %107, %cst_30 [1] : vector<12x12xf32> to vector<12xf32>
    %109 = vector.shape_cast %108 : vector<12xf32> to vector<12x1xf32>
    %110 = tpu.reciprocal %109 {approx = true} : vector<12x1xf32> -> vector<12x1xf32>
    %111 = vector.broadcast %110 : vector<12x1xf32> to vector<12x12xf32>
    %112 = arith.mulf %107, %111 : vector<12x12xf32>
    %113 = arith.truncf %112 : vector<12x12xf32> to vector<12x12xbf16>
    %cst_31 = arith.constant dense<0.000000e+00> : vector<12x8xf32>
    %114 = tpu.matmul %113, %99, %cst_31 {dimension_numbers = #tpu.dot_dimension_numbers<[1], [0], [0], [1], [0, 0, 1, 1], [], []>} : vector<12x12xbf16>, vector<12x8xbf16>, vector<12x8xf32> -> vector<12x8xf32>
    %115 = vector.extract_strided_slice %51 {offsets = [0, 24], sizes = [12, 8], strides = [1, 1]} : vector<12x96xf32> to vector<12x8xf32>
    %116 = arith.truncf %115 : vector<12x8xf32> to vector<12x8xbf16>
    %117 = vector.extract_strided_slice %51 {offsets = [0, 56], sizes = [12, 8], strides = [1, 1]} : vector<12x96xf32> to vector<12x8xf32>
    %118 = arith.truncf %117 : vector<12x8xf32> to vector<12x8xbf16>
    %119 = vector.extract_strided_slice %51 {offsets = [0, 88], sizes = [12, 8], strides = [1, 1]} : vector<12x96xf32> to vector<12x8xf32>
    %120 = arith.truncf %119 : vector<12x8xf32> to vector<12x8xbf16>
    "tpu.trace_start"() <{level = 10 : i32, message = "qe,ke->qk"}> : () -> ()
    %cst_32 = arith.constant dense<0.000000e+00> : vector<12x12xf32>
    %121 = tpu.matmul %116, %118, %cst_32 {dimension_numbers = #tpu.dot_dimension_numbers<[1], [1], [0], [0], [0, 0, 1, 0], [], []>} : vector<12x8xbf16>, vector<12x8xbf16>, vector<12x12xf32> -> vector<12x12xf32>
    "tpu.trace_stop"() : () -> ()
    %cst_33 = arith.constant 0.353553385 : f32
    %122 = vector.broadcast %cst_33 : f32 to vector<12x12xf32>
    %123 = arith.mulf %121, %122 : vector<12x12xf32>
    %cst_34 = arith.constant dense<0xFF800000> : vector<12xf32>
    %124 = vector.multi_reduction <maximumf>, %123, %cst_34 [1] : vector<12x12xf32> to vector<12xf32>
    %125 = vector.shape_cast %124 : vector<12xf32> to vector<12x1xf32>
    %126 = vector.broadcast %125 : vector<12x1xf32> to vector<12x12xf32>
    %127 = arith.subf %123, %126 : vector<12x12xf32>
    %128 = math.exp %127 : vector<12x12xf32>
    %cst_35 = arith.constant dense<0.000000e+00> : vector<12xf32>
    %129 = vector.multi_reduction <add>, %128, %cst_35 [1] : vector<12x12xf32> to vector<12xf32>
    %130 = vector.shape_cast %129 : vector<12xf32> to vector<12x1xf32>
    %131 = tpu.reciprocal %130 {approx = true} : vector<12x1xf32> -> vector<12x1xf32>
    %132 = vector.broadcast %131 : vector<12x1xf32> to vector<12x12xf32>
    %133 = arith.mulf %128, %132 : vector<12x12xf32>
    %134 = arith.truncf %133 : vector<12x12xf32> to vector<12x12xbf16>
    %cst_36 = arith.constant dense<0.000000e+00> : vector<12x8xf32>
    %135 = tpu.matmul %134, %120, %cst_36 {dimension_numbers = #tpu.dot_dimension_numbers<[1], [0], [0], [1], [0, 0, 1, 1], [], []>} : vector<12x12xbf16>, vector<12x8xbf16>, vector<12x8xf32> -> vector<12x8xf32>
    %136 = tpu.concatenate %72, %93, %114, %135 in 1 : vector<12x8xf32>, vector<12x8xf32>, vector<12x8xf32>, vector<12x8xf32> -> vector<12x32xf32>
    %137 = vector.extract_strided_slice %50 {offsets = [12, 0], sizes = [12, 96], strides = [1, 1]} : vector<24x96xf32> to vector<12x96xf32>
    %138 = vector.extract_strided_slice %137 {offsets = [0, 0], sizes = [12, 8], strides = [1, 1]} : vector<12x96xf32> to vector<12x8xf32>
    %139 = arith.truncf %138 : vector<12x8xf32> to vector<12x8xbf16>
    %140 = vector.extract_strided_slice %137 {offsets = [0, 32], sizes = [12, 8], strides = [1, 1]} : vector<12x96xf32> to vector<12x8xf32>
    %141 = arith.truncf %140 : vector<12x8xf32> to vector<12x8xbf16>
    %142 = vector.extract_strided_slice %137 {offsets = [0, 64], sizes = [12, 8], strides = [1, 1]} : vector<12x96xf32> to vector<12x8xf32>
    %143 = arith.truncf %142 : vector<12x8xf32> to vector<12x8xbf16>
    "tpu.trace_start"() <{level = 10 : i32, message = "qe,ke->qk"}> : () -> ()
    %cst_37 = arith.constant dense<0.000000e+00> : vector<12x12xf32>
    %144 = tpu.matmul %139, %141, %cst_37 {dimension_numbers = #tpu.dot_dimension_numbers<[1], [1], [0], [0], [0, 0, 1, 0], [], []>} : vector<12x8xbf16>, vector<12x8xbf16>, vector<12x12xf32> -> vector<12x12xf32>
    "tpu.trace_stop"() : () -> ()
    %cst_38 = arith.constant 0.353553385 : f32
    %145 = vector.broadcast %cst_38 : f32 to vector<12x12xf32>
    %146 = arith.mulf %144, %145 : vector<12x12xf32>
    %cst_39 = arith.constant dense<0xFF800000> : vector<12xf32>
    %147 = vector.multi_reduction <maximumf>, %146, %cst_39 [1] : vector<12x12xf32> to vector<12xf32>
    %148 = vector.shape_cast %147 : vector<12xf32> to vector<12x1xf32>
    %149 = vector.broadcast %148 : vector<12x1xf32> to vector<12x12xf32>
    %150 = arith.subf %146, %149 : vector<12x12xf32>
    %151 = math.exp %150 : vector<12x12xf32>
    %cst_40 = arith.constant dense<0.000000e+00> : vector<12xf32>
    %152 = vector.multi_reduction <add>, %151, %cst_40 [1] : vector<12x12xf32> to vector<12xf32>
    %153 = vector.shape_cast %152 : vector<12xf32> to vector<12x1xf32>
    %154 = tpu.reciprocal %153 {approx = true} : vector<12x1xf32> -> vector<12x1xf32>
    %155 = vector.broadcast %154 : vector<12x1xf32> to vector<12x12xf32>
    %156 = arith.mulf %151, %155 : vector<12x12xf32>
    %157 = arith.truncf %156 : vector<12x12xf32> to vector<12x12xbf16>
    %cst_41 = arith.constant dense<0.000000e+00> : vector<12x8xf32>
    %158 = tpu.matmul %157, %143, %cst_41 {dimension_numbers = #tpu.dot_dimension_numbers<[1], [0], [0], [1], [0, 0, 1, 1], [], []>} : vector<12x12xbf16>, vector<12x8xbf16>, vector<12x8xf32> -> vector<12x8xf32>
    %159 = vector.extract_strided_slice %137 {offsets = [0, 8], sizes = [12, 8], strides = [1, 1]} : vector<12x96xf32> to vector<12x8xf32>
    %160 = arith.truncf %159 : vector<12x8xf32> to vector<12x8xbf16>
    %161 = vector.extract_strided_slice %137 {offsets = [0, 40], sizes = [12, 8], strides = [1, 1]} : vector<12x96xf32> to vector<12x8xf32>
    %162 = arith.truncf %161 : vector<12x8xf32> to vector<12x8xbf16>
    %163 = vector.extract_strided_slice %137 {offsets = [0, 72], sizes = [12, 8], strides = [1, 1]} : vector<12x96xf32> to vector<12x8xf32>
    %164 = arith.truncf %163 : vector<12x8xf32> to vector<12x8xbf16>
    "tpu.trace_start"() <{level = 10 : i32, message = "qe,ke->qk"}> : () -> ()
    %cst_42 = arith.constant dense<0.000000e+00> : vector<12x12xf32>
    %165 = tpu.matmul %160, %162, %cst_42 {dimension_numbers = #tpu.dot_dimension_numbers<[1], [1], [0], [0], [0, 0, 1, 0], [], []>} : vector<12x8xbf16>, vector<12x8xbf16>, vector<12x12xf32> -> vector<12x12xf32>
    "tpu.trace_stop"() : () -> ()
    %cst_43 = arith.constant 0.353553385 : f32
    %166 = vector.broadcast %cst_43 : f32 to vector<12x12xf32>
    %167 = arith.mulf %165, %166 : vector<12x12xf32>
    %cst_44 = arith.constant dense<0xFF800000> : vector<12xf32>
    %168 = vector.multi_reduction <maximumf>, %167, %cst_44 [1] : vector<12x12xf32> to vector<12xf32>
    %169 = vector.shape_cast %168 : vector<12xf32> to vector<12x1xf32>
    %170 = vector.broadcast %169 : vector<12x1xf32> to vector<12x12xf32>
    %171 = arith.subf %167, %170 : vector<12x12xf32>
    %172 = math.exp %171 : vector<12x12xf32>
    %cst_45 = arith.constant dense<0.000000e+00> : vector<12xf32>
    %173 = vector.multi_reduction <add>, %172, %cst_45 [1] : vector<12x12xf32> to vector<12xf32>
    %174 = vector.shape_cast %173 : vector<12xf32> to vector<12x1xf32>
    %175 = tpu.reciprocal %174 {approx = true} : vector<12x1xf32> -> vector<12x1xf32>
    %176 = vector.broadcast %175 : vector<12x1xf32> to vector<12x12xf32>
    %177 = arith.mulf %172, %176 : vector<12x12xf32>
    %178 = arith.truncf %177 : vector<12x12xf32> to vector<12x12xbf16>
    %cst_46 = arith.constant dense<0.000000e+00> : vector<12x8xf32>
    %179 = tpu.matmul %178, %164, %cst_46 {dimension_numbers = #tpu.dot_dimension_numbers<[1], [0], [0], [1], [0, 0, 1, 1], [], []>} : vector<12x12xbf16>, vector<12x8xbf16>, vector<12x8xf32> -> vector<12x8xf32>
    %180 = vector.extract_strided_slice %137 {offsets = [0, 16], sizes = [12, 8], strides = [1, 1]} : vector<12x96xf32> to vector<12x8xf32>
    %181 = arith.truncf %180 : vector<12x8xf32> to vector<12x8xbf16>
    %182 = vector.extract_strided_slice %137 {offsets = [0, 48], sizes = [12, 8], strides = [1, 1]} : vector<12x96xf32> to vector<12x8xf32>
    %183 = arith.truncf %182 : vector<12x8xf32> to vector<12x8xbf16>
    %184 = vector.extract_strided_slice %137 {offsets = [0, 80], sizes = [12, 8], strides = [1, 1]} : vector<12x96xf32> to vector<12x8xf32>
    %185 = arith.truncf %184 : vector<12x8xf32> to vector<12x8xbf16>
    "tpu.trace_start"() <{level = 10 : i32, message = "qe,ke->qk"}> : () -> ()
    %cst_47 = arith.constant dense<0.000000e+00> : vector<12x12xf32>
    %186 = tpu.matmul %181, %183, %cst_47 {dimension_numbers = #tpu.dot_dimension_numbers<[1], [1], [0], [0], [0, 0, 1, 0], [], []>} : vector<12x8xbf16>, vector<12x8xbf16>, vector<12x12xf32> -> vector<12x12xf32>
    "tpu.trace_stop"() : () -> ()
    %cst_48 = arith.constant 0.353553385 : f32
    %187 = vector.broadcast %cst_48 : f32 to vector<12x12xf32>
    %188 = arith.mulf %186, %187 : vector<12x12xf32>
    %cst_49 = arith.constant dense<0xFF800000> : vector<12xf32>
    %189 = vector.multi_reduction <maximumf>, %188, %cst_49 [1] : vector<12x12xf32> to vector<12xf32>
    %190 = vector.shape_cast %189 : vector<12xf32> to vector<12x1xf32>
    %191 = vector.broadcast %190 : vector<12x1xf32> to vector<12x12xf32>
    %192 = arith.subf %188, %191 : vector<12x12xf32>
    %193 = math.exp %192 : vector<12x12xf32>
    %cst_50 = arith.constant dense<0.000000e+00> : vector<12xf32>
    %194 = vector.multi_reduction <add>, %193, %cst_50 [1] : vector<12x12xf32> to vector<12xf32>
    %195 = vector.shape_cast %194 : vector<12xf32> to vector<12x1xf32>
    %196 = tpu.reciprocal %195 {approx = true} : vector<12x1xf32> -> vector<12x1xf32>
    %197 = vector.broadcast %196 : vector<12x1xf32> to vector<12x12xf32>
    %198 = arith.mulf %193, %197 : vector<12x12xf32>
    %199 = arith.truncf %198 : vector<12x12xf32> to vector<12x12xbf16>
    %cst_51 = arith.constant dense<0.000000e+00> : vector<12x8xf32>
    %200 = tpu.matmul %199, %185, %cst_51 {dimension_numbers = #tpu.dot_dimension_numbers<[1], [0], [0], [1], [0, 0, 1, 1], [], []>} : vector<12x12xbf16>, vector<12x8xbf16>, vector<12x8xf32> -> vector<12x8xf32>
    %201 = vector.extract_strided_slice %137 {offsets = [0, 24], sizes = [12, 8], strides = [1, 1]} : vector<12x96xf32> to vector<12x8xf32>
    %202 = arith.truncf %201 : vector<12x8xf32> to vector<12x8xbf16>
    %203 = vector.extract_strided_slice %137 {offsets = [0, 56], sizes = [12, 8], strides = [1, 1]} : vector<12x96xf32> to vector<12x8xf32>
    %204 = arith.truncf %203 : vector<12x8xf32> to vector<12x8xbf16>
    %205 = vector.extract_strided_slice %137 {offsets = [0, 88], sizes = [12, 8], strides = [1, 1]} : vector<12x96xf32> to vector<12x8xf32>
    %206 = arith.truncf %205 : vector<12x8xf32> to vector<12x8xbf16>
    "tpu.trace_start"() <{level = 10 : i32, message = "qe,ke->qk"}> : () -> ()
    %cst_52 = arith.constant dense<0.000000e+00> : vector<12x12xf32>
    %207 = tpu.matmul %202, %204, %cst_52 {dimension_numbers = #tpu.dot_dimension_numbers<[1], [1], [0], [0], [0, 0, 1, 0], [], []>} : vector<12x8xbf16>, vector<12x8xbf16>, vector<12x12xf32> -> vector<12x12xf32>
    "tpu.trace_stop"() : () -> ()
    %cst_53 = arith.constant 0.353553385 : f32
    %208 = vector.broadcast %cst_53 : f32 to vector<12x12xf32>
    %209 = arith.mulf %207, %208 : vector<12x12xf32>
    %cst_54 = arith.constant dense<0xFF800000> : vector<12xf32>
    %210 = vector.multi_reduction <maximumf>, %209, %cst_54 [1] : vector<12x12xf32> to vector<12xf32>
    %211 = vector.shape_cast %210 : vector<12xf32> to vector<12x1xf32>
    %212 = vector.broadcast %211 : vector<12x1xf32> to vector<12x12xf32>
    %213 = arith.subf %209, %212 : vector<12x12xf32>
    %214 = math.exp %213 : vector<12x12xf32>
    %cst_55 = arith.constant dense<0.000000e+00> : vector<12xf32>
    %215 = vector.multi_reduction <add>, %214, %cst_55 [1] : vector<12x12xf32> to vector<12xf32>
    %216 = vector.shape_cast %215 : vector<12xf32> to vector<12x1xf32>
    %217 = tpu.reciprocal %216 {approx = true} : vector<12x1xf32> -> vector<12x1xf32>
    %218 = vector.broadcast %217 : vector<12x1xf32> to vector<12x12xf32>
    %219 = arith.mulf %214, %218 : vector<12x12xf32>
    %220 = arith.truncf %219 : vector<12x12xf32> to vector<12x12xbf16>
    %cst_56 = arith.constant dense<0.000000e+00> : vector<12x8xf32>
    %221 = tpu.matmul %220, %206, %cst_56 {dimension_numbers = #tpu.dot_dimension_numbers<[1], [0], [0], [1], [0, 0, 1, 1], [], []>} : vector<12x12xbf16>, vector<12x8xbf16>, vector<12x8xf32> -> vector<12x8xf32>
    %222 = tpu.concatenate %158, %179, %200, %221 in 1 : vector<12x8xf32>, vector<12x8xf32>, vector<12x8xf32>, vector<12x8xf32> -> vector<12x32xf32>
    %223 = tpu.concatenate %136, %222 in 0 : vector<12x32xf32>, vector<12x32xf32> -> vector<24x32xf32>
    %224 = arith.truncf %223 : vector<24x32xf32> to vector<24x32xbf16>
    %cst_57 = arith.constant dense<0.000000e+00> : vector<24x32xf32>
    %225 = tpu.matmul %224, %11, %cst_57 {dimension_numbers = #tpu.dot_dimension_numbers<[1], [0], [0], [1], [0, 0, 1, 1], [], []>} : vector<24x32xbf16>, vector<32x32xbf16>, vector<24x32xf32> -> vector<24x32xf32>
    %226 = arith.addf %24, %225 : vector<24x32xf32>
    %227 = vector.broadcast %18 : vector<1x32xf32> to vector<24x32xf32>
    %228 = arith.addf %226, %227 : vector<24x32xf32>
    %cst_58 = arith.constant dense<0.000000e+00> : vector<24xf32>
    %229 = vector.multi_reduction <add>, %228, %cst_58 [1] : vector<24x32xf32> to vector<24xf32>
    %230 = vector.shape_cast %229 : vector<24xf32> to vector<24x1xf32>
    %cst_59 = arith.constant 3.200000e+01 : f32
    %231 = vector.broadcast %cst_59 : f32 to vector<24x1xf32>
    %232 = arith.divf %230, %231 : vector<24x1xf32>
    %233 = vector.broadcast %232 : vector<24x1xf32> to vector<24x32xf32>
    %234 = arith.subf %228, %233 : vector<24x32xf32>
    %235 = arith.mulf %234, %234 : vector<24x32xf32>
    %cst_60 = arith.constant dense<0.000000e+00> : vector<24xf32>
    %236 = vector.multi_reduction <add>, %235, %cst_60 [1] : vector<24x32xf32> to vector<24xf32>
    %237 = vector.shape_cast %236 : vector<24xf32> to vector<24x1xf32>
    %cst_61 = arith.constant 3.200000e+01 : f32
    %238 = vector.broadcast %cst_61 : f32 to vector<24x1xf32>
    %239 = arith.divf %237, %238 : vector<24x1xf32>
    %240 = vector.broadcast %232 : vector<24x1xf32> to vector<24x32xf32>
    %241 = arith.subf %228, %240 : vector<24x32xf32>
    %cst_62 = arith.constant 9.99999974E-6 : f32
    %242 = vector.broadcast %cst_62 : f32 to vector<24x1xf32>
    %243 = arith.addf %239, %242 : vector<24x1xf32>
    %244 = math.rsqrt %243 : vector<24x1xf32>
    %245 = vector.broadcast %244 : vector<24x1xf32> to vector<24x32xf32>
    %246 = arith.mulf %241, %245 : vector<24x32xf32>
    %247 = vector.broadcast %16 : vector<1x32xf32> to vector<24x32xf32>
    %248 = arith.mulf %246, %247 : vector<24x32xf32>
    %249 = vector.broadcast %17 : vector<1x32xf32> to vector<24x32xf32>
    %250 = arith.addf %248, %249 : vector<24x32xf32>
    %251 = arith.truncf %250 : vector<24x32xf32> to vector<24x32xbf16>
    %c0_63 = arith.constant 0 : index
    %c0_64 = arith.constant 0 : index
    %c0_65 = arith.constant 0 : index
    %252 = vector.load %arg6[%c0_63, %c0_64, %c0_65] : memref<1x32x128xbf16, #tpu.memory_space<vmem>>, vector<1x32x128xbf16>
    %253 = vector.shape_cast %252 : vector<1x32x128xbf16> to vector<32x128xbf16>
    %cst_66 = arith.constant dense<0.000000e+00> : vector<24x128xf32>
    %254 = tpu.matmul %251, %253, %cst_66 {dimension_numbers = #tpu.dot_dimension_numbers<[1], [0], [0], [1], [0, 0, 1, 1], [], []>} : vector<24x32xbf16>, vector<32x128xbf16>, vector<24x128xf32> -> vector<24x128xf32>
    %255 = vector.broadcast %23 : vector<1x128xf32> to vector<24x128xf32>
    %256 = arith.addf %254, %255 : vector<24x128xf32>
    %cst_67 = arith.constant 1.702000e+00 : f32
    %257 = vector.broadcast %cst_67 : f32 to vector<24x128xf32>
    %258 = arith.mulf %257, %256 : vector<24x128xf32>
    %259 = arith.negf %258 : vector<24x128xf32>
    %260 = math.exp %259 : vector<24x128xf32>
    %cst_68 = arith.constant 1.000000e+00 : f32
    %261 = vector.broadcast %cst_68 : f32 to vector<24x128xf32>
    %262 = arith.addf %261, %260 : vector<24x128xf32>
    %263 = arith.divf %261, %262 : vector<24x128xf32>
    %264 = arith.mulf %256, %263 : vector<24x128xf32>
    %265 = arith.truncf %264 : vector<24x128xf32> to vector<24x128xbf16>
    %c0_69 = arith.constant 0 : index
    %c0_70 = arith.constant 0 : index
    %c0_71 = arith.constant 0 : index
    %266 = vector.load %arg7[%c0_69, %c0_70, %c0_71] : memref<1x128x32xbf16, #tpu.memory_space<vmem>>, vector<1x128x32xbf16>
    %267 = vector.shape_cast %266 : vector<1x128x32xbf16> to vector<128x32xbf16>
    %cst_72 = arith.constant dense<0.000000e+00> : vector<24x32xf32>
    %268 = tpu.matmul %265, %267, %cst_72 {dimension_numbers = #tpu.dot_dimension_numbers<[1], [0], [0], [1], [0, 0, 1, 1], [], []>} : vector<24x128xbf16>, vector<128x32xbf16>, vector<24x32xf32> -> vector<24x32xf32>
    %269 = arith.addf %228, %268 : vector<24x32xf32>
    %270 = vector.broadcast %19 : vector<1x32xf32> to vector<24x32xf32>
    %271 = arith.addf %269, %270 : vector<24x32xf32>
    %c0_73 = arith.constant 0 : index
    %c0_74 = arith.constant 0 : index
    %272 = vector.load %arg11[%c0_73, %c0_74] : memref<24x32xf32, #tpu.memory_space<vmem>>, vector<24x32xf32>
    tpu.vector_store %arg11[%c0_73, %c0_74], %271 {strides = array<i32>} : memref<24x32xf32, #tpu.memory_space<vmem>>, vector<24x32xf32>,
    %c3_i32 = arith.constant 3 : i32
    %273 = arith.cmpi eq, %arg0, %c3_i32 : i32
    %274 = arith.extui %273 : i1 to i32
    %c0_i32_75 = arith.constant 0 : i32
    %275 = arith.cmpi ne, %274, %c0_i32_75 : i32
    scf.if %275 {
      %276 = vector.extract_strided_slice %271 {offsets = [0, 0], sizes = [1, 32], strides = [1, 1]} : vector<24x32xf32> to vector<1x32xf32>
      %277 = vector.extract_strided_slice %271 {offsets = [12, 0], sizes = [1, 32], strides = [1, 1]} : vector<24x32xf32> to vector<1x32xf32>
      %278 = tpu.concatenate %276, %277 in 0 : vector<1x32xf32>, vector<1x32xf32> -> vector<2x32xf32>
      %c2 = arith.constant 2 : index
      %c0_76 = arith.constant 0 : index
      %279 = vector.load %arg3[%c2, %c0_76] : memref<4x32xf32, #tpu.memory_space<vmem>>, vector<1x32xf32>
      %c3 = arith.constant 3 : index
      %c0_77 = arith.constant 0 : index
      %280 = vector.load %arg3[%c3, %c0_77] : memref<4x32xf32, #tpu.memory_space<vmem>>, vector<1x32xf32>
      %cst_78 = arith.constant dense<0.000000e+00> : vector<2xf32>
      %281 = vector.multi_reduction <add>, %278, %cst_78 [1] : vector<2x32xf32> to vector<2xf32>
      %282 = vector.shape_cast %281 : vector<2xf32> to vector<2x1xf32>
      %cst_79 = arith.constant 3.200000e+01 : f32
      %283 = vector.broadcast %cst_79 : f32 to vector<2x1xf32>
      %284 = arith.divf %282, %283 : vector<2x1xf32>
      %285 = vector.broadcast %284 : vector<2x1xf32> to vector<2x32xf32>
      %286 = arith.subf %278, %285 : vector<2x32xf32>
      %287 = arith.mulf %286, %286 : vector<2x32xf32>
      %cst_80 = arith.constant dense<0.000000e+00> : vector<2xf32>
      %288 = vector.multi_reduction <add>, %287, %cst_80 [1] : vector<2x32xf32> to vector<2xf32>
      %289 = vector.shape_cast %288 : vector<2xf32> to vector<2x1xf32>
      %cst_81 = arith.constant 3.200000e+01 : f32
      %290 = vector.broadcast %cst_81 : f32 to vector<2x1xf32>
      %291 = arith.divf %289, %290 : vector<2x1xf32>
      %292 = vector.broadcast %284 : vector<2x1xf32> to vector<2x32xf32>
      %293 = arith.subf %278, %292 : vector<2x32xf32>
      %cst_82 = arith.constant 9.99999974E-6 : f32
      %294 = vector.broadcast %cst_82 : f32 to vector<2x1xf32>
      %295 = arith.addf %291, %294 : vector<2x1xf32>
      %296 = math.rsqrt %295 : vector<2x1xf32>
      %297 = vector.broadcast %296 : vector<2x1xf32> to vector<2x32xf32>
      %298 = arith.mulf %293, %297 : vector<2x32xf32>
      %299 = vector.broadcast %279 : vector<1x32xf32> to vector<2x32xf32>
      %300 = arith.mulf %298, %299 : vector<2x32xf32>
      %301 = vector.broadcast %280 : vector<1x32xf32> to vector<2x32xf32>
      %302 = arith.addf %300, %301 : vector<2x32xf32>
      %303 = arith.truncf %302 : vector<2x32xf32> to vector<2x32xbf16>
      %c0_83 = arith.constant 0 : index
      %c0_84 = arith.constant 0 : index
      %304 = vector.load %arg4[%c0_83, %c0_84] : memref<32x16xbf16, #tpu.memory_space<vmem>>, vector<32x16xbf16>
      %cst_85 = arith.constant dense<0.000000e+00> : vector<2x16xf32>
      %305 = tpu.matmul %303, %304, %cst_85 {dimension_numbers = #tpu.dot_dimension_numbers<[1], [0], [0], [1], [0, 0, 1, 1], [], []>} : vector<2x32xbf16>, vector<32x16xbf16>, vector<2x16xf32> -> vector<2x16xf32>
      %c0_86 = arith.constant 0 : index
      %c0_87 = arith.constant 0 : index
      %306 = vector.load %arg10[%c0_86, %c0_87] : memref<2x16xf32, #tpu.memory_space<vmem>>, vector<2x16xf32>
      tpu.vector_store %arg10[%c0_86, %c0_87], %305 {strides = array<i32>} : memref<2x16xf32, #tpu.memory_space<vmem>>, vector<2x16xf32>,
    } else {
    }
    return
  }
  func.func @transform_0(%arg0: i32) -> (i32, i32, i32) {
    %c0_i32 = arith.constant 0 : i32
    %c0_i32_0 = arith.constant 0 : i32
    %c0_i32_1 = arith.constant 0 : i32
    %c0_i32_2 = arith.constant 0 : i32
    return %c0_i32, %c0_i32_0, %c0_i32_1 : i32, i32, i32
  }
  func.func @transform_1(%arg0: i32) -> (i32, i32, i32, i32) {
    %c3_i32 = arith.constant 3 : i32
    %0 = arith.minsi %arg0, %c3_i32 : i32
    %c0_i32 = arith.constant 0 : i32
    %c0_i32_0 = arith.constant 0 : i32
    %c0_i32_1 = arith.constant 0 : i32
    %c0_i32_2 = arith.constant 0 : i32
    return %c0_i32, %0, %c0_i32_0, %c0_i32_1 : i32, i32, i32, i32
  }
  func.func @transform_2(%arg0: i32) -> (i32, i32) {
    %c0_i32 = arith.constant 0 : i32
    %c0_i32_0 = arith.constant 0 : i32
    %c0_i32_1 = arith.constant 0 : i32
    return %c0_i32, %c0_i32_0 : i32, i32
  }
  func.func @transform_3(%arg0: i32) -> (i32, i32) {
    %c0_i32 = arith.constant 0 : i32
    %c0_i32_0 = arith.constant 0 : i32
    %c0_i32_1 = arith.constant 0 : i32
    return %c0_i32, %c0_i32_0 : i32, i32
  }
  func.func @transform_4(%arg0: i32) -> (i32, i32, i32) {
    %c0_i32 = arith.constant 0 : i32
    %c0_i32_0 = arith.constant 0 : i32
    %c0_i32_1 = arith.constant 0 : i32
    return %arg0, %c0_i32, %c0_i32_0 : i32, i32, i32
  }
  func.func @transform_5(%arg0: i32) -> (i32, i32, i32) {
    %c0_i32 = arith.constant 0 : i32
    %c0_i32_0 = arith.constant 0 : i32
    %c0_i32_1 = arith.constant 0 : i32
    return %arg0, %c0_i32, %c0_i32_0 : i32, i32, i32
  }
  func.func @transform_6(%arg0: i32) -> (i32, i32, i32) {
    %c0_i32 = arith.constant 0 : i32
    %c0_i32_0 = arith.constant 0 : i32
    %c0_i32_1 = arith.constant 0 : i32
    return %arg0, %c0_i32, %c0_i32_0 : i32, i32, i32
  }
  func.func @transform_7(%arg0: i32) -> (i32, i32, i32) {
    %c0_i32 = arith.constant 0 : i32
    %c0_i32_0 = arith.constant 0 : i32
    %c0_i32_1 = arith.constant 0 : i32
    return %arg0, %c0_i32, %c0_i32_0 : i32, i32, i32
  }
  func.func @transform_8(%arg0: i32) -> (i32, i32, i32) {
    %c0_i32 = arith.constant 0 : i32
    %c0_i32_0 = arith.constant 0 : i32
    %c0_i32_1 = arith.constant 0 : i32
    return %arg0, %c0_i32, %c0_i32_0 : i32, i32, i32
  }
  func.func @transform_9(%arg0: i32) -> (i32, i32) {
    %c0_i32 = arith.constant 0 : i32
    %c0_i32_0 = arith.constant 0 : i32
    %c0_i32_1 = arith.constant 0 : i32
    return %c0_i32, %c0_i32_0 : i32, i32
  }
}

</mosaic_0001>

<llo_original>
// kernel: vision_encoder_forward.1
$region0: #{vision_encoder_forward.1}
  #allocation0 [shape = 'u32[]', space=smem, size = 0x4, offset = 0x4, fixed_abs, tag = 'smem constant byte address 0x4 - core index']
  #allocation1 [shape = 'u32[144,128]{1,0:T(1,128)}', space=vmem, size = 0x12000, scoped, tag = 'internal scratch']
  #allocation2 [shape = 'f32[24,32]{1,0:T(8,128)}', space=vmem, size = 0x3000, scoped, tag = 'scratch operand']
  %s0 = inlined_call_operand.vmem [shape: f32[2,8,32], index: 0, kind: input, shape index: {}]
  %s1 = inlined_call_operand.vmem [shape: f32[2,4,4,32], index: 1, kind: input, shape index: {}]
  %s2 = inlined_call_operand.vmem [shape: f32[4,32], index: 2, kind: input, shape index: {}]
  %s3 = inlined_call_operand.vmem [shape: bf16[32,16], index: 3, kind: input, shape index: {}]
  %s4 = inlined_call_operand.vmem [shape: bf16[4,32,128], index: 4, kind: input, shape index: {}]
  %s5 = inlined_call_operand.vmem [shape: bf16[4,32,128], index: 5, kind: input, shape index: {}]
  %s6 = inlined_call_operand.vmem [shape: bf16[4,128,32], index: 6, kind: input, shape index: {}]
  %s7 = inlined_call_operand.vmem [shape: f32[4,6,32], index: 7, kind: input, shape index: {}]
  %s8 = inlined_call_operand.vmem [shape: f32[4,1,224], index: 8, kind: input, shape index: {}]
  %s9 = inlined_call_operand.hbm [shape: f32[2,16], index: 9, kind: output, shape index: {}]
  %s10 = sld [smem:[#allocation0]]
  $region122: #{vision_encoder_forward.1} parent=0
    _
  %s12 = ssub.s32 1, %s10
  %s13 = scalar_select 0, %s12, %s10
  $region1: #{vision_encoder_forward.1} parent=0
    #allocation3 [shape = 'u8[8192]{0}', space=vmem, size = 0x2000, scoped, tag = 'input window, operand 1']
    #allocation4 [shape = 'u8[1024]{0}', space=vmem, size = 0x400, scoped, tag = 'output window, operand 0, single buffered']
    #allocation5 [shape = 's32[2]{0}', space=sflag, size = 0x8, scoped, tag = 'scoped memory for vision_encoder_forward.1']
    %14 = vsyncpa [#allocation5], 0
    loop: start=0, step=1, limit=6
    $region2: #{vision_encoder_forward.1} parent=1 // loop_pre_header
      _
    $region3: #{vision_encoder_forward.1} parent=1 // loop_header
      %s16 = sphi 0, %s20
      %p17 = scmp.ge.s32.totalorder %s16, 6
      %s24 = sphi 0, %s24
      %s26 = sphi 0, %s24
      %s27 = sphi 0, %s26
      %s41 = sphi 0, %s27
      %s51 = sphi 0, %s53
      %s54 = sphi 0, %s51
      %s55 = sphi 0, %s54
      %s71 = sphi 0, %s55
      %s75 = sphi 0, %s75
      %s77 = sphi 0, %s75
      %s78 = sphi 0, %s77
      %s92 = sphi 0, %s78
      %s96 = sphi 0, %s96
      %s98 = sphi 0, %s96
      %s99 = sphi 0, %s98
      %s113 = sphi 0, %s99
      %s119 = sphi 0, %s121
      %s122 = sphi 0, %s119
      %s123 = sphi 0, %s122
      %s139 = sphi 0, %s123
      %s145 = sphi 0, %s147
      %s148 = sphi 0, %s145
      %s149 = sphi 0, %s148
      %s165 = sphi 0, %s149
      %s171 = sphi 0, %s173
      %s174 = sphi 0, %s171
      %s175 = sphi 0, %s174
      %s191 = sphi 0, %s175
      %s197 = sphi 0, %s199
      %s200 = sphi 0, %s197
      %s201 = sphi 0, %s200
      %s217 = sphi 0, %s201
      %s223 = sphi 0, %s225
      %s226 = sphi 0, %s223
      %s227 = sphi 0, %s226
      %s243 = sphi 0, %s227
      %s247 = sphi 0, %s247
      %s249 = sphi 0, %s247
      %s250 = sphi 0, %s249
      %s264 = sphi 0, %s250
    $region4: #{vision_encoder_forward.1} parent=1 // loop_header_branch
      %19 = sbr.rel (%p17) target = $region8
    $region5: #{vision_encoder_forward.1} parent=1 // loop_body
      %s21 = ssub.s32 %s16, 1
      %s22 = ssub.s32 %s16, 2
      %s23 = sadd.s32 %s16, 1
      %s25 = sadd.s32 %s24, 1
      %p28 = scmp.eq.s32.totalorder %s16, 3
      %p29 = scmp.ne.s32.totalorder %s24, %s26
      %p30 = scmp.eq.s32.totalorder %s16, 0
      %p31 = por %p29, %p30
      %p32 = scmp.ne.s32.totalorder %s24, %s26
      %p33 = scmp.eq.s32.totalorder %s21, 3
      %p34 = por %p32, %p33
      %p35 = scmp.ne.s32.totalorder %s26, %s27
      %p36 = scmp.eq.s32.totalorder %s21, 0
      %p37 = por %p35, %p36
      %p38 = scmp.ne.s32.totalorder %s26, %s27
      %p39 = scmp.eq.s32.totalorder %s22, 3
      %p40 = por %p38, %p39
      %p42 = scmp.ne.s32.totalorder %s27, %s41
      %p43 = scmp.eq.s32.totalorder %s22, 0
      %p44 = por %p42, %p43
      %p45 = scmp.lt.s32.totalorder %s16, 3
      %s46 = scalar_select %p45, %s16, 3
      %p47 = scmp.lt.s32.totalorder %s23, 3
      %s48 = scalar_select %p47, %s23, 3
      %s49 = ssub.s32 %s46, %s48
      %p50 = scmp.eq.s32.totalorder %s49, 0
      %s52 = sadd.s32 %s51, 1
      %s53 = scalar_select %p50, %s51, %s52
      %p56 = pneg %p50
      %p57 = scmp.eq.s32.totalorder %s16, 3
      %p58 = por %p56, %p57
      %p59 = scmp.ne.s32.totalorder %s51, %s54
      %p60 = scmp.eq.s32.totalorder %s16, 0
      %p61 = por %p59, %p60
      %p62 = scmp.ne.s32.totalorder %s51, %s54
      %p63 = scmp.eq.s32.totalorder %s21, 3
      %p64 = por %p62, %p63
      %p65 = scmp.ne.s32.totalorder %s54, %s55
      %p66 = scmp.eq.s32.totalorder %s21, 0
      %p67 = por %p65, %p66
      %p68 = scmp.ne.s32.totalorder %s54, %s55
      %p69 = scmp.eq.s32.totalorder %s22, 3
      %p70 = por %p68, %p69
      %p72 = scmp.ne.s32.totalorder %s55, %s71
      %p73 = scmp.eq.s32.totalorder %s22, 0
      %p74 = por %p72, %p73
      %s76 = sadd.s32 %s75, 1
      %p79 = scmp.eq.s32.totalorder %s16, 3
      %p80 = scmp.ne.s32.totalorder %s75, %s77
      %p81 = scmp.eq.s32.totalorder %s16, 0
      %p82 = por %p80, %p81
      %p83 = scmp.ne.s32.totalorder %s75, %s77
      %p84 = scmp.eq.s32.totalorder %s21, 3
      %p85 = por %p83, %p84
      %p86 = scmp.ne.s32.totalorder %s77, %s78
      %p87 = scmp.eq.s32.totalorder %s21, 0
      %p88 = por %p86, %p87
      %p89 = scmp.ne.s32.totalorder %s77, %s78
      %p90 = scmp.eq.s32.totalorder %s22, 3
      %p91 = por %p89, %p90
      %p93 = scmp.ne.s32.totalorder %s78, %s92
      %p94 = scmp.eq.s32.totalorder %s22, 0
      %p95 = por %p93, %p94
      %s97 = sadd.s32 %s96, 1
      %p100 = scmp.eq.s32.totalorder %s16, 3
      %p101 = scmp.ne.s32.totalorder %s96, %s98
      %p102 = scmp.eq.s32.totalorder %s16, 0
      %p103 = por %p101, %p102
      %p104 = scmp.ne.s32.totalorder %s96, %s98
      %p105 = scmp.eq.s32.totalorder %s21, 3
      %p106 = por %p104, %p105
      %p107 = scmp.ne.s32.totalorder %s98, %s99
      %p108 = scmp.eq.s32.totalorder %s21, 0
      %p109 = por %p107, %p108
      %p110 = scmp.ne.s32.totalorder %s98, %s99
      %p111 = scmp.eq.s32.totalorder %s22, 3
      %p112 = por %p110, %p111
      %p114 = scmp.ne.s32.totalorder %s99, %s113
      %p115 = scmp.eq.s32.totalorder %s22, 0
      %p116 = por %p114, %p115
      %s117 = ssub.s32 %s16, %s23
      %p118 = scmp.eq.s32.totalorder %s117, 0
      %s120 = sadd.s32 %s119, 1
      %s121 = scalar_select %p118, %s119, %s120
      %p124 = pneg %p118
      %p125 = scmp.eq.s32.totalorder %s16, 3
      %p126 = por %p124, %p125
      %p127 = scmp.ne.s32.totalorder %s119, %s122
      %p128 = scmp.eq.s32.totalorder %s16, 0
      %p129 = por %p127, %p128
      %p130 = scmp.ne.s32.totalorder %s119, %s122
      %p131 = scmp.eq.s32.totalorder %s21, 3
      %p132 = por %p130, %p131
      %p133 = scmp.ne.s32.totalorder %s122, %s123
      %p134 = scmp.eq.s32.totalorder %s21, 0
      %p135 = por %p133, %p134
      %p136 = scmp.ne.s32.totalorder %s122, %s123
      %p137 = scmp.eq.s32.totalorder %s22, 3
      %p138 = por %p136, %p137
      %p140 = scmp.ne.s32.totalorder %s123, %s139
      %p141 = scmp.eq.s32.totalorder %s22, 0
      %p142 = por %p140, %p141
      %s143 = ssub.s32 %s16, %s23
      %p144 = scmp.eq.s32.totalorder %s143, 0
      %s146 = sadd.s32 %s145, 1
      %s147 = scalar_select %p144, %s145, %s146
      %p150 = pneg %p144
      %p151 = scmp.eq.s32.totalorder %s16, 3
      %p152 = por %p150, %p151
      %p153 = scmp.ne.s32.totalorder %s145, %s148
      %p154 = scmp.eq.s32.totalorder %s16, 0
      %p155 = por %p153, %p154
      %p156 = scmp.ne.s32.totalorder %s145, %s148
      %p157 = scmp.eq.s32.totalorder %s21, 3
      %p158 = por %p156, %p157
      %p159 = scmp.ne.s32.totalorder %s148, %s149
      %p160 = scmp.eq.s32.totalorder %s21, 0
      %p161 = por %p159, %p160
      %p162 = scmp.ne.s32.totalorder %s148, %s149
      %p163 = scmp.eq.s32.totalorder %s22, 3
      %p164 = por %p162, %p163
      %p166 = scmp.ne.s32.totalorder %s149, %s165
      %p167 = scmp.eq.s32.totalorder %s22, 0
      %p168 = por %p166, %p167
      %s169 = ssub.s32 %s16, %s23
      %p170 = scmp.eq.s32.totalorder %s169, 0
      %s172 = sadd.s32 %s171, 1
      %s173 = scalar_select %p170, %s171, %s172
      %p176 = pneg %p170
      %p177 = scmp.eq.s32.totalorder %s16, 3
      %p178 = por %p176, %p177
      %p179 = scmp.ne.s32.totalorder %s171, %s174
      %p180 = scmp.eq.s32.totalorder %s16, 0
      %p181 = por %p179, %p180
      %p182 = scmp.ne.s32.totalorder %s171, %s174
      %p183 = scmp.eq.s32.totalorder %s21, 3
      %p184 = por %p182, %p183
      %p185 = scmp.ne.s32.totalorder %s174, %s175
      %p186 = scmp.eq.s32.totalorder %s21, 0
      %p187 = por %p185, %p186
      %p188 = scmp.ne.s32.totalorder %s174, %s175
      %p189 = scmp.eq.s32.totalorder %s22, 3
      %p190 = por %p188, %p189
      %p192 = scmp.ne.s32.totalorder %s175, %s191
      %p193 = scmp.eq.s32.totalorder %s22, 0
      %p194 = por %p192, %p193
      %s195 = ssub.s32 %s16, %s23
      %p196 = scmp.eq.s32.totalorder %s195, 0
      %s198 = sadd.s32 %s197, 1
      %s199 = scalar_select %p196, %s197, %s198
      %p202 = pneg %p196
      %p203 = scmp.eq.s32.totalorder %s16, 3
      %p204 = por %p202, %p203
      %p205 = scmp.ne.s32.totalorder %s197, %s200
      %p206 = scmp.eq.s32.totalorder %s16, 0
      %p207 = por %p205, %p206
      %p208 = scmp.ne.s32.totalorder %s197, %s200
      %p209 = scmp.eq.s32.totalorder %s21, 3
      %p210 = por %p208, %p209
      %p211 = scmp.ne.s32.totalorder %s200, %s201
      %p212 = scmp.eq.s32.totalorder %s21, 0
      %p213 = por %p211, %p212
      %p214 = scmp.ne.s32.totalorder %s200, %s201
      %p215 = scmp.eq.s32.totalorder %s22, 3
      %p216 = por %p214, %p215
      %p218 = scmp.ne.s32.totalorder %s201, %s217
      %p219 = scmp.eq.s32.totalorder %s22, 0
      %p220 = por %p218, %p219
      %s221 = ssub.s32 %s16, %s23
      %p222 = scmp.eq.s32.totalorder %s221, 0
      %s224 = sadd.s32 %s223, 1
      %s225 = scalar_select %p222, %s223, %s224
      %p228 = pneg %p222
      %p229 = scmp.eq.s32.totalorder %s16, 3
      %p230 = por %p228, %p229
      %p231 = scmp.ne.s32.totalorder %s223, %s226
      %p232 = scmp.eq.s32.totalorder %s16, 0
      %p233 = por %p231, %p232
      %p234 = scmp.ne.s32.totalorder %s223, %s226
      %p235 = scmp.eq.s32.totalorder %s21, 3
      %p236 = por %p234, %p235
      %p237 = scmp.ne.s32.totalorder %s226, %s227
      %p238 = scmp.eq.s32.totalorder %s21, 0
      %p239 = por %p237, %p238
      %p240 = scmp.ne.s32.totalorder %s226, %s227
      %p241 = scmp.eq.s32.totalorder %s22, 3
      %p242 = por %p240, %p241
      %p244 = scmp.ne.s32.totalorder %s227, %s243
      %p245 = scmp.eq.s32.totalorder %s22, 0
      %p246 = por %p244, %p245
      %s248 = sadd.s32 %s247, 1
      %p251 = scmp.eq.s32.totalorder %s16, 3
      %p252 = scmp.ne.s32.totalorder %s247, %s249
      %p253 = scmp.eq.s32.totalorder %s16, 0
      %p254 = por %p252, %p253
      %p255 = scmp.ne.s32.totalorder %s247, %s249
      %p256 = scmp.eq.s32.totalorder %s21, 3
      %p257 = por %p255, %p256
      %p258 = scmp.ne.s32.totalorder %s249, %s250
      %p259 = scmp.eq.s32.totalorder %s21, 0
      %p260 = por %p258, %p259
      %p261 = scmp.ne.s32.totalorder %s249, %s250
      %p262 = scmp.eq.s32.totalorder %s22, 3
      %p263 = por %p261, %p262
      %p265 = scmp.ne.s32.totalorder %s250, %s264
      %p266 = scmp.eq.s32.totalorder %s22, 0
      %p267 = por %p265, %p266
      %p268 = scmp.le.s32.totalorder 1, %s16
      %p269 = scmp.lt.s32.totalorder %s16, 5
      %p270 = pnand %p268, %p269
      %p271 = pneg %p270
      // Predicated region
      $region9: #{vision_encoder_forward.1} parent=5 // pred_check
        _
      $region10: #{vision_encoder_forward.1} parent=5 // pred_check_branch
        %273 = sbr.rel (%p270) target = $region12
      $region11: #{vision_encoder_forward.1} parent=5 // pred_region
        %s274 = ssub.s32 %s16, 1
        // Predicated region
        $region13: #{vision_encoder_forward.1} parent=11 // pred_check
          %p275 = pneg %p37
        $region14: #{vision_encoder_forward.1} parent=11 // pred_check_branch
          %277 = sbr.rel (%p275) target = $region16
        $region15: #{vision_encoder_forward.1} parent=11 // pred_region
          _
        $region16: #{vision_encoder_forward.1} parent=11 // pred_fallthru
          _
        // Predicated region
        $region17: #{vision_encoder_forward.1} parent=11 // pred_check
          %p278 = pneg %p88
        $region18: #{vision_encoder_forward.1} parent=11 // pred_check_branch
          %280 = sbr.rel (%p278) target = $region20
        $region19: #{vision_encoder_forward.1} parent=11 // pred_region
          _
        $region20: #{vision_encoder_forward.1} parent=11 // pred_fallthru
          _
        // Predicated region
        $region21: #{vision_encoder_forward.1} parent=11 // pred_check
          %p281 = pneg %p109
        $region22: #{vision_encoder_forward.1} parent=11 // pred_check_branch
          %283 = sbr.rel (%p281) target = $region24
        $region23: #{vision_encoder_forward.1} parent=11 // pred_region
          _
        $region24: #{vision_encoder_forward.1} parent=11 // pred_fallthru
          _
      $region12: #{vision_encoder_forward.1} parent=5 // pred_fallthru
        _
      %p284 = scmp.lt.s32.totalorder %s16, 4
      // Predicated region
      $region25: #{vision_encoder_forward.1} parent=5 // pred_check
        %p285 = pneg %p284
      $region26: #{vision_encoder_forward.1} parent=5 // pred_check_branch
        %287 = sbr.rel (%p285) target = $region28
      $region27: #{vision_encoder_forward.1} parent=5 // pred_region
        // Predicated region
        $region29: #{vision_encoder_forward.1} parent=27 // pred_check
          %p288 = pneg %p61
        $region30: #{vision_encoder_forward.1} parent=27 // pred_check_branch
          %290 = sbr.rel (%p288) target = $region32
        $region31: #{vision_encoder_forward.1} parent=27 // pred_region
          %s291 = sand.u32 %s51, 1
          %s292 = sand.u32 %s51, 1
          %s293 = smul.addr %s292, 8
          %s294 = scalar_lea.vmem [#allocation3], %s293
          %p295 = scmp.lt.s32.totalorder %s16, 3
          %s296 = scalar_select %p295, %s16, 3
          %s297 = smul.addr %s296, 4
          %s298 = scalar_lea.vmem %s1, %s297
          // Predicated region
          $region33: #{vision_encoder_forward.1} parent=31 // pred_check
            _
          $region34: #{vision_encoder_forward.1} parent=31 // pred_check_branch
            %300 = sbr.rel (0) target = $region36
          $region35: #{vision_encoder_forward.1} parent=31 // pred_region
            // Predicated region
            $region37: #{vision_encoder_forward.1} parent=35 // pred_check
              _
            $region38: #{vision_encoder_forward.1} parent=35 // pred_check_branch
              %302 = sbr.rel target = $region40
            $region39: #{vision_encoder_forward.1} parent=35 // pred_region
              // Predicated region
              $region52: #{vision_encoder_forward.1} parent=39 // pred_check
                _
              $region53: #{vision_encoder_forward.1} parent=39 // pred_check_branch
                %320 = sbr.rel (0) target = $region55
              $region54: #{vision_encoder_forward.1} parent=39 // pred_region
                loop: start=0, step=1, limit=1
                $region56: #{vision_encoder_forward.1} parent=54 // loop_pre_header
                  _
                $region57: #{vision_encoder_forward.1} parent=54 // loop_header
                  %s322 = sphi 0, %s326
                  %p323 = scmp.ge.s32.totalorder %s322, 1
                  %s327 = sphi %s298, %s298
                  %s328 = sphi %s294, %s294
                $region58: #{vision_encoder_forward.1} parent=54 // loop_header_branch
                  %325 = sbr.rel (%p323) target = $region62
                $region59: #{vision_encoder_forward.1} parent=54 // loop_body
                  _
                $region60: #{vision_encoder_forward.1} parent=54 // loop_footer
                  %s326 = sadd.s32 1, %s322
                $region61: #{vision_encoder_forward.1} parent=54 // loop_footer_branch
                  %321 = sbr.rel target = $region57
                $region62: #{vision_encoder_forward.1} parent=54 // loop_exit
                  _
                %s330 = ssub.s32 16, 1
                loop: start=0, step=1, limit=1
                $region63: #{vision_encoder_forward.1} parent=54 // loop_pre_header
                  _
                $region64: #{vision_encoder_forward.1} parent=54 // loop_header
                  %s332 = sphi 0, %s336
                  %p333 = scmp.ge.s32.totalorder %s332, 1
                  %s337 = sphi %s298, %s298
                  %s338 = sphi %s294, %s294
                $region65: #{vision_encoder_forward.1} parent=54 // loop_header_branch
                  %335 = sbr.rel (%p333) target = $region69
                $region66: #{vision_encoder_forward.1} parent=54 // loop_body
                  %v339 = vld [vmem:[%s337] sm:%s330]
                  %340 = vst [vmem:[%s338] sm:%s330] %v339
                  %v341 = vld [vmem:[%s337 + $0x10] sm:%s330]
                  %342 = vst [vmem:[%s338 + $0x4] sm:%s330] %v341
                $region67: #{vision_encoder_forward.1} parent=54 // loop_footer
                  %s336 = sadd.s32 1, %s332
                $region68: #{vision_encoder_forward.1} parent=54 // loop_footer_branch
                  %331 = sbr.rel target = $region64
                $region69: #{vision_encoder_forward.1} parent=54 // loop_exit
                  _
              $region55: #{vision_encoder_forward.1} parent=39 // pred_fallthru
                _
            $region40: #{vision_encoder_forward.1} parent=35 // pred_fallthru
              _
            // Predicated region
            $region41: #{vision_encoder_forward.1} parent=35 // pred_check
              _
            $region42: #{vision_encoder_forward.1} parent=35 // pred_check_branch
              %304 = sbr.rel (0) target = $region44
            $region43: #{vision_encoder_forward.1} parent=35 // pred_region
              %s306 = ssub.s32 16, 1
              loop: start=0, step=1, limit=1
              $region45: #{vision_encoder_forward.1} parent=43 // loop_pre_header
                _
              $region46: #{vision_encoder_forward.1} parent=43 // loop_header
                %s308 = sphi 0, %s312
                %p309 = scmp.ge.s32.totalorder %s308, 1
                %s313 = sphi %s298, %s298
                %s314 = sphi %s294, %s294
              $region47: #{vision_encoder_forward.1} parent=43 // loop_header_branch
                %311 = sbr.rel (%p309) target = $region51
              $region48: #{vision_encoder_forward.1} parent=43 // loop_body
                %v315 = vld [vmem:[%s313] sm:%s306]
                %316 = vst [vmem:[%s314] sm:%s306] %v315
                %v317 = vld [vmem:[%s313 + $0x10] sm:%s306]
                %318 = vst [vmem:[%s314 + $0x4] sm:%s306] %v317
              $region49: #{vision_encoder_forward.1} parent=43 // loop_footer
                %s312 = sadd.s32 1, %s308
              $region50: #{vision_encoder_forward.1} parent=43 // loop_footer_branch
                %307 = sbr.rel target = $region46
              $region51: #{vision_encoder_forward.1} parent=43 // loop_exit
                _
            $region44: #{vision_encoder_forward.1} parent=35 // pred_fallthru
              _
          $region36: #{vision_encoder_forward.1} parent=31 // pred_fallthru
            _
          %343 = vnop
        $region32: #{vision_encoder_forward.1} parent=27 // pred_fallthru
          _
        // Predicated region
        $region70: #{vision_encoder_forward.1} parent=27 // pred_check
          %p344 = pneg %p129
        $region71: #{vision_encoder_forward.1} parent=27 // pred_check_branch
          %346 = sbr.rel (%p344) target = $region73
        $region72: #{vision_encoder_forward.1} parent=27 // pred_region
          %p347 = scmp.lt.s32.totalorder %s16, 3
          %s348 = scalar_select %p347, %s16, 3
          %s349 = smul.addr %s348, 4
          %s350 = smul.addr %s349, 4
          %s351 = scalar_lea.vmem %s4, %s350
        $region73: #{vision_encoder_forward.1} parent=27 // pred_fallthru
          _
        // Predicated region
        $region74: #{vision_encoder_forward.1} parent=27 // pred_check
          %p352 = pneg %p155
        $region75: #{vision_encoder_forward.1} parent=27 // pred_check_branch
          %354 = sbr.rel (%p352) target = $region77
        $region76: #{vision_encoder_forward.1} parent=27 // pred_region
          %p355 = scmp.lt.s32.totalorder %s16, 3
          %s356 = scalar_select %p355, %s16, 3
          %s357 = smul.addr %s356, 4
          %s358 = smul.addr %s357, 4
          %s359 = scalar_lea.vmem %s5, %s358
        $region77: #{vision_encoder_forward.1} parent=27 // pred_fallthru
          _
        // Predicated region
        $region78: #{vision_encoder_forward.1} parent=27 // pred_check
          %p360 = pneg %p181
        $region79: #{vision_encoder_forward.1} parent=27 // pred_check_branch
          %362 = sbr.rel (%p360) target = $region81
        $region80: #{vision_encoder_forward.1} parent=27 // pred_region
          %p363 = scmp.lt.s32.totalorder %s16, 3
          %s364 = scalar_select %p363, %s16, 3
          %s365 = smul.addr %s364, 16
          %s366 = smul.addr %s365, 4
          %s367 = scalar_lea.vmem %s6, %s366
        $region81: #{vision_encoder_forward.1} parent=27 // pred_fallthru
          _
        // Predicated region
        $region82: #{vision_encoder_forward.1} parent=27 // pred_check
          %p368 = pneg %p207
        $region83: #{vision_encoder_forward.1} parent=27 // pred_check_branch
          %370 = sbr.rel (%p368) target = $region85
        $region84: #{vision_encoder_forward.1} parent=27 // pred_region
          %p371 = scmp.lt.s32.totalorder %s16, 3
          %s372 = scalar_select %p371, %s16, 3
          %s373 = smul.addr %s372, 8
          %s374 = scalar_lea.vmem %s7, %s373
        $region85: #{vision_encoder_forward.1} parent=27 // pred_fallthru
          _
        // Predicated region
        $region86: #{vision_encoder_forward.1} parent=27 // pred_check
          %p375 = pneg %p233
        $region87: #{vision_encoder_forward.1} parent=27 // pred_check_branch
          %377 = sbr.rel (%p375) target = $region89
        $region88: #{vision_encoder_forward.1} parent=27 // pred_region
          %p378 = scmp.lt.s32.totalorder %s16, 3
          %s379 = scalar_select %p378, %s16, 3
          %s380 = smul.addr %s379, 2
          %s381 = scalar_lea.vmem %s8, %s380
        $region89: #{vision_encoder_forward.1} parent=27 // pred_fallthru
          _
      $region28: #{vision_encoder_forward.1} parent=5 // pred_fallthru
        _
      %p382 = scmp.le.s32.totalorder 1, %s16
      %p383 = scmp.lt.s32.totalorder %s16, 5
      %p384 = pnand %p382, %p383
      %p385 = pneg %p384
      // Predicated region
      $region90: #{vision_encoder_forward.1} parent=5 // pred_check
        _
      $region91: #{vision_encoder_forward.1} parent=5 // pred_check_branch
        %387 = sbr.rel (%p384) target = $region93
      $region92: #{vision_encoder_forward.1} parent=5 // pred_region
        %s388 = ssub.s32 %s16, 1
        %s389 = sand.u32 %s54, 1
        %s390 = sand.u32 %s54, 1
        %s391 = smul.addr %s390, 8
        %s392 = scalar_lea.vmem [#allocation3], %s391
        // Predicated region
        $region94: #{vision_encoder_forward.1} parent=92 // pred_check
          %p393 = pneg %p67
        $region95: #{vision_encoder_forward.1} parent=92 // pred_check_branch
          %395 = sbr.rel (%p393) target = $region97
        $region96: #{vision_encoder_forward.1} parent=92 // pred_region
          _
        $region97: #{vision_encoder_forward.1} parent=92 // pred_fallthru
          _
        %p396 = pneg %p37
        %p397 = pneg %p34
        %s398 = sand.u32 %s54, 1
        %s399 = sand.u32 %s54, 1
        %s400 = smul.addr %s399, 8
        %s401 = scalar_lea.vmem [#allocation3], %s400
        %p402 = pneg %p67
        %p403 = pneg %p64
        %p404 = pneg %p88
        %p405 = pneg %p85
        %p406 = pneg %p109
        %p407 = pneg %p106
        %p408 = scmp.lt.s32.totalorder %s21, 3
        %s409 = scalar_select %p408, %s21, 3
        %s410 = smul.addr %s409, 4
        %s411 = smul.addr %s410, 4
        %s412 = scalar_lea.vmem %s4, %s411
        %p413 = pneg %p135
        %p414 = pneg %p132
        %p415 = scmp.lt.s32.totalorder %s21, 3
        %s416 = scalar_select %p415, %s21, 3
        %s417 = smul.addr %s416, 4
        %s418 = smul.addr %s417, 4
        %s419 = scalar_lea.vmem %s5, %s418
        %p420 = pneg %p161
        %p421 = pneg %p158
        %p422 = scmp.lt.s32.totalorder %s21, 3
        %s423 = scalar_select %p422, %s21, 3
        %s424 = smul.addr %s423, 16
        %s425 = smul.addr %s424, 4
        %s426 = scalar_lea.vmem %s6, %s425
        %p427 = pneg %p187
        %p428 = pneg %p184
        %p429 = scmp.lt.s32.totalorder %s21, 3
        %s430 = scalar_select %p429, %s21, 3
        %s431 = smul.addr %s430, 8
        %s432 = scalar_lea.vmem %s7, %s431
        %p433 = pneg %p213
        %p434 = pneg %p210
        %p435 = scmp.lt.s32.totalorder %s21, 3
        %s436 = scalar_select %p435, %s21, 3
        %s437 = smul.addr %s436, 2
        %s438 = scalar_lea.vmem %s8, %s437
        %p439 = pneg %p239
        %p440 = pneg %p236
        %p441 = pneg %p260
        %p442 = pneg %p257
        %p443 = scmp.lt.s32.totalorder %s21, 3
        %s444 = scalar_select %p443, %s21, 3
        %p445 = scmp.lt.s32.totalorder %s21, 3
        %s446 = scalar_select %p445, %s21, 3
        %s447 = smul.addr %s446, 4
        %s448 = smul.addr %s447, 4
        %s449 = scalar_lea.vmem %s4, %s448
        %p450 = scmp.lt.s32.totalorder %s21, 3
        %s451 = scalar_select %p450, %s21, 3
        %s452 = smul.addr %s451, 4
        %s453 = smul.addr %s452, 4
        %s454 = scalar_lea.vmem %s5, %s453
        %p455 = scmp.lt.s32.totalorder %s21, 3
        %s456 = scalar_select %p455, %s21, 3
        %s457 = smul.addr %s456, 16
        %s458 = smul.addr %s457, 4
        %s459 = scalar_lea.vmem %s6, %s458
        %p460 = scmp.lt.s32.totalorder %s21, 3
        %s461 = scalar_select %p460, %s21, 3
        %s462 = smul.addr %s461, 8
        %s463 = scalar_lea.vmem %s7, %s462
        %p464 = scmp.lt.s32.totalorder %s21, 3
        %s465 = scalar_select %p464, %s21, 3
        %s466 = smul.addr %s465, 2
        %s467 = scalar_lea.vmem %s8, %s466
        %p469 = scmp.eq.s32.totalorder %s21, 0
        // Predicated region
        $region98: #{vision_encoder_forward.1} parent=92 // pred_check
          %p470 = pneg %p469
        $region99: #{vision_encoder_forward.1} parent=92 // pred_check_branch
          %472 = sbr.rel (%p470) target = $region101
        $region100: #{vision_encoder_forward.1} parent=92 // pred_region
          %v473 = vld [vmem:[%s2] sm:$0x1]
          %v474 = vld [vmem:[%s2 + $0x1] sm:$0x1]
          %v475 = vld [vmem:[%s0] sm:$0xff]
          %vm476 = vcmask 261120
          %v477 = vsel %vm476, %v475, 0.0
          %478 = vadd.xlane.f32.xlu0 %v477
          %v479 = vpop.xlane.xlu0 %478
          %v480 = vrcp.pop 32.0
          %v481 = vmul.f32 %v479, %v480
          %v482 = vsub.f32 %v475, %v481
          %v483 = vmul.f32 %v482, %v482
          %v484 = vsel %vm476, %v483, 0.0
          %485 = vadd.xlane.f32.xlu0 %v484
          %v486 = vpop.xlane.xlu0 %485
          %v487 = vmul.f32 %v486, %v480
          %v488 = vadd.f32 %v487, 1e-05
          %v489 = vrsqrt.pop %v488
          %v490 = vmul.f32 %v482, %v489
          %v491 = vlaneseq
          %v492 = vshrl.u32 %v491, 7
          %v493 = vsub.s32 0, %v492
          %v494 = vrot.slane %v473, %v493
          %v495 = vmul.f32 %v490, %v494
          %v496 = vlaneseq
          %v497 = vshrl.u32 %v496, 7
          %v498 = vsub.s32 0, %v497
          %v499 = vrot.slane %v474, %v498
          %v500 = vadd.f32 %v495, %v499
          %501 = vst.msk [vmem:[#allocation2] sm:$0xff] %vm476, %v500
          %v502 = vld [vmem:[%s392] sm:$0xf]
          %vm503 = vcmask 257024
          %v504 = vsel %vm503, %v502, 0.0
          %505 = vadd.xlane.f32.xlu0 %v504
          %v506 = vpop.xlane.xlu0 %505
          %v507 = vmul.f32 %v506, %v480
          %v508 = vsub.f32 %v502, %v507
          %v509 = vmul.f32 %v508, %v508
          %v510 = vsel %vm503, %v509, 0.0
          %511 = vadd.xlane.f32.xlu0 %v510
          %v512 = vpop.xlane.xlu0 %511
          %v513 = vmul.f32 %v512, %v480
          %v514 = vadd.f32 %v513, 1e-05
          %v515 = vrsqrt.pop %v514
          %v516 = vmul.f32 %v508, %v515
          %v517 = vmul.f32 %v516, %v494
          %v518 = vadd.f32 %v517, %v499
          %519 = vst.msk [vmem:[#allocation2 + $0x8] sm:$0xf] %vm503, %v518
          %s520 = scalar_lea.vmem %s0, 8
          %v521 = vld [vmem:[%s520] sm:$0xff]
          %v522 = vsel %vm476, %v521, 0.0
          %523 = vadd.xlane.f32.xlu0 %v522
          %v524 = vpop.xlane.xlu0 %523
          %v525 = vmul.f32 %v524, %v480
          %v526 = vsub.f32 %v521, %v525
          %v527 = vmul.f32 %v526, %v526
          %v528 = vsel %vm476, %v527, 0.0
          %529 = vadd.xlane.f32.xlu0 %v528
          %v530 = vpop.xlane.xlu0 %529
          %v531 = vmul.f32 %v530, %v480
          %v532 = vadd.f32 %v531, 1e-05
          %v533 = vrsqrt.pop %v532
          %v534 = vmul.f32 %v526, %v533
          %v535 = vmul.f32 %v534, %v494
          %v536 = vadd.f32 %v535, %v499
          %537 = vst.msk [vmem:[#allocation2 + $0xc] sm:$0xff] %vm476, %v536
          %s538 = scalar_lea.vmem %s392, 4 [#allocation3]
          %v539 = vld [vmem:[%s538] sm:$0xf]
          %v540 = vsel %vm503, %v539, 0.0
          %541 = vadd.xlane.f32.xlu0 %v540
          %v542 = vpop.xlane.xlu0 %541
          %v543 = vmul.f32 %v542, %v480
          %v544 = vsub.f32 %v539, %v543
          %v545 = vmul.f32 %v544, %v544
          %v546 = vsel %vm503, %v545, 0.0
          %547 = vadd.xlane.f32.xlu0 %v546
          %v548 = vpop.xlane.xlu0 %547
          %v549 = vmul.f32 %v548, %v480
          %v550 = vadd.f32 %v549, 1e-05
          %v551 = vrsqrt.pop %v550
          %v552 = vmul.f32 %v544, %v551
          %v553 = vmul.f32 %v552, %v494
          %v554 = vadd.f32 %v553, %v499
          %555 = vst.msk [vmem:[#allocation2 + $0x14] sm:$0xf] %vm503, %v554
        $region101: #{vision_encoder_forward.1} parent=92 // pred_fallthru
          _
        %p556 = scmp.ge.s32.totalorder %s21, 1
        %p557 = scmp.lt.s32.totalorder %s21, 4
        %p558 = pnand %p556, %p557
        %p559 = pneg %p558
        // Predicated region
        $region102: #{vision_encoder_forward.1} parent=92 // pred_check
          _
        $region103: #{vision_encoder_forward.1} parent=92 // pred_check_branch
          %561 = sbr.rel (%p558) target = $region105
        $region104: #{vision_encoder_forward.1} parent=92 // pred_region
          %v562 = vld [vmem:[%s392] sm:$0xf]
          %vm563 = vcmask 257024
          %564 = vst.msk [vmem:[#allocation2 + $0x8] sm:$0xf] %vm563, %v562
          %s565 = scalar_lea.vmem %s392, 4 [#allocation3]
          %v566 = vld [vmem:[%s565] sm:$0xf]
          %567 = vst.msk [vmem:[#allocation2 + $0x14] sm:$0xf] %vm563, %v566
        $region105: #{vision_encoder_forward.1} parent=92 // pred_fallthru
          _
        %v568 = vld [vmem:[%s449] sm:$0xf]
        %v569 = vld [vmem:[%s449 + $0x4] sm:$0xf]
        %v570 = vld [vmem:[%s449 + $0x8] sm:$0xf]
        %v571 = vld [vmem:[%s449 + $0xc] sm:$0xf]
        %v572 = vld [vmem:[%s463] sm:$0x3f]
        %v573 = vld [vmem:[%s467] sm:$0x3]
        %v574 = vld [vmem:[#allocation2] sm:$0xff]
        %v575 = vld [vmem:[#allocation2 + $0x8] sm:$0xff]
        %v576 = vld [vmem:[#allocation2 + $0x10] sm:$0xff]
        %vm577 = vcmask 261120
        %v578 = vsel %vm577, %v574, 0.0
        %579 = vadd.xlane.f32.xlu0 %v578
        %v580 = vpop.xlane.xlu0 %579
        %v581 = vsel %vm577, %v575, 0.0
        %582 = vadd.xlane.f32.xlu0 %v581
        %v583 = vpop.xlane.xlu0 %582
        %v584 = vsel %vm577, %v576, 0.0
        %585 = vadd.xlane.f32.xlu0 %v584
        %v586 = vpop.xlane.xlu0 %585
        %v587 = vrcp.pop 32.0
        %v588 = vmul.f32 %v580, %v587
        %v589 = vmul.f32 %v583, %v587
        %v590 = vmul.f32 %v586, %v587
        %v591 = vsub.f32 %v574, %v588
        %v592 = vsub.f32 %v575, %v589
        %v593 = vsub.f32 %v576, %v590
        %v594 = vmul.f32 %v591, %v591
        %v595 = vmul.f32 %v592, %v592
        %v596 = vmul.f32 %v593, %v593
        %v597 = vsel %vm577, %v594, 0.0
        %598 = vadd.xlane.f32.xlu0 %v597
        %v599 = vpop.xlane.xlu0 %598
        %v600 = vsel %vm577, %v595, 0.0
        %601 = vadd.xlane.f32.xlu0 %v600
        %v602 = vpop.xlane.xlu0 %601
        %v603 = vsel %vm577, %v596, 0.0
        %604 = vadd.xlane.f32.xlu0 %v603
        %v605 = vpop.xlane.xlu0 %604
        %v606 = vmul.f32 %v599, %v587
        %v607 = vmul.f32 %v602, %v587
        %v608 = vmul.f32 %v605, %v587
        %v609 = vadd.f32 %v606, 1e-05
        %v610 = vadd.f32 %v607, 1e-05
        %v611 = vadd.f32 %v608, 1e-05
        %v612 = vrsqrt.pop %v609
        %v613 = vrsqrt.pop %v610
        %v614 = vrsqrt.pop %v611
        %v615 = vmul.f32 %v591, %v612
        %v616 = vmul.f32 %v592, %v613
        %v617 = vmul.f32 %v593, %v614
        %v618 = vlaneseq
        %v619 = vshrl.u32 %v618, 7
        %v620 = vsub.s32 0, %v619
        %v621 = vrot.slane %v572, %v620
        %v622 = vmul.f32 %v615, %v621
        %v623 = vmul.f32 %v616, %v621
        %v624 = vmul.f32 %v617, %v621
        %v625 = vlaneseq
        %v626 = vshrl.u32 %v625, 7
        %v627 = vsub.s32 1, %v626
        %v628 = vrot.slane %v572, %v627
        %v629 = vadd.f32 %v622, %v628
        %v630 = vadd.f32 %v623, %v628
        %v631 = vadd.f32 %v624, %v628
        %v632 = vpack.c.bf16 %v630, %v629
        %v633 = vpack.c.bf16 %v631, %v631
        %v635 = vlaneseq
        %v636 = vshrl.u32 %v635, 7
        %v637 = vsub.s32 0, %v636
        %v638 = vrot.slane %v573, %v637
        %v644 = vunpack.c.l.b16 %v568
        %v645 = vunpack.c.l.b16 %v569
        %v646 = vunpack.c.l.b16 %v570
        %v647 = vunpack.c.l.b16 %v571
        %v648 = vpack.c.b16 %v645, %v644
        %v649 = vpack.c.b16 %v647, %v646
        %v653 = vsel %vm577, %v632, 0
        %v656 = vsel %vm577, %v633, 0
        %658 = vmatprep.subr.bf16.mxu0 0
        %659 = vmatpush1.bf16.msra.mxu0 0
        %660 = vmatprep.subr.bf16.mxu0 0
        %661 = vmatpush1.bf16.msra.mxu0 0
        %662 = vmatprep.subr.bf16.mxu0 0
        %663 = vmatpush1.bf16.msra.mxu0 0
        %664 = vmatprep.subr.bf16.mxu0 0
        %665 = vmatpush1.bf16.msra.mxu0 0
        %666 = vmatprep.subr.bf16.mxu0 0
        %667 = vmatpush1.bf16.msra.mxu0 0
        %668 = vmatprep.subr.bf16.mxu0 0
        %669 = vmatpush1.bf16.msra.mxu0 0
        %670 = vmatprep.subr.bf16.mxu0 0
        %671 = vmatpush1.bf16.msra.mxu0 %v649
        %672 = vmatprep.subr.bf16.mxu0 0
        %673 = vmatpush1.bf16.msra.mxu0 %v648
        %674 = vmatprep.subr.bf16.mxu0 0
        %675 = vmatpush2.bf16.msra.mxu0 0
        %676 = vmatprep.subr.bf16.mxu0 0
        %677 = vmatpush2.bf16.msra.mxu0 0
        %678 = vmatprep.subr.bf16.mxu0 0
        %679 = vmatpush2.bf16.msra.mxu0 0
        %680 = vmatprep.subr.bf16.mxu0 0
        %681 = vmatpush2.bf16.msra.mxu0 0
        %682 = vmatprep.subr.bf16.mxu0 0
        %683 = vmatpush2.bf16.msra.mxu0 0
        %684 = vmatprep.subr.bf16.mxu0 0
        %685 = vmatpush2.bf16.msra.mxu0 0
        %686 = vmatprep.subr.bf16.mxu0 0
        %687 = vmatpush2.bf16.msra.mxu0 0
        %688 = vmatprep.subr.bf16.mxu0 0
        %689 = vmatpush2.bf16.msra.mxu0 0
        %690 = vmatprep.mubr.bf16.mxu0 0
        %691 = vmatmul.mubr.bf16.gmra.mxu0 %v653
        %v692 = vpop.f32.mrf.mxu0
        %v693 = vadd.f32 %v638, %v692
        %v694 = vpop.f32.mrf.mxu0
        %v695 = vpop.f32.mrf.mxu0
        %v696 = vadd.f32 %v638, %v695
        %v697 = vpop.f32.mrf.mxu0
        %698 = vmatprep.mubr.bf16.mxu0 0
        %699 = vmatmul.mubr.bf16.gmra.mxu0 %v656
        %v700 = vpop.f32.mrf.mxu0
        %v701 = vadd.f32 %v638, %v700
        %v702 = vpop.f32.mrf.mxu0
        %v703 = vpop.f32.mrf.mxu0
        %v704 = vpop.f32.mrf.mxu0
        %705 = vdwg.mxu0
        %v706 = vpack.c.bf16 %v696, %v693
        %708 = vrot.lane.b32.xlu0 %v706, 96
        %v709 = vpop.permute.xlu0 %708
        %vm710 = vcmask 64512
        %v712 = vsel %vm710, %v706, 0
        %v715 = vsel %vm710, %v709, 0
        %717 = vmatprep.subr.bf16.mxu0 0
        %718 = vmatpush1.bf16.xpose.msra.mxu0 0
        %719 = vmatprep.subr.bf16.mxu0 0
        %720 = vmatpush1.bf16.xpose.msra.mxu0 0
        %721 = vmatprep.subr.bf16.mxu0 0
        %722 = vmatpush1.bf16.xpose.msra.mxu0 0
        %723 = vmatprep.subr.bf16.mxu0 0
        %724 = vmatpush1.bf16.xpose.msra.mxu0 0
        %725 = vmatprep.subr.bf16.mxu0 0
        %726 = vmatpush1.bf16.xpose.msra.mxu0 0
        %727 = vmatprep.subr.bf16.mxu0 0
        %728 = vmatpush1.bf16.xpose.msra.mxu0 0
        %729 = vmatprep.subr.bf16.mxu0 0
        %730 = vmatpush1.bf16.xpose.msra.mxu0 0
        %731 = vmatprep.subr.bf16.mxu0 0
        %732 = vmatpush1.bf16.xpose.msra.mxu0 %v715
        %733 = vmatprep.subr.bf16.mxu0 0
        %734 = vmatpush2.bf16.xpose.msra.mxu0 0
        %735 = vmatprep.subr.bf16.mxu0 0
        %736 = vmatpush2.bf16.xpose.msra.mxu0 0
        %737 = vmatprep.subr.bf16.mxu0 0
        %738 = vmatpush2.bf16.xpose.msra.mxu0 0
        %739 = vmatprep.subr.bf16.mxu0 0
        %740 = vmatpush2.bf16.xpose.msra.mxu0 0
        %741 = vmatprep.subr.bf16.mxu0 0
        %742 = vmatpush2.bf16.xpose.msra.mxu0 0
        %743 = vmatprep.subr.bf16.mxu0 0
        %744 = vmatpush2.bf16.xpose.msra.mxu0 0
        %745 = vmatprep.subr.bf16.mxu0 0
        %746 = vmatpush2.bf16.xpose.msra.mxu0 0
        %747 = vmatprep.subr.bf16.mxu0 0
        %748 = vmatpush2.bf16.xpose.msra.mxu0 0
        %749 = vmatprep.mubr.bf16.mxu0 0
        %750 = vmatmul.mubr.bf16.gmra.mxu0 %v712
        %v751 = vpop.f32.mrf.mxu0
        %v752 = vadd.f32 0.0, %v751
        %v753 = vpop.f32.mrf.mxu0
        %v754 = vpop.f32.mrf.mxu0
        %v755 = vadd.f32 0.0, %v754
        %v756 = vpop.f32.mrf.mxu0
        %757 = vdwg.mxu0
        %v758 = vmul.f32 %v752, 0.35355338
        %v759 = vmul.f32 %v755, 0.35355338
        %vm760 = vcmask 97280
        %v761 = vsel %vm760, %v758, -inf
        %762 = vmax.xlane.f32.xlu0 %v761
        %v763 = vpop.xlane.xlu0 %762
        %vm764 = vcmask 93184
        %v765 = vsel %vm764, %v759, -inf
        %766 = vmax.xlane.f32.xlu0 %v765
        %v767 = vpop.xlane.xlu0 %766
        %v768 = vsub.f32 %v758, %v763
        %v769 = vsub.f32 %v759, %v767
        %v770 = vmul.f32 %v768, 1.442695
        %v771 = vpow.pop %v770
        %v772 = vmul.f32 %v769, 1.442695
        %v773 = vpow.pop %v772
        %v774 = vsel %vm760, %v771, 0.0
        %775 = vadd.xlane.f32.xlu0 %v774
        %v776 = vpop.xlane.xlu0 %775
        %v777 = vsel %vm764, %v773, 0.0
        %778 = vadd.xlane.f32.xlu0 %v777
        %v779 = vpop.xlane.xlu0 %778
        %v780 = vrcp.pop %v776
        %v781 = vrcp.pop %v779
        %v782 = vmul.f32 %v771, %v780
        %v783 = vmul.f32 %v773, %v781
        %v784 = vpack.c.bf16 %v783, %v782
        %785 = vrot.lane.b32.xlu0 %v706, 64
        %v786 = vpop.permute.xlu0 %785
        %v788 = vsel %vm760, %v784, 0
        %vm790 = vcmask 1045504
        %v792 = vsel %vm790, %v786, 0
        %794 = vmatprep.subr.bf16.mxu0 0
        %795 = vmatpush1.bf16.msra.mxu0 0
        %796 = vmatprep.subr.bf16.mxu0 0
        %797 = vmatpush1.bf16.msra.mxu0 0
        %798 = vmatprep.subr.bf16.mxu0 0
        %799 = vmatpush1.bf16.msra.mxu0 0
        %800 = vmatprep.subr.bf16.mxu0 0
        %801 = vmatpush1.bf16.msra.mxu0 0
        %802 = vmatprep.subr.bf16.mxu0 0
        %803 = vmatpush1.bf16.msra.mxu0 0
        %804 = vmatprep.subr.bf16.mxu0 0
        %805 = vmatpush1.bf16.msra.mxu0 0
        %806 = vmatprep.subr.bf16.mxu0 0
        %807 = vmatpush1.bf16.msra.mxu0 0
        %808 = vmatprep.subr.bf16.mxu0 0
        %809 = vmatpush1.bf16.msra.mxu0 %v792
        %810 = vmatprep.subr.bf16.mxu0 0
        %811 = vmatpush2.bf16.msra.mxu0 0
        %812 = vmatprep.subr.bf16.mxu0 0
        %813 = vmatpush2.bf16.msra.mxu0 0
        %814 = vmatprep.subr.bf16.mxu0 0
        %815 = vmatpush2.bf16.msra.mxu0 0
        %816 = vmatprep.subr.bf16.mxu0 0
        %817 = vmatpush2.bf16.msra.mxu0 0
        %818 = vmatprep.subr.bf16.mxu0 0
        %819 = vmatpush2.bf16.msra.mxu0 0
        %820 = vmatprep.subr.bf16.mxu0 0
        %821 = vmatpush2.bf16.msra.mxu0 0
        %822 = vmatprep.subr.bf16.mxu0 0
        %823 = vmatpush2.bf16.msra.mxu0 0
        %824 = vmatprep.subr.bf16.mxu0 0
        %825 = vmatpush2.bf16.msra.mxu0 0
        %826 = vmatprep.mubr.bf16.mxu0 0
        %827 = vmatmul.mubr.bf16.gmra.mxu0 %v788
        %v828 = vpop.f32.mrf.mxu0
        %v829 = vadd.f32 0.0, %v828
        %v830 = vpop.f32.mrf.mxu0
        %v831 = vpop.f32.mrf.mxu0
        %v832 = vadd.f32 0.0, %v831
        %v833 = vpop.f32.mrf.mxu0
        %834 = vdwg.mxu0
        %835 = vrot.lane.b32.xlu0 %v706, 120
        %v836 = vpop.permute.xlu0 %835
        %837 = vrot.lane.b32.xlu0 %v706, 88
        %v838 = vpop.permute.xlu0 %837
        %v840 = vsel %vm710, %v836, 0
        %v843 = vsel %vm710, %v838, 0
        %845 = vmatprep.subr.bf16.mxu0 0
        %846 = vmatpush1.bf16.xpose.msra.mxu0 0
        %847 = vmatprep.subr.bf16.mxu0 0
        %848 = vmatpush1.bf16.xpose.msra.mxu0 0
        %849 = vmatprep.subr.bf16.mxu0 0
        %850 = vmatpush1.bf16.xpose.msra.mxu0 0
        %851 = vmatprep.subr.bf16.mxu0 0
        %852 = vmatpush1.bf16.xpose.msra.mxu0 0
        %853 = vmatprep.subr.bf16.mxu0 0
        %854 = vmatpush1.bf16.xpose.msra.mxu0 0
        %855 = vmatprep.subr.bf16.mxu0 0
        %856 = vmatpush1.bf16.xpose.msra.mxu0 0
        %857 = vmatprep.subr.bf16.mxu0 0
        %858 = vmatpush1.bf16.xpose.msra.mxu0 0
        %859 = vmatprep.subr.bf16.mxu0 0
        %860 = vmatpush1.bf16.xpose.msra.mxu0 %v843
        %861 = vmatprep.subr.bf16.mxu0 0
        %862 = vmatpush2.bf16.xpose.msra.mxu0 0
        %863 = vmatprep.subr.bf16.mxu0 0
        %864 = vmatpush2.bf16.xpose.msra.mxu0 0
        %865 = vmatprep.subr.bf16.mxu0 0
        %866 = vmatpush2.bf16.xpose.msra.mxu0 0
        %867 = vmatprep.subr.bf16.mxu0 0
        %868 = vmatpush2.bf16.xpose.msra.mxu0 0
        %869 = vmatprep.subr.bf16.mxu0 0
        %870 = vmatpush2.bf16.xpose.msra.mxu0 0
        %871 = vmatprep.subr.bf16.mxu0 0
        %872 = vmatpush2.bf16.xpose.msra.mxu0 0
        %873 = vmatprep.subr.bf16.mxu0 0
        %874 = vmatpush2.bf16.xpose.msra.mxu0 0
        %875 = vmatprep.subr.bf16.mxu0 0
        %876 = vmatpush2.bf16.xpose.msra.mxu0 0
        %877 = vmatprep.mubr.bf16.mxu0 0
        %878 = vmatmul.mubr.bf16.gmra.mxu0 %v840
        %v879 = vpop.f32.mrf.mxu0
        %v880 = vadd.f32 0.0, %v879
        %v881 = vpop.f32.mrf.mxu0
        %v882 = vpop.f32.mrf.mxu0
        %v883 = vadd.f32 0.0, %v882
        %v884 = vpop.f32.mrf.mxu0
        %885 = vdwg.mxu0
        %v886 = vmul.f32 %v880, 0.35355338
        %v887 = vmul.f32 %v883, 0.35355338
        %v888 = vsel %vm760, %v886, -inf
        %889 = vmax.xlane.f32.xlu0 %v888
        %v890 = vpop.xlane.xlu0 %889
        %v891 = vsel %vm764, %v887, -inf
        %892 = vmax.xlane.f32.xlu0 %v891
        %v893 = vpop.xlane.xlu0 %892
        %v894 = vsub.f32 %v886, %v890
        %v895 = vsub.f32 %v887, %v893
        %v896 = vmul.f32 %v894, 1.442695
        %v897 = vpow.pop %v896
        %v898 = vmul.f32 %v895, 1.442695
        %v899 = vpow.pop %v898
        %v900 = vsel %vm760, %v897, 0.0
        %901 = vadd.xlane.f32.xlu0 %v900
        %v902 = vpop.xlane.xlu0 %901
        %v903 = vsel %vm764, %v899, 0.0
        %904 = vadd.xlane.f32.xlu0 %v903
        %v905 = vpop.xlane.xlu0 %904
        %v906 = vrcp.pop %v902
        %v907 = vrcp.pop %v905
        %v908 = vmul.f32 %v897, %v906
        %v909 = vmul.f32 %v899, %v907
        %v910 = vpack.c.bf16 %v909, %v908
        %911 = vrot.lane.b32.xlu0 %v706, 56
        %v912 = vpop.permute.xlu0 %911
        %v914 = vsel %vm760, %v910, 0
        %v917 = vsel %vm790, %v912, 0
        %919 = vmatprep.subr.bf16.mxu0 0
        %920 = vmatpush1.bf16.msra.mxu0 0
        %921 = vmatprep.subr.bf16.mxu0 0
        %922 = vmatpush1.bf16.msra.mxu0 0
        %923 = vmatprep.subr.bf16.mxu0 0
        %924 = vmatpush1.bf16.msra.mxu0 0
        %925 = vmatprep.subr.bf16.mxu0 0
        %926 = vmatpush1.bf16.msra.mxu0 0
        %927 = vmatprep.subr.bf16.mxu0 0
        %928 = vmatpush1.bf16.msra.mxu0 0
        %929 = vmatprep.subr.bf16.mxu0 0
        %930 = vmatpush1.bf16.msra.mxu0 0
        %931 = vmatprep.subr.bf16.mxu0 0
        %932 = vmatpush1.bf16.msra.mxu0 0
        %933 = vmatprep.subr.bf16.mxu0 0
        %934 = vmatpush1.bf16.msra.mxu0 %v917
        %935 = vmatprep.subr.bf16.mxu0 0
        %936 = vmatpush2.bf16.msra.mxu0 0
        %937 = vmatprep.subr.bf16.mxu0 0
        %938 = vmatpush2.bf16.msra.mxu0 0
        %939 = vmatprep.subr.bf16.mxu0 0
        %940 = vmatpush2.bf16.msra.mxu0 0
        %941 = vmatprep.subr.bf16.mxu0 0
        %942 = vmatpush2.bf16.msra.mxu0 0
        %943 = vmatprep.subr.bf16.mxu0 0
        %944 = vmatpush2.bf16.msra.mxu0 0
        %945 = vmatprep.subr.bf16.mxu0 0
        %946 = vmatpush2.bf16.msra.mxu0 0
        %947 = vmatprep.subr.bf16.mxu0 0
        %948 = vmatpush2.bf16.msra.mxu0 0
        %949 = vmatprep.subr.bf16.mxu0 0
        %950 = vmatpush2.bf16.msra.mxu0 0
        %951 = vmatprep.mubr.bf16.mxu0 0
        %952 = vmatmul.mubr.bf16.gmra.mxu0 %v914
        %v953 = vpop.f32.mrf.mxu0
        %v954 = vadd.f32 0.0, %v953
        %v955 = vpop.f32.mrf.mxu0
        %v956 = vpop.f32.mrf.mxu0
        %v957 = vadd.f32 0.0, %v956
        %v958 = vpop.f32.mrf.mxu0
        %959 = vdwg.mxu0
        %960 = vrot.lane.b32.xlu0 %v706, 112
        %v961 = vpop.permute.xlu0 %960
        %962 = vrot.lane.b32.xlu0 %v706, 80
        %v963 = vpop.permute.xlu0 %962
        %v965 = vsel %vm710, %v961, 0
        %v968 = vsel %vm710, %v963, 0
        %970 = vmatprep.subr.bf16.mxu0 0
        %971 = vmatpush1.bf16.xpose.msra.mxu0 0
        %972 = vmatprep.subr.bf16.mxu0 0
        %973 = vmatpush1.bf16.xpose.msra.mxu0 0
        %974 = vmatprep.subr.bf16.mxu0 0
        %975 = vmatpush1.bf16.xpose.msra.mxu0 0
        %976 = vmatprep.subr.bf16.mxu0 0
        %977 = vmatpush1.bf16.xpose.msra.mxu0 0
        %978 = vmatprep.subr.bf16.mxu0 0
        %979 = vmatpush1.bf16.xpose.msra.mxu0 0
        %980 = vmatprep.subr.bf16.mxu0 0
        %981 = vmatpush1.bf16.xpose.msra.mxu0 0
        %982 = vmatprep.subr.bf16.mxu0 0
        %983 = vmatpush1.bf16.xpose.msra.mxu0 0
        %984 = vmatprep.subr.bf16.mxu0 0
        %985 = vmatpush1.bf16.xpose.msra.mxu0 %v968
        %986 = vmatprep.subr.bf16.mxu0 0
        %987 = vmatpush2.bf16.xpose.msra.mxu0 0
        %988 = vmatprep.subr.bf16.mxu0 0
        %989 = vmatpush2.bf16.xpose.msra.mxu0 0
        %990 = vmatprep.subr.bf16.mxu0 0
        %991 = vmatpush2.bf16.xpose.msra.mxu0 0
        %992 = vmatprep.subr.bf16.mxu0 0
        %993 = vmatpush2.bf16.xpose.msra.mxu0 0
        %994 = vmatprep.subr.bf16.mxu0 0
        %995 = vmatpush2.bf16.xpose.msra.mxu0 0
        %996 = vmatprep.subr.bf16.mxu0 0
        %997 = vmatpush2.bf16.xpose.msra.mxu0 0
        %998 = vmatprep.subr.bf16.mxu0 0
        %999 = vmatpush2.bf16.xpose.msra.mxu0 0
        %1000 = vmatprep.subr.bf16.mxu0 0
        %1001 = vmatpush2.bf16.xpose.msra.mxu0 0
        %1002 = vmatprep.mubr.bf16.mxu0 0
        %1003 = vmatmul.mubr.bf16.gmra.mxu0 %v965
        %v1004 = vpop.f32.mrf.mxu0
        %v1005 = vadd.f32 0.0, %v1004
        %v1006 = vpop.f32.mrf.mxu0
        %v1007 = vpop.f32.mrf.mxu0
        %v1008 = vadd.f32 0.0, %v1007
        %v1009 = vpop.f32.mrf.mxu0
        %1010 = vdwg.mxu0
        %v1011 = vmul.f32 %v1005, 0.35355338
        %v1012 = vmul.f32 %v1008, 0.35355338
        %v1013 = vsel %vm760, %v1011, -inf
        %1014 = vmax.xlane.f32.xlu0 %v1013
        %v1015 = vpop.xlane.xlu0 %1014
        %v1016 = vsel %vm764, %v1012, -inf
        %1017 = vmax.xlane.f32.xlu0 %v1016
        %v1018 = vpop.xlane.xlu0 %1017
        %v1019 = vsub.f32 %v1011, %v1015
        %v1020 = vsub.f32 %v1012, %v1018
        %v1021 = vmul.f32 %v1019, 1.442695
        %v1022 = vpow.pop %v1021
        %v1023 = vmul.f32 %v1020, 1.442695
        %v1024 = vpow.pop %v1023
        %v1025 = vsel %vm760, %v1022, 0.0
        %1026 = vadd.xlane.f32.xlu0 %v1025
        %v1027 = vpop.xlane.xlu0 %1026
        %v1028 = vsel %vm764, %v1024, 0.0
        %1029 = vadd.xlane.f32.xlu0 %v1028
        %v1030 = vpop.xlane.xlu0 %1029
        %v1031 = vrcp.pop %v1027
        %v1032 = vrcp.pop %v1030
        %v1033 = vmul.f32 %v1022, %v1031
        %v1034 = vmul.f32 %v1024, %v1032
        %v1035 = vpack.c.bf16 %v1034, %v1033
        %1036 = vrot.lane.b32.xlu0 %v706, 48
        %v1037 = vpop.permute.xlu0 %1036
        %v1039 = vsel %vm760, %v1035, 0
        %v1042 = vsel %vm790, %v1037, 0
        %1044 = vmatprep.subr.bf16.mxu0 0
        %1045 = vmatpush1.bf16.msra.mxu0 0
        %1046 = vmatprep.subr.bf16.mxu0 0
        %1047 = vmatpush1.bf16.msra.mxu0 0
        %1048 = vmatprep.subr.bf16.mxu0 0
        %1049 = vmatpush1.bf16.msra.mxu0 0
        %1050 = vmatprep.subr.bf16.mxu0 0
        %1051 = vmatpush1.bf16.msra.mxu0 0
        %1052 = vmatprep.subr.bf16.mxu0 0
        %1053 = vmatpush1.bf16.msra.mxu0 0
        %1054 = vmatprep.subr.bf16.mxu0 0
        %1055 = vmatpush1.bf16.msra.mxu0 0
        %1056 = vmatprep.subr.bf16.mxu0 0
        %1057 = vmatpush1.bf16.msra.mxu0 0
        %1058 = vmatprep.subr.bf16.mxu0 0
        %1059 = vmatpush1.bf16.msra.mxu0 %v1042
        %1060 = vmatprep.subr.bf16.mxu0 0
        %1061 = vmatpush2.bf16.msra.mxu0 0
        %1062 = vmatprep.subr.bf16.mxu0 0
        %1063 = vmatpush2.bf16.msra.mxu0 0
        %1064 = vmatprep.subr.bf16.mxu0 0
        %1065 = vmatpush2.bf16.msra.mxu0 0
        %1066 = vmatprep.subr.bf16.mxu0 0
        %1067 = vmatpush2.bf16.msra.mxu0 0
        %1068 = vmatprep.subr.bf16.mxu0 0
        %1069 = vmatpush2.bf16.msra.mxu0 0
        %1070 = vmatprep.subr.bf16.mxu0 0
        %1071 = vmatpush2.bf16.msra.mxu0 0
        %1072 = vmatprep.subr.bf16.mxu0 0
        %1073 = vmatpush2.bf16.msra.mxu0 0
        %1074 = vmatprep.subr.bf16.mxu0 0
        %1075 = vmatpush2.bf16.msra.mxu0 0
        %1076 = vmatprep.mubr.bf16.mxu0 0
        %1077 = vmatmul.mubr.bf16.gmra.mxu0 %v1039
        %v1078 = vpop.f32.mrf.mxu0
        %v1079 = vadd.f32 0.0, %v1078
        %v1080 = vpop.f32.mrf.mxu0
        %v1081 = vpop.f32.mrf.mxu0
        %v1082 = vadd.f32 0.0, %v1081
        %v1083 = vpop.f32.mrf.mxu0
        %1084 = vdwg.mxu0
        %1085 = vrot.lane.b32.xlu0 %v706, 104
        %v1086 = vpop.permute.xlu0 %1085
        %1087 = vrot.lane.b32.xlu0 %v706, 72
        %v1088 = vpop.permute.xlu0 %1087
        %v1090 = vsel %vm710, %v1086, 0
        %v1093 = vsel %vm710, %v1088, 0
        %1095 = vmatprep.subr.bf16.mxu0 0
        %1096 = vmatpush1.bf16.xpose.msra.mxu0 0
        %1097 = vmatprep.subr.bf16.mxu0 0
        %1098 = vmatpush1.bf16.xpose.msra.mxu0 0
        %1099 = vmatprep.subr.bf16.mxu0 0
        %1100 = vmatpush1.bf16.xpose.msra.mxu0 0
        %1101 = vmatprep.subr.bf16.mxu0 0
        %1102 = vmatpush1.bf16.xpose.msra.mxu0 0
        %1103 = vmatprep.subr.bf16.mxu0 0
        %1104 = vmatpush1.bf16.xpose.msra.mxu0 0
        %1105 = vmatprep.subr.bf16.mxu0 0
        %1106 = vmatpush1.bf16.xpose.msra.mxu0 0
        %1107 = vmatprep.subr.bf16.mxu0 0
        %1108 = vmatpush1.bf16.xpose.msra.mxu0 0
        %1109 = vmatprep.subr.bf16.mxu0 0
        %1110 = vmatpush1.bf16.xpose.msra.mxu0 %v1093
        %1111 = vmatprep.subr.bf16.mxu0 0
        %1112 = vmatpush2.bf16.xpose.msra.mxu0 0
        %1113 = vmatprep.subr.bf16.mxu0 0
        %1114 = vmatpush2.bf16.xpose.msra.mxu0 0
        %1115 = vmatprep.subr.bf16.mxu0 0
        %1116 = vmatpush2.bf16.xpose.msra.mxu0 0
        %1117 = vmatprep.subr.bf16.mxu0 0
        %1118 = vmatpush2.bf16.xpose.msra.mxu0 0
        %1119 = vmatprep.subr.bf16.mxu0 0
        %1120 = vmatpush2.bf16.xpose.msra.mxu0 0
        %1121 = vmatprep.subr.bf16.mxu0 0
        %1122 = vmatpush2.bf16.xpose.msra.mxu0 0
        %1123 = vmatprep.subr.bf16.mxu0 0
        %1124 = vmatpush2.bf16.xpose.msra.mxu0 0
        %1125 = vmatprep.subr.bf16.mxu0 0
        %1126 = vmatpush2.bf16.xpose.msra.mxu0 0
        %1127 = vmatprep.mubr.bf16.mxu0 0
        %1128 = vmatmul.mubr.bf16.gmra.mxu0 %v1090
        %v1129 = vpop.f32.mrf.mxu0
        %v1130 = vadd.f32 0.0, %v1129
        %v1131 = vpop.f32.mrf.mxu0
        %v1132 = vpop.f32.mrf.mxu0
        %v1133 = vadd.f32 0.0, %v1132
        %v1134 = vpop.f32.mrf.mxu0
        %1135 = vdwg.mxu0
        %v1136 = vmul.f32 %v1130, 0.35355338
        %v1137 = vmul.f32 %v1133, 0.35355338
        %v1138 = vsel %vm760, %v1136, -inf
        %1139 = vmax.xlane.f32.xlu0 %v1138
        %v1140 = vpop.xlane.xlu0 %1139
        %v1141 = vsel %vm764, %v1137, -inf
        %1142 = vmax.xlane.f32.xlu0 %v1141
        %v1143 = vpop.xlane.xlu0 %1142
        %v1144 = vsub.f32 %v1136, %v1140
        %v1145 = vsub.f32 %v1137, %v1143
        %v1146 = vmul.f32 %v1144, 1.442695
        %v1147 = vpow.pop %v1146
        %v1148 = vmul.f32 %v1145, 1.442695
        %v1149 = vpow.pop %v1148
        %v1150 = vsel %vm760, %v1147, 0.0
        %1151 = vadd.xlane.f32.xlu0 %v1150
        %v1152 = vpop.xlane.xlu0 %1151
        %v1153 = vsel %vm764, %v1149, 0.0
        %1154 = vadd.xlane.f32.xlu0 %v1153
        %v1155 = vpop.xlane.xlu0 %1154
        %v1156 = vrcp.pop %v1152
        %v1157 = vrcp.pop %v1155
        %v1158 = vmul.f32 %v1147, %v1156
        %v1159 = vmul.f32 %v1149, %v1157
        %v1160 = vpack.c.bf16 %v1159, %v1158
        %1161 = vrot.lane.b32.xlu0 %v706, 40
        %v1162 = vpop.permute.xlu0 %1161
        %v1164 = vsel %vm760, %v1160, 0
        %v1167 = vsel %vm790, %v1162, 0
        %1169 = vmatprep.subr.bf16.mxu0 0
        %1170 = vmatpush1.bf16.msra.mxu0 0
        %1171 = vmatprep.subr.bf16.mxu0 0
        %1172 = vmatpush1.bf16.msra.mxu0 0
        %1173 = vmatprep.subr.bf16.mxu0 0
        %1174 = vmatpush1.bf16.msra.mxu0 0
        %1175 = vmatprep.subr.bf16.mxu0 0
        %1176 = vmatpush1.bf16.msra.mxu0 0
        %1177 = vmatprep.subr.bf16.mxu0 0
        %1178 = vmatpush1.bf16.msra.mxu0 0
        %1179 = vmatprep.subr.bf16.mxu0 0
        %1180 = vmatpush1.bf16.msra.mxu0 0
        %1181 = vmatprep.subr.bf16.mxu0 0
        %1182 = vmatpush1.bf16.msra.mxu0 0
        %1183 = vmatprep.subr.bf16.mxu0 0
        %1184 = vmatpush1.bf16.msra.mxu0 %v1167
        %1185 = vmatprep.subr.bf16.mxu0 0
        %1186 = vmatpush2.bf16.msra.mxu0 0
        %1187 = vmatprep.subr.bf16.mxu0 0
        %1188 = vmatpush2.bf16.msra.mxu0 0
        %1189 = vmatprep.subr.bf16.mxu0 0
        %1190 = vmatpush2.bf16.msra.mxu0 0
        %1191 = vmatprep.subr.bf16.mxu0 0
        %1192 = vmatpush2.bf16.msra.mxu0 0
        %1193 = vmatprep.subr.bf16.mxu0 0
        %1194 = vmatpush2.bf16.msra.mxu0 0
        %1195 = vmatprep.subr.bf16.mxu0 0
        %1196 = vmatpush2.bf16.msra.mxu0 0
        %1197 = vmatprep.subr.bf16.mxu0 0
        %1198 = vmatpush2.bf16.msra.mxu0 0
        %1199 = vmatprep.subr.bf16.mxu0 0
        %1200 = vmatpush2.bf16.msra.mxu0 0
        %1201 = vmatprep.mubr.bf16.mxu0 0
        %1202 = vmatmul.mubr.bf16.gmra.mxu0 %v1164
        %v1203 = vpop.f32.mrf.mxu0
        %v1204 = vadd.f32 0.0, %v1203
        %v1205 = vpop.f32.mrf.mxu0
        %v1206 = vpop.f32.mrf.mxu0
        %v1207 = vadd.f32 0.0, %v1206
        %v1208 = vpop.f32.mrf.mxu0
        %1209 = vdwg.mxu0
        %1212 = vrot.lane.b32.xlu0 %v954, 8
        %v1213 = vpop.permute.xlu0 %1212
        %1214 = vrot.lane.b32.xlu0 %v957, 8
        %v1215 = vpop.permute.xlu0 %1214
        %1220 = vrot.lane.b32.xlu0 %v1079, 16
        %v1221 = vpop.permute.xlu0 %1220
        %1222 = vrot.lane.b32.xlu0 %v1082, 16
        %v1223 = vpop.permute.xlu0 %1222
        %1228 = vrot.lane.b32.xlu0 %v1204, 24
        %v1229 = vpop.permute.xlu0 %1228
        %1230 = vrot.lane.b32.xlu0 %v1207, 24
        %v1231 = vpop.permute.xlu0 %1230
        %v1234 = vsel %vm710, %v829, %v1213
        %v1235 = vsel %vm710, %v832, %v1215
        %vm1236 = vcmask 130048
        %v1237 = vsel %vm1236, %v1234, %v1221
        %v1238 = vsel %vm1236, %v1235, %v1223
        %vm1239 = vcmask 195584
        %v1240 = vsel %vm1239, %v1237, %v1229
        %v1241 = vsel %vm1239, %v1238, %v1231
        %v1242 = vpack.c.bf16 %v701, %v696
        %v1244 = vrot.slane %v1242, 2
        %1245 = vrot.lane.b32.xlu0 %v1244, 96
        %v1246 = vpop.permute.xlu0 %1245
        %v1248 = vsel %vm710, %v1244, 0
        %v1251 = vsel %vm710, %v1246, 0
        %1253 = vmatprep.subr.bf16.mxu0 0
        %1254 = vmatpush1.bf16.xpose.msra.mxu0 0
        %1255 = vmatprep.subr.bf16.mxu0 0
        %1256 = vmatpush1.bf16.xpose.msra.mxu0 0
        %1257 = vmatprep.subr.bf16.mxu0 0
        %1258 = vmatpush1.bf16.xpose.msra.mxu0 0
        %1259 = vmatprep.subr.bf16.mxu0 0
        %1260 = vmatpush1.bf16.xpose.msra.mxu0 0
        %1261 = vmatprep.subr.bf16.mxu0 0
        %1262 = vmatpush1.bf16.xpose.msra.mxu0 0
        %1263 = vmatprep.subr.bf16.mxu0 0
        %1264 = vmatpush1.bf16.xpose.msra.mxu0 0
        %1265 = vmatprep.subr.bf16.mxu0 0
        %1266 = vmatpush1.bf16.xpose.msra.mxu0 0
        %1267 = vmatprep.subr.bf16.mxu0 0
        %1268 = vmatpush1.bf16.xpose.msra.mxu0 %v1251
        %1269 = vmatprep.subr.bf16.mxu0 0
        %1270 = vmatpush2.bf16.xpose.msra.mxu0 0
        %1271 = vmatprep.subr.bf16.mxu0 0
        %1272 = vmatpush2.bf16.xpose.msra.mxu0 0
        %1273 = vmatprep.subr.bf16.mxu0 0
        %1274 = vmatpush2.bf16.xpose.msra.mxu0 0
        %1275 = vmatprep.subr.bf16.mxu0 0
        %1276 = vmatpush2.bf16.xpose.msra.mxu0 0
        %1277 = vmatprep.subr.bf16.mxu0 0
        %1278 = vmatpush2.bf16.xpose.msra.mxu0 0
        %1279 = vmatprep.subr.bf16.mxu0 0
        %1280 = vmatpush2.bf16.xpose.msra.mxu0 0
        %1281 = vmatprep.subr.bf16.mxu0 0
        %1282 = vmatpush2.bf16.xpose.msra.mxu0 0
        %1283 = vmatprep.subr.bf16.mxu0 0
        %1284 = vmatpush2.bf16.xpose.msra.mxu0 0
        %1285 = vmatprep.mubr.bf16.mxu0 0
        %1286 = vmatmul.mubr.bf16.gmra.mxu0 %v1248
        %v1287 = vpop.f32.mrf.mxu0
        %v1288 = vadd.f32 0.0, %v1287
        %v1289 = vpop.f32.mrf.mxu0
        %v1290 = vpop.f32.mrf.mxu0
        %v1291 = vadd.f32 0.0, %v1290
        %v1292 = vpop.f32.mrf.mxu0
        %1293 = vdwg.mxu0
        %v1294 = vmul.f32 %v1288, 0.35355338
        %v1295 = vmul.f32 %v1291, 0.35355338
        %v1296 = vsel %vm760, %v1294, -inf
        %1297 = vmax.xlane.f32.xlu0 %v1296
        %v1298 = vpop.xlane.xlu0 %1297
        %v1299 = vsel %vm764, %v1295, -inf
        %1300 = vmax.xlane.f32.xlu0 %v1299
        %v1301 = vpop.xlane.xlu0 %1300
        %v1302 = vsub.f32 %v1294, %v1298
        %v1303 = vsub.f32 %v1295, %v1301
        %v1304 = vmul.f32 %v1302, 1.442695
        %v1305 = vpow.pop %v1304
        %v1306 = vmul.f32 %v1303, 1.442695
        %v1307 = vpow.pop %v1306
        %v1308 = vsel %vm760, %v1305, 0.0
        %1309 = vadd.xlane.f32.xlu0 %v1308
        %v1310 = vpop.xlane.xlu0 %1309
        %v1311 = vsel %vm764, %v1307, 0.0
        %1312 = vadd.xlane.f32.xlu0 %v1311
        %v1313 = vpop.xlane.xlu0 %1312
        %v1314 = vrcp.pop %v1310
        %v1315 = vrcp.pop %v1313
        %v1316 = vmul.f32 %v1305, %v1314
        %v1317 = vmul.f32 %v1307, %v1315
        %v1318 = vpack.c.bf16 %v1317, %v1316
        %1319 = vrot.lane.b32.xlu0 %v1244, 64
        %v1320 = vpop.permute.xlu0 %1319
        %v1322 = vsel %vm760, %v1318, 0
        %v1325 = vsel %vm790, %v1320, 0
        %1327 = vmatprep.subr.bf16.mxu0 0
        %1328 = vmatpush1.bf16.msra.mxu0 0
        %1329 = vmatprep.subr.bf16.mxu0 0
        %1330 = vmatpush1.bf16.msra.mxu0 0
        %1331 = vmatprep.subr.bf16.mxu0 0
        %1332 = vmatpush1.bf16.msra.mxu0 0
        %1333 = vmatprep.subr.bf16.mxu0 0
        %1334 = vmatpush1.bf16.msra.mxu0 0
        %1335 = vmatprep.subr.bf16.mxu0 0
        %1336 = vmatpush1.bf16.msra.mxu0 0
        %1337 = vmatprep.subr.bf16.mxu0 0
        %1338 = vmatpush1.bf16.msra.mxu0 0
        %1339 = vmatprep.subr.bf16.mxu0 0
        %1340 = vmatpush1.bf16.msra.mxu0 0
        %1341 = vmatprep.subr.bf16.mxu0 0
        %1342 = vmatpush1.bf16.msra.mxu0 %v1325
        %1343 = vmatprep.subr.bf16.mxu0 0
        %1344 = vmatpush2.bf16.msra.mxu0 0
        %1345 = vmatprep.subr.bf16.mxu0 0
        %1346 = vmatpush2.bf16.msra.mxu0 0
        %1347 = vmatprep.subr.bf16.mxu0 0
        %1348 = vmatpush2.bf16.msra.mxu0 0
        %1349 = vmatprep.subr.bf16.mxu0 0
        %1350 = vmatpush2.bf16.msra.mxu0 0
        %1351 = vmatprep.subr.bf16.mxu0 0
        %1352 = vmatpush2.bf16.msra.mxu0 0
        %1353 = vmatprep.subr.bf16.mxu0 0
        %1354 = vmatpush2.bf16.msra.mxu0 0
        %1355 = vmatprep.subr.bf16.mxu0 0
        %1356 = vmatpush2.bf16.msra.mxu0 0
        %1357 = vmatprep.subr.bf16.mxu0 0
        %1358 = vmatpush2.bf16.msra.mxu0 0
        %1359 = vmatprep.mubr.bf16.mxu0 0
        %1360 = vmatmul.mubr.bf16.gmra.mxu0 %v1322
        %v1361 = vpop.f32.mrf.mxu0
        %v1362 = vadd.f32 0.0, %v1361
        %v1363 = vpop.f32.mrf.mxu0
        %v1364 = vpop.f32.mrf.mxu0
        %v1365 = vadd.f32 0.0, %v1364
        %v1366 = vpop.f32.mrf.mxu0
        %1367 = vdwg.mxu0
        %1368 = vrot.lane.b32.xlu0 %v1244, 120
        %v1369 = vpop.permute.xlu0 %1368
        %1370 = vrot.lane.b32.xlu0 %v1244, 88
        %v1371 = vpop.permute.xlu0 %1370
        %v1373 = vsel %vm710, %v1369, 0
        %v1376 = vsel %vm710, %v1371, 0
        %1378 = vmatprep.subr.bf16.mxu0 0
        %1379 = vmatpush1.bf16.xpose.msra.mxu0 0
        %1380 = vmatprep.subr.bf16.mxu0 0
        %1381 = vmatpush1.bf16.xpose.msra.mxu0 0
        %1382 = vmatprep.subr.bf16.mxu0 0
        %1383 = vmatpush1.bf16.xpose.msra.mxu0 0
        %1384 = vmatprep.subr.bf16.mxu0 0
        %1385 = vmatpush1.bf16.xpose.msra.mxu0 0
        %1386 = vmatprep.subr.bf16.mxu0 0
        %1387 = vmatpush1.bf16.xpose.msra.mxu0 0
        %1388 = vmatprep.subr.bf16.mxu0 0
        %1389 = vmatpush1.bf16.xpose.msra.mxu0 0
        %1390 = vmatprep.subr.bf16.mxu0 0
        %1391 = vmatpush1.bf16.xpose.msra.mxu0 0
        %1392 = vmatprep.subr.bf16.mxu0 0
        %1393 = vmatpush1.bf16.xpose.msra.mxu0 %v1376
        %1394 = vmatprep.subr.bf16.mxu0 0
        %1395 = vmatpush2.bf16.xpose.msra.mxu0 0
        %1396 = vmatprep.subr.bf16.mxu0 0
        %1397 = vmatpush2.bf16.xpose.msra.mxu0 0
        %1398 = vmatprep.subr.bf16.mxu0 0
        %1399 = vmatpush2.bf16.xpose.msra.mxu0 0
        %1400 = vmatprep.subr.bf16.mxu0 0
        %1401 = vmatpush2.bf16.xpose.msra.mxu0 0
        %1402 = vmatprep.subr.bf16.mxu0 0
        %1403 = vmatpush2.bf16.xpose.msra.mxu0 0
        %1404 = vmatprep.subr.bf16.mxu0 0
        %1405 = vmatpush2.bf16.xpose.msra.mxu0 0
        %1406 = vmatprep.subr.bf16.mxu0 0
        %1407 = vmatpush2.bf16.xpose.msra.mxu0 0
        %1408 = vmatprep.subr.bf16.mxu0 0
        %1409 = vmatpush2.bf16.xpose.msra.mxu0 0
        %1410 = vmatprep.mubr.bf16.mxu0 0
        %1411 = vmatmul.mubr.bf16.gmra.mxu0 %v1373
        %v1412 = vpop.f32.mrf.mxu0
        %v1413 = vadd.f32 0.0, %v1412
        %v1414 = vpop.f32.mrf.mxu0
        %v1415 = vpop.f32.mrf.mxu0
        %v1416 = vadd.f32 0.0, %v1415
        %v1417 = vpop.f32.mrf.mxu0
        %1418 = vdwg.mxu0
        %v1419 = vmul.f32 %v1413, 0.35355338
        %v1420 = vmul.f32 %v1416, 0.35355338
        %v1421 = vsel %vm760, %v1419, -inf
        %1422 = vmax.xlane.f32.xlu0 %v1421
        %v1423 = vpop.xlane.xlu0 %1422
        %v1424 = vsel %vm764, %v1420, -inf
        %1425 = vmax.xlane.f32.xlu0 %v1424
        %v1426 = vpop.xlane.xlu0 %1425
        %v1427 = vsub.f32 %v1419, %v1423
        %v1428 = vsub.f32 %v1420, %v1426
        %v1429 = vmul.f32 %v1427, 1.442695
        %v1430 = vpow.pop %v1429
        %v1431 = vmul.f32 %v1428, 1.442695
        %v1432 = vpow.pop %v1431
        %v1433 = vsel %vm760, %v1430, 0.0
        %1434 = vadd.xlane.f32.xlu0 %v1433
        %v1435 = vpop.xlane.xlu0 %1434
        %v1436 = vsel %vm764, %v1432, 0.0
        %1437 = vadd.xlane.f32.xlu0 %v1436
        %v1438 = vpop.xlane.xlu0 %1437
        %v1439 = vrcp.pop %v1435
        %v1440 = vrcp.pop %v1438
        %v1441 = vmul.f32 %v1430, %v1439
        %v1442 = vmul.f32 %v1432, %v1440
        %v1443 = vpack.c.bf16 %v1442, %v1441
        %1444 = vrot.lane.b32.xlu0 %v1244, 56
        %v1445 = vpop.permute.xlu0 %1444
        %v1447 = vsel %vm760, %v1443, 0
        %v1450 = vsel %vm790, %v1445, 0
        %1452 = vmatprep.subr.bf16.mxu0 0
        %1453 = vmatpush1.bf16.msra.mxu0 0
        %1454 = vmatprep.subr.bf16.mxu0 0
        %1455 = vmatpush1.bf16.msra.mxu0 0
        %1456 = vmatprep.subr.bf16.mxu0 0
        %1457 = vmatpush1.bf16.msra.mxu0 0
        %1458 = vmatprep.subr.bf16.mxu0 0
        %1459 = vmatpush1.bf16.msra.mxu0 0
        %1460 = vmatprep.subr.bf16.mxu0 0
        %1461 = vmatpush1.bf16.msra.mxu0 0
        %1462 = vmatprep.subr.bf16.mxu0 0
        %1463 = vmatpush1.bf16.msra.mxu0 0
        %1464 = vmatprep.subr.bf16.mxu0 0
        %1465 = vmatpush1.bf16.msra.mxu0 0
        %1466 = vmatprep.subr.bf16.mxu0 0
        %1467 = vmatpush1.bf16.msra.mxu0 %v1450
        %1468 = vmatprep.subr.bf16.mxu0 0
        %1469 = vmatpush2.bf16.msra.mxu0 0
        %1470 = vmatprep.subr.bf16.mxu0 0
        %1471 = vmatpush2.bf16.msra.mxu0 0
        %1472 = vmatprep.subr.bf16.mxu0 0
        %1473 = vmatpush2.bf16.msra.mxu0 0
        %1474 = vmatprep.subr.bf16.mxu0 0
        %1475 = vmatpush2.bf16.msra.mxu0 0
        %1476 = vmatprep.subr.bf16.mxu0 0
        %1477 = vmatpush2.bf16.msra.mxu0 0
        %1478 = vmatprep.subr.bf16.mxu0 0
        %1479 = vmatpush2.bf16.msra.mxu0 0
        %1480 = vmatprep.subr.bf16.mxu0 0
        %1481 = vmatpush2.bf16.msra.mxu0 0
        %1482 = vmatprep.subr.bf16.mxu0 0
        %1483 = vmatpush2.bf16.msra.mxu0 0
        %1484 = vmatprep.mubr.bf16.mxu0 0
        %1485 = vmatmul.mubr.bf16.gmra.mxu0 %v1447
        %v1486 = vpop.f32.mrf.mxu0
        %v1487 = vadd.f32 0.0, %v1486
        %v1488 = vpop.f32.mrf.mxu0
        %v1489 = vpop.f32.mrf.mxu0
        %v1490 = vadd.f32 0.0, %v1489
        %v1491 = vpop.f32.mrf.mxu0
        %1492 = vdwg.mxu0
        %1493 = vrot.lane.b32.xlu0 %v1244, 112
        %v1494 = vpop.permute.xlu0 %1493
        %1495 = vrot.lane.b32.xlu0 %v1244, 80
        %v1496 = vpop.permute.xlu0 %1495
        %v1498 = vsel %vm710, %v1494, 0
        %v1501 = vsel %vm710, %v1496, 0
        %1503 = vmatprep.subr.bf16.mxu0 0
        %1504 = vmatpush1.bf16.xpose.msra.mxu0 0
        %1505 = vmatprep.subr.bf16.mxu0 0
        %1506 = vmatpush1.bf16.xpose.msra.mxu0 0
        %1507 = vmatprep.subr.bf16.mxu0 0
        %1508 = vmatpush1.bf16.xpose.msra.mxu0 0
        %1509 = vmatprep.subr.bf16.mxu0 0
        %1510 = vmatpush1.bf16.xpose.msra.mxu0 0
        %1511 = vmatprep.subr.bf16.mxu0 0
        %1512 = vmatpush1.bf16.xpose.msra.mxu0 0
        %1513 = vmatprep.subr.bf16.mxu0 0
        %1514 = vmatpush1.bf16.xpose.msra.mxu0 0
        %1515 = vmatprep.subr.bf16.mxu0 0
        %1516 = vmatpush1.bf16.xpose.msra.mxu0 0
        %1517 = vmatprep.subr.bf16.mxu0 0
        %1518 = vmatpush1.bf16.xpose.msra.mxu0 %v1501
        %1519 = vmatprep.subr.bf16.mxu0 0
        %1520 = vmatpush2.bf16.xpose.msra.mxu0 0
        %1521 = vmatprep.subr.bf16.mxu0 0
        %1522 = vmatpush2.bf16.xpose.msra.mxu0 0
        %1523 = vmatprep.subr.bf16.mxu0 0
        %1524 = vmatpush2.bf16.xpose.msra.mxu0 0
        %1525 = vmatprep.subr.bf16.mxu0 0
        %1526 = vmatpush2.bf16.xpose.msra.mxu0 0
        %1527 = vmatprep.subr.bf16.mxu0 0
        %1528 = vmatpush2.bf16.xpose.msra.mxu0 0
        %1529 = vmatprep.subr.bf16.mxu0 0
        %1530 = vmatpush2.bf16.xpose.msra.mxu0 0
        %1531 = vmatprep.subr.bf16.mxu0 0
        %1532 = vmatpush2.bf16.xpose.msra.mxu0 0
        %1533 = vmatprep.subr.bf16.mxu0 0
        %1534 = vmatpush2.bf16.xpose.msra.mxu0 0
        %1535 = vmatprep.mubr.bf16.mxu0 0
        %1536 = vmatmul.mubr.bf16.gmra.mxu0 %v1498
        %v1537 = vpop.f32.mrf.mxu0
        %v1538 = vadd.f32 0.0, %v1537
        %v1539 = vpop.f32.mrf.mxu0
        %v1540 = vpop.f32.mrf.mxu0
        %v1541 = vadd.f32 0.0, %v1540
        %v1542 = vpop.f32.mrf.mxu0
        %1543 = vdwg.mxu0
        %v1544 = vmul.f32 %v1538, 0.35355338
        %v1545 = vmul.f32 %v1541, 0.35355338
        %v1546 = vsel %vm760, %v1544, -inf
        %1547 = vmax.xlane.f32.xlu0 %v1546
        %v1548 = vpop.xlane.xlu0 %1547
        %v1549 = vsel %vm764, %v1545, -inf
        %1550 = vmax.xlane.f32.xlu0 %v1549
        %v1551 = vpop.xlane.xlu0 %1550
        %v1552 = vsub.f32 %v1544, %v1548
        %v1553 = vsub.f32 %v1545, %v1551
        %v1554 = vmul.f32 %v1552, 1.442695
        %v1555 = vpow.pop %v1554
        %v1556 = vmul.f32 %v1553, 1.442695
        %v1557 = vpow.pop %v1556
        %v1558 = vsel %vm760, %v1555, 0.0
        %1559 = vadd.xlane.f32.xlu0 %v1558
        %v1560 = vpop.xlane.xlu0 %1559
        %v1561 = vsel %vm764, %v1557, 0.0
        %1562 = vadd.xlane.f32.xlu0 %v1561
        %v1563 = vpop.xlane.xlu0 %1562
        %v1564 = vrcp.pop %v1560
        %v1565 = vrcp.pop %v1563
        %v1566 = vmul.f32 %v1555, %v1564
        %v1567 = vmul.f32 %v1557, %v1565
        %v1568 = vpack.c.bf16 %v1567, %v1566
        %1569 = vrot.lane.b32.xlu0 %v1244, 48
        %v1570 = vpop.permute.xlu0 %1569
        %v1572 = vsel %vm760, %v1568, 0
        %v1575 = vsel %vm790, %v1570, 0
        %1577 = vmatprep.subr.bf16.mxu0 0
        %1578 = vmatpush1.bf16.msra.mxu0 0
        %1579 = vmatprep.subr.bf16.mxu0 0
        %1580 = vmatpush1.bf16.msra.mxu0 0
        %1581 = vmatprep.subr.bf16.mxu0 0
        %1582 = vmatpush1.bf16.msra.mxu0 0
        %1583 = vmatprep.subr.bf16.mxu0 0
        %1584 = vmatpush1.bf16.msra.mxu0 0
        %1585 = vmatprep.subr.bf16.mxu0 0
        %1586 = vmatpush1.bf16.msra.mxu0 0
        %1587 = vmatprep.subr.bf16.mxu0 0
        %1588 = vmatpush1.bf16.msra.mxu0 0
        %1589 = vmatprep.subr.bf16.mxu0 0
        %1590 = vmatpush1.bf16.msra.mxu0 0
        %1591 = vmatprep.subr.bf16.mxu0 0
        %1592 = vmatpush1.bf16.msra.mxu0 %v1575
        %1593 = vmatprep.subr.bf16.mxu0 0
        %1594 = vmatpush2.bf16.msra.mxu0 0
        %1595 = vmatprep.subr.bf16.mxu0 0
        %1596 = vmatpush2.bf16.msra.mxu0 0
        %1597 = vmatprep.subr.bf16.mxu0 0
        %1598 = vmatpush2.bf16.msra.mxu0 0
        %1599 = vmatprep.subr.bf16.mxu0 0
        %1600 = vmatpush2.bf16.msra.mxu0 0
        %1601 = vmatprep.subr.bf16.mxu0 0
        %1602 = vmatpush2.bf16.msra.mxu0 0
        %1603 = vmatprep.subr.bf16.mxu0 0
        %1604 = vmatpush2.bf16.msra.mxu0 0
        %1605 = vmatprep.subr.bf16.mxu0 0
        %1606 = vmatpush2.bf16.msra.mxu0 0
        %1607 = vmatprep.subr.bf16.mxu0 0
        %1608 = vmatpush2.bf16.msra.mxu0 0
        %1609 = vmatprep.mubr.bf16.mxu0 0
        %1610 = vmatmul.mubr.bf16.gmra.mxu0 %v1572
        %v1611 = vpop.f32.mrf.mxu0
        %v1612 = vadd.f32 0.0, %v1611
        %v1613 = vpop.f32.mrf.mxu0
        %v1614 = vpop.f32.mrf.mxu0
        %v1615 = vadd.f32 0.0, %v1614
        %v1616 = vpop.f32.mrf.mxu0
        %1617 = vdwg.mxu0
        %1618 = vrot.lane.b32.xlu0 %v1244, 104
        %v1619 = vpop.permute.xlu0 %1618
        %1620 = vrot.lane.b32.xlu0 %v1244, 72
        %v1621 = vpop.permute.xlu0 %1620
        %v1623 = vsel %vm710, %v1619, 0
        %v1626 = vsel %vm710, %v1621, 0
        %1628 = vmatprep.subr.bf16.mxu0 0
        %1629 = vmatpush1.bf16.xpose.msra.mxu0 0
        %1630 = vmatprep.subr.bf16.mxu0 0
        %1631 = vmatpush1.bf16.xpose.msra.mxu0 0
        %1632 = vmatprep.subr.bf16.mxu0 0
        %1633 = vmatpush1.bf16.xpose.msra.mxu0 0
        %1634 = vmatprep.subr.bf16.mxu0 0
        %1635 = vmatpush1.bf16.xpose.msra.mxu0 0
        %1636 = vmatprep.subr.bf16.mxu0 0
        %1637 = vmatpush1.bf16.xpose.msra.mxu0 0
        %1638 = vmatprep.subr.bf16.mxu0 0
        %1639 = vmatpush1.bf16.xpose.msra.mxu0 0
        %1640 = vmatprep.subr.bf16.mxu0 0
        %1641 = vmatpush1.bf16.xpose.msra.mxu0 0
        %1642 = vmatprep.subr.bf16.mxu0 0
        %1643 = vmatpush1.bf16.xpose.msra.mxu0 %v1626
        %1644 = vmatprep.subr.bf16.mxu0 0
        %1645 = vmatpush2.bf16.xpose.msra.mxu0 0
        %1646 = vmatprep.subr.bf16.mxu0 0
        %1647 = vmatpush2.bf16.xpose.msra.mxu0 0
        %1648 = vmatprep.subr.bf16.mxu0 0
        %1649 = vmatpush2.bf16.xpose.msra.mxu0 0
        %1650 = vmatprep.subr.bf16.mxu0 0
        %1651 = vmatpush2.bf16.xpose.msra.mxu0 0
        %1652 = vmatprep.subr.bf16.mxu0 0
        %1653 = vmatpush2.bf16.xpose.msra.mxu0 0
        %1654 = vmatprep.subr.bf16.mxu0 0
        %1655 = vmatpush2.bf16.xpose.msra.mxu0 0
        %1656 = vmatprep.subr.bf16.mxu0 0
        %1657 = vmatpush2.bf16.xpose.msra.mxu0 0
        %1658 = vmatprep.subr.bf16.mxu0 0
        %1659 = vmatpush2.bf16.xpose.msra.mxu0 0
        %1660 = vmatprep.mubr.bf16.mxu0 0
        %1661 = vmatmul.mubr.bf16.gmra.mxu0 %v1623
        %v1662 = vpop.f32.mrf.mxu0
        %v1663 = vadd.f32 0.0, %v1662
        %v1664 = vpop.f32.mrf.mxu0
        %v1665 = vpop.f32.mrf.mxu0
        %v1666 = vadd.f32 0.0, %v1665
        %v1667 = vpop.f32.mrf.mxu0
        %1668 = vdwg.mxu0
        %v1669 = vmul.f32 %v1663, 0.35355338
        %v1670 = vmul.f32 %v1666, 0.35355338
        %v1671 = vsel %vm760, %v1669, -inf
        %1672 = vmax.xlane.f32.xlu0 %v1671
        %v1673 = vpop.xlane.xlu0 %1672
        %v1674 = vsel %vm764, %v1670, -inf
        %1675 = vmax.xlane.f32.xlu0 %v1674
        %v1676 = vpop.xlane.xlu0 %1675
        %v1677 = vsub.f32 %v1669, %v1673
        %v1678 = vsub.f32 %v1670, %v1676
        %v1679 = vmul.f32 %v1677, 1.442695
        %v1680 = vpow.pop %v1679
        %v1681 = vmul.f32 %v1678, 1.442695
        %v1682 = vpow.pop %v1681
        %v1683 = vsel %vm760, %v1680, 0.0
        %1684 = vadd.xlane.f32.xlu0 %v1683
        %v1685 = vpop.xlane.xlu0 %1684
        %v1686 = vsel %vm764, %v1682, 0.0
        %1687 = vadd.xlane.f32.xlu0 %v1686
        %v1688 = vpop.xlane.xlu0 %1687
        %v1689 = vrcp.pop %v1685
        %v1690 = vrcp.pop %v1688
        %v1691 = vmul.f32 %v1680, %v1689
        %v1692 = vmul.f32 %v1682, %v1690
        %v1693 = vpack.c.bf16 %v1692, %v1691
        %1694 = vrot.lane.b32.xlu0 %v1244, 40
        %v1695 = vpop.permute.xlu0 %1694
        %v1697 = vsel %vm760, %v1693, 0
        %v1700 = vsel %vm790, %v1695, 0
        %1702 = vmatprep.subr.bf16.mxu0 0
        %1703 = vmatpush1.bf16.msra.mxu0 0
        %1704 = vmatprep.subr.bf16.mxu0 0
        %1705 = vmatpush1.bf16.msra.mxu0 0
        %1706 = vmatprep.subr.bf16.mxu0 0
        %1707 = vmatpush1.bf16.msra.mxu0 0
        %1708 = vmatprep.subr.bf16.mxu0 0
        %1709 = vmatpush1.bf16.msra.mxu0 0
        %1710 = vmatprep.subr.bf16.mxu0 0
        %1711 = vmatpush1.bf16.msra.mxu0 0
        %1712 = vmatprep.subr.bf16.mxu0 0
        %1713 = vmatpush1.bf16.msra.mxu0 0
        %1714 = vmatprep.subr.bf16.mxu0 0
        %1715 = vmatpush1.bf16.msra.mxu0 0
        %1716 = vmatprep.subr.bf16.mxu0 0
        %1717 = vmatpush1.bf16.msra.mxu0 %v1700
        %1718 = vmatprep.subr.bf16.mxu0 0
        %1719 = vmatpush2.bf16.msra.mxu0 0
        %1720 = vmatprep.subr.bf16.mxu0 0
        %1721 = vmatpush2.bf16.msra.mxu0 0
        %1722 = vmatprep.subr.bf16.mxu0 0
        %1723 = vmatpush2.bf16.msra.mxu0 0
        %1724 = vmatprep.subr.bf16.mxu0 0
        %1725 = vmatpush2.bf16.msra.mxu0 0
        %1726 = vmatprep.subr.bf16.mxu0 0
        %1727 = vmatpush2.bf16.msra.mxu0 0
        %1728 = vmatprep.subr.bf16.mxu0 0
        %1729 = vmatpush2.bf16.msra.mxu0 0
        %1730 = vmatprep.subr.bf16.mxu0 0
        %1731 = vmatpush2.bf16.msra.mxu0 0
        %1732 = vmatprep.subr.bf16.mxu0 0
        %1733 = vmatpush2.bf16.msra.mxu0 0
        %1734 = vmatprep.mubr.bf16.mxu0 0
        %1735 = vmatmul.mubr.bf16.gmra.mxu0 %v1697
        %v1736 = vpop.f32.mrf.mxu0
        %v1737 = vadd.f32 0.0, %v1736
        %v1738 = vpop.f32.mrf.mxu0
        %v1739 = vpop.f32.mrf.mxu0
        %v1740 = vadd.f32 0.0, %v1739
        %v1741 = vpop.f32.mrf.mxu0
        %1742 = vdwg.mxu0
        %1745 = vrot.lane.b32.xlu0 %v1487, 8
        %v1746 = vpop.permute.xlu0 %1745
        %1747 = vrot.lane.b32.xlu0 %v1490, 8
        %v1748 = vpop.permute.xlu0 %1747
        %1753 = vrot.lane.b32.xlu0 %v1612, 16
        %v1754 = vpop.permute.xlu0 %1753
        %1755 = vrot.lane.b32.xlu0 %v1615, 16
        %v1756 = vpop.permute.xlu0 %1755
        %1761 = vrot.lane.b32.xlu0 %v1737, 24
        %v1762 = vpop.permute.xlu0 %1761
        %1763 = vrot.lane.b32.xlu0 %v1740, 24
        %v1764 = vpop.permute.xlu0 %1763
        %v1767 = vsel %vm710, %v1362, %v1746
        %v1768 = vsel %vm710, %v1365, %v1748
        %v1769 = vsel %vm1236, %v1767, %v1754
        %v1770 = vsel %vm1236, %v1768, %v1756
        %v1771 = vsel %vm1239, %v1769, %v1762
        %v1772 = vsel %vm1239, %v1770, %v1764
        %vm1775 = vcmask 1043456
        %v1776 = vrot.slane %v1771, 4
        %v1777 = vrot.slane %v1772, 4
        %v1778 = vsel %vm1775, %v1776, %v1777
        %v1781 = vsel %vm1775, %v1241, %v1776
        %v1782 = vpack.c.bf16 %v1781, %v1240
        %v1783 = vpack.c.bf16 %v1778, %v1778
        %1784 = vrot.lane.b32.xlu0 %v648, 32
        %v1785 = vpop.permute.xlu0 %1784
        %1786 = vrot.lane.b32.xlu0 %v649, 32
        %v1787 = vpop.permute.xlu0 %1786
        %v1791 = vsel %vm577, %v1782, 0
        %v1794 = vsel %vm577, %v1783, 0
        %1796 = vmatprep.subr.bf16.mxu0 0
        %1797 = vmatpush1.bf16.msra.mxu0 0
        %1798 = vmatprep.subr.bf16.mxu0 0
        %1799 = vmatpush1.bf16.msra.mxu0 0
        %1800 = vmatprep.subr.bf16.mxu0 0
        %1801 = vmatpush1.bf16.msra.mxu0 0
        %1802 = vmatprep.subr.bf16.mxu0 0
        %1803 = vmatpush1.bf16.msra.mxu0 0
        %1804 = vmatprep.subr.bf16.mxu0 0
        %1805 = vmatpush1.bf16.msra.mxu0 0
        %1806 = vmatprep.subr.bf16.mxu0 0
        %1807 = vmatpush1.bf16.msra.mxu0 0
        %1808 = vmatprep.subr.bf16.mxu0 0
        %1809 = vmatpush1.bf16.msra.mxu0 %v1787
        %1810 = vmatprep.subr.bf16.mxu0 0
        %1811 = vmatpush1.bf16.msra.mxu0 %v1785
        %1812 = vmatprep.subr.bf16.mxu0 0
        %1813 = vmatpush2.bf16.msra.mxu0 0
        %1814 = vmatprep.subr.bf16.mxu0 0
        %1815 = vmatpush2.bf16.msra.mxu0 0
        %1816 = vmatprep.subr.bf16.mxu0 0
        %1817 = vmatpush2.bf16.msra.mxu0 0
        %1818 = vmatprep.subr.bf16.mxu0 0
        %1819 = vmatpush2.bf16.msra.mxu0 0
        %1820 = vmatprep.subr.bf16.mxu0 0
        %1821 = vmatpush2.bf16.msra.mxu0 0
        %1822 = vmatprep.subr.bf16.mxu0 0
        %1823 = vmatpush2.bf16.msra.mxu0 0
        %1824 = vmatprep.subr.bf16.mxu0 0
        %1825 = vmatpush2.bf16.msra.mxu0 0
        %1826 = vmatprep.subr.bf16.mxu0 0
        %1827 = vmatpush2.bf16.msra.mxu0 0
        %1828 = vmatprep.mubr.bf16.mxu0 0
        %1829 = vmatmul.mubr.bf16.gmra.mxu0 %v1791
        %v1830 = vpop.f32.mrf.mxu0
        %v1831 = vadd.f32 0.0, %v1830
        %v1832 = vpop.f32.mrf.mxu0
        %v1833 = vpop.f32.mrf.mxu0
        %v1834 = vadd.f32 0.0, %v1833
        %v1835 = vpop.f32.mrf.mxu0
        %1836 = vmatprep.mubr.bf16.mxu0 0
        %1837 = vmatmul.mubr.bf16.gmra.mxu0 %v1794
        %v1838 = vpop.f32.mrf.mxu0
        %v1839 = vadd.f32 0.0, %v1838
        %v1840 = vpop.f32.mrf.mxu0
        %v1841 = vpop.f32.mrf.mxu0
        %v1842 = vpop.f32.mrf.mxu0
        %1843 = vdwg.mxu0
        %v1844 = vadd.f32 %v574, %v1831
        %v1845 = vadd.f32 %v575, %v1834
        %v1846 = vadd.f32 %v576, %v1839
        %v1847 = vlaneseq
        %v1848 = vshrl.u32 %v1847, 7
        %v1849 = vsub.s32 4, %v1848
        %v1850 = vrot.slane %v572, %v1849
        %v1851 = vadd.f32 %v1844, %v1850
        %v1852 = vadd.f32 %v1845, %v1850
        %v1853 = vadd.f32 %v1846, %v1850
        %v1854 = vsel %vm577, %v1851, 0.0
        %1855 = vadd.xlane.f32.xlu0 %v1854
        %v1856 = vpop.xlane.xlu0 %1855
        %v1857 = vsel %vm577, %v1852, 0.0
        %1858 = vadd.xlane.f32.xlu0 %v1857
        %v1859 = vpop.xlane.xlu0 %1858
        %v1860 = vsel %vm577, %v1853, 0.0
        %1861 = vadd.xlane.f32.xlu0 %v1860
        %v1862 = vpop.xlane.xlu0 %1861
        %v1863 = vmul.f32 %v1856, %v587
        %v1864 = vmul.f32 %v1859, %v587
        %v1865 = vmul.f32 %v1862, %v587
        %v1866 = vsub.f32 %v1851, %v1863
        %v1867 = vsub.f32 %v1852, %v1864
        %v1868 = vsub.f32 %v1853, %v1865
        %v1869 = vmul.f32 %v1866, %v1866
        %v1870 = vmul.f32 %v1867, %v1867
        %v1871 = vmul.f32 %v1868, %v1868
        %v1872 = vsel %vm577, %v1869, 0.0
        %1873 = vadd.xlane.f32.xlu0 %v1872
        %v1874 = vpop.xlane.xlu0 %1873
        %v1875 = vsel %vm577, %v1870, 0.0
        %1876 = vadd.xlane.f32.xlu0 %v1875
        %v1877 = vpop.xlane.xlu0 %1876
        %v1878 = vsel %vm577, %v1871, 0.0
        %1879 = vadd.xlane.f32.xlu0 %v1878
        %v1880 = vpop.xlane.xlu0 %1879
        %v1881 = vmul.f32 %v1874, %v587
        %v1882 = vmul.f32 %v1877, %v587
        %v1883 = vmul.f32 %v1880, %v587
        %v1884 = vadd.f32 %v1881, 1e-05
        %v1885 = vadd.f32 %v1882, 1e-05
        %v1886 = vadd.f32 %v1883, 1e-05
        %v1887 = vrsqrt.pop %v1884
        %v1888 = vrsqrt.pop %v1885
        %v1889 = vrsqrt.pop %v1886
        %v1890 = vmul.f32 %v1866, %v1887
        %v1891 = vmul.f32 %v1867, %v1888
        %v1892 = vmul.f32 %v1868, %v1889
        %v1893 = vlaneseq
        %v1894 = vshrl.u32 %v1893, 7
        %v1895 = vsub.s32 2, %v1894
        %v1896 = vrot.slane %v572, %v1895
        %v1897 = vmul.f32 %v1890, %v1896
        %v1898 = vmul.f32 %v1891, %v1896
        %v1899 = vmul.f32 %v1892, %v1896
        %v1900 = vlaneseq
        %v1901 = vshrl.u32 %v1900, 7
        %v1902 = vsub.s32 3, %v1901
        %v1903 = vrot.slane %v572, %v1902
        %v1904 = vadd.f32 %v1897, %v1903
        %v1905 = vadd.f32 %v1898, %v1903
        %v1906 = vadd.f32 %v1899, %v1903
        %v1907 = vpack.c.bf16 %v1905, %v1904
        %v1908 = vpack.c.bf16 %v1906, %v1906
        %v1909 = vld [vmem:[%s454] sm:$0xf]
        %v1910 = vld [vmem:[%s454 + $0x4] sm:$0xf]
        %v1911 = vld [vmem:[%s454 + $0x8] sm:$0xf]
        %v1912 = vld [vmem:[%s454 + $0xc] sm:$0xf]
        %v1913 = vlaneseq
        %v1914 = vshrl.u32 %v1913, 7
        %v1915 = vsub.s32 1, %v1914
        %v1916 = vrot.slane %v573, %v1915
        %v1921 = vunpack.c.l.b16 %v1909
        %v1922 = vunpack.c.l.b16 %v1910
        %v1923 = vunpack.c.l.b16 %v1911
        %v1924 = vunpack.c.l.b16 %v1912
        %v1925 = vpack.c.b16 %v1922, %v1921
        %v1926 = vpack.c.b16 %v1924, %v1923
        %1929 = vrot.lane.b32.xlu0 %v638, 32
        %v1930 = vpop.permute.xlu0 %1929
        %1931 = vrot.lane.b32.xlu0 %v1916, 32
        %v1932 = vpop.permute.xlu0 %1931
        %v1933 = vsel %vm577, %v1930, %v1932
        %v1936 = vsel %vm577, %v1907, 0
        %v1939 = vsel %vm577, %v1908, 0
        %1941 = vmatprep.subr.bf16.mxu0 0
        %1942 = vmatpush1.bf16.msra.mxu0 0
        %1943 = vmatprep.subr.bf16.mxu0 0
        %1944 = vmatpush1.bf16.msra.mxu0 0
        %1945 = vmatprep.subr.bf16.mxu0 0
        %1946 = vmatpush1.bf16.msra.mxu0 0
        %1947 = vmatprep.subr.bf16.mxu0 0
        %1948 = vmatpush1.bf16.msra.mxu0 0
        %1949 = vmatprep.subr.bf16.mxu0 0
        %1950 = vmatpush1.bf16.msra.mxu0 0
        %1951 = vmatprep.subr.bf16.mxu0 0
        %1952 = vmatpush1.bf16.msra.mxu0 0
        %1953 = vmatprep.subr.bf16.mxu0 0
        %1954 = vmatpush1.bf16.msra.mxu0 %v1926
        %1955 = vmatprep.subr.bf16.mxu0 0
        %1956 = vmatpush1.bf16.msra.mxu0 %v1925
        %1957 = vmatprep.subr.bf16.mxu0 0
        %1958 = vmatpush2.bf16.msra.mxu0 0
        %1959 = vmatprep.subr.bf16.mxu0 0
        %1960 = vmatpush2.bf16.msra.mxu0 0
        %1961 = vmatprep.subr.bf16.mxu0 0
        %1962 = vmatpush2.bf16.msra.mxu0 0
        %1963 = vmatprep.subr.bf16.mxu0 0
        %1964 = vmatpush2.bf16.msra.mxu0 0
        %1965 = vmatprep.subr.bf16.mxu0 0
        %1966 = vmatpush2.bf16.msra.mxu0 0
        %1967 = vmatprep.subr.bf16.mxu0 0
        %1968 = vmatpush2.bf16.msra.mxu0 0
        %1969 = vmatprep.subr.bf16.mxu0 0
        %1970 = vmatpush2.bf16.msra.mxu0 0
        %1971 = vmatprep.subr.bf16.mxu0 0
        %1972 = vmatpush2.bf16.msra.mxu0 0
        %1973 = vmatprep.mubr.bf16.mxu0 0
        %1974 = vmatmul.mubr.bf16.gmra.mxu0 %v1936
        %v1975 = vpop.f32.mrf.mxu0
        %v1976 = vadd.f32 %v1933, %v1975
        %v1977 = vpop.f32.mrf.mxu0
        %v1978 = vpop.f32.mrf.mxu0
        %v1979 = vadd.f32 %v1933, %v1978
        %v1980 = vpop.f32.mrf.mxu0
        %1981 = vmatprep.mubr.bf16.mxu0 0
        %1982 = vmatmul.mubr.bf16.gmra.mxu0 %v1939
        %v1983 = vpop.f32.mrf.mxu0
        %v1984 = vadd.f32 %v1933, %v1983
        %v1985 = vpop.f32.mrf.mxu0
        %v1986 = vpop.f32.mrf.mxu0
        %v1987 = vpop.f32.mrf.mxu0
        %1988 = vdwg.mxu0
        %v1989 = vmul.f32 %v1976, 1.702
        %v1990 = vmul.f32 %v1979, 1.702
        %v1991 = vmul.f32 %v1984, 1.702
        %v1992 = vxor.u32 %v1989, 2147483648
        %v1993 = vxor.u32 %v1990, 2147483648
        %v1994 = vxor.u32 %v1991, 2147483648
        %v1995 = vmul.f32 %v1992, 1.442695
        %v1996 = vpow.pop %v1995
        %v1997 = vmul.f32 %v1993, 1.442695
        %v1998 = vpow.pop %v1997
        %v1999 = vmul.f32 %v1994, 1.442695
        %v2000 = vpow.pop %v1999
        %v2001 = vadd.f32 %v1996, 1.0
        %v2002 = vadd.f32 %v1998, 1.0
        %v2003 = vadd.f32 %v2000, 1.0
        %v2004 = vrcp.pop %v2001
        %v2005 = vmul.f32 1.0, %v2004
        %v2006 = vrcp.pop %v2002
        %v2007 = vmul.f32 1.0, %v2006
        %v2008 = vrcp.pop %v2003
        %v2009 = vmul.f32 1.0, %v2008
        %v2010 = vmul.f32 %v1976, %v2005
        %v2011 = vmul.f32 %v1979, %v2007
        %v2012 = vmul.f32 %v1984, %v2009
        %v2013 = vpack.c.bf16 %v2011, %v2010
        %v2014 = vpack.c.bf16 %v2012, %v2012
        %v2015 = vld [vmem:[%s459] sm:$0xf]
        %v2016 = vld [vmem:[%s459 + $0x4] sm:$0xf]
        %v2017 = vld [vmem:[%s459 + $0x8] sm:$0xf]
        %v2018 = vld [vmem:[%s459 + $0xc] sm:$0xf]
        %v2019 = vld [vmem:[%s459 + $0x10] sm:$0xf]
        %v2020 = vld [vmem:[%s459 + $0x14] sm:$0xf]
        %v2021 = vld [vmem:[%s459 + $0x18] sm:$0xf]
        %v2022 = vld [vmem:[%s459 + $0x1c] sm:$0xf]
        %v2023 = vld [vmem:[%s459 + $0x20] sm:$0xf]
        %v2024 = vld [vmem:[%s459 + $0x24] sm:$0xf]
        %v2025 = vld [vmem:[%s459 + $0x28] sm:$0xf]
        %v2026 = vld [vmem:[%s459 + $0x2c] sm:$0xf]
        %v2027 = vld [vmem:[%s459 + $0x30] sm:$0xf]
        %v2028 = vld [vmem:[%s459 + $0x34] sm:$0xf]
        %v2029 = vld [vmem:[%s459 + $0x38] sm:$0xf]
        %v2030 = vld [vmem:[%s459 + $0x3c] sm:$0xf]
        %v2047 = vunpack.c.l.b16 %v2015
        %v2048 = vunpack.c.l.b16 %v2016
        %v2049 = vunpack.c.l.b16 %v2017
        %v2050 = vunpack.c.l.b16 %v2018
        %v2051 = vunpack.c.l.b16 %v2019
        %v2052 = vunpack.c.l.b16 %v2020
        %v2053 = vunpack.c.l.b16 %v2021
        %v2054 = vunpack.c.l.b16 %v2022
        %v2055 = vunpack.c.l.b16 %v2023
        %v2056 = vunpack.c.l.b16 %v2024
        %v2057 = vunpack.c.l.b16 %v2025
        %v2058 = vunpack.c.l.b16 %v2026
        %v2059 = vunpack.c.l.b16 %v2027
        %v2060 = vunpack.c.l.b16 %v2028
        %v2061 = vunpack.c.l.b16 %v2029
        %v2062 = vunpack.c.l.b16 %v2030
        %v2063 = vpack.c.b16 %v2048, %v2047
        %v2064 = vpack.c.b16 %v2050, %v2049
        %v2065 = vpack.c.b16 %v2052, %v2051
        %v2066 = vpack.c.b16 %v2054, %v2053
        %v2067 = vpack.c.b16 %v2056, %v2055
        %v2068 = vpack.c.b16 %v2058, %v2057
        %v2069 = vpack.c.b16 %v2060, %v2059
        %v2070 = vpack.c.b16 %v2062, %v2061
        %2079 = vmatprep.subr.bf16.mxu0 0
        %2080 = vmatpush1.bf16.msra.mxu0 %v2070
        %2081 = vmatprep.subr.bf16.mxu0 0
        %2082 = vmatpush1.bf16.msra.mxu0 %v2069
        %2083 = vmatprep.subr.bf16.mxu0 0
        %2084 = vmatpush1.bf16.msra.mxu0 %v2068
        %2085 = vmatprep.subr.bf16.mxu0 0
        %2086 = vmatpush1.bf16.msra.mxu0 %v2067
        %2087 = vmatprep.subr.bf16.mxu0 0
        %2088 = vmatpush1.bf16.msra.mxu0 %v2066
        %2089 = vmatprep.subr.bf16.mxu0 0
        %2090 = vmatpush1.bf16.msra.mxu0 %v2065
        %2091 = vmatprep.subr.bf16.mxu0 0
        %2092 = vmatpush1.bf16.msra.mxu0 %v2064
        %2093 = vmatprep.subr.bf16.mxu0 0
        %2094 = vmatpush1.bf16.msra.mxu0 %v2063
        %2095 = vmatprep.subr.bf16.mxu0 0
        %2096 = vmatpush2.bf16.msra.mxu0 0
        %2097 = vmatprep.subr.bf16.mxu0 0
        %2098 = vmatpush2.bf16.msra.mxu0 0
        %2099 = vmatprep.subr.bf16.mxu0 0
        %2100 = vmatpush2.bf16.msra.mxu0 0
        %2101 = vmatprep.subr.bf16.mxu0 0
        %2102 = vmatpush2.bf16.msra.mxu0 0
        %2103 = vmatprep.subr.bf16.mxu0 0
        %2104 = vmatpush2.bf16.msra.mxu0 0
        %2105 = vmatprep.subr.bf16.mxu0 0
        %2106 = vmatpush2.bf16.msra.mxu0 0
        %2107 = vmatprep.subr.bf16.mxu0 0
        %2108 = vmatpush2.bf16.msra.mxu0 0
        %2109 = vmatprep.subr.bf16.mxu0 0
        %2110 = vmatpush2.bf16.msra.mxu0 0
        %2111 = vmatprep.mubr.bf16.mxu0 0
        %2112 = vmatmul.mubr.bf16.gmra.mxu0 %v2013
        %v2113 = vpop.f32.mrf.mxu0
        %v2114 = vadd.f32 0.0, %v2113
        %v2115 = vpop.f32.mrf.mxu0
        %v2116 = vpop.f32.mrf.mxu0
        %v2117 = vadd.f32 0.0, %v2116
        %v2118 = vpop.f32.mrf.mxu0
        %2119 = vmatprep.mubr.bf16.mxu0 0
        %2120 = vmatmul.mubr.bf16.gmra.mxu0 %v2014
        %v2121 = vpop.f32.mrf.mxu0
        %v2122 = vadd.f32 0.0, %v2121
        %v2123 = vpop.f32.mrf.mxu0
        %v2124 = vpop.f32.mrf.mxu0
        %v2125 = vpop.f32.mrf.mxu0
        %2126 = vdwg.mxu0
        %v2127 = vadd.f32 %v1851, %v2114
        %v2128 = vadd.f32 %v1852, %v2117
        %v2129 = vadd.f32 %v1853, %v2122
        %v2130 = vlaneseq
        %v2131 = vshrl.u32 %v2130, 7
        %v2132 = vsub.s32 5, %v2131
        %v2133 = vrot.slane %v572, %v2132
        %v2134 = vadd.f32 %v2127, %v2133
        %v2135 = vadd.f32 %v2128, %v2133
        %v2136 = vadd.f32 %v2129, %v2133
        %2137 = vst.msk [vmem:[#allocation2] sm:$0xff] %vm577, %v2134
        %2138 = vst.msk [vmem:[#allocation2 + $0x8] sm:$0xff] %vm577, %v2135
        %2139 = vst.msk [vmem:[#allocation2 + $0x10] sm:$0xff] %vm577, %v2136
        %p2140 = scmp.eq.s32.totalorder %s21, 3
        // Predicated region
        $region106: #{vision_encoder_forward.1} parent=92 // pred_check
          %p2141 = pneg %p2140
        $region107: #{vision_encoder_forward.1} parent=92 // pred_check_branch
          %2143 = sbr.rel (%p2141) target = $region109
        $region108: #{vision_encoder_forward.1} parent=92 // pred_region
          %v2145 = vrot.slane %v2135, 3
          %vm2147 = vcmask 1040384
          %v2148 = vsel %vm2147, %v2134, %v2145
          %v2149 = vld [vmem:[%s2 + $0x2] sm:$0x1]
          %v2150 = vld [vmem:[%s2 + $0x3] sm:$0x1]
          %vm2151 = vcmask 254976
          %v2152 = vsel %vm2151, %v2148, 0.0
          %2153 = vadd.xlane.f32.xlu0 %v2152
          %v2154 = vpop.xlane.xlu0 %2153
          %v2155 = vmul.f32 %v2154, %v587
          %v2156 = vsub.f32 %v2148, %v2155
          %v2157 = vmul.f32 %v2156, %v2156
          %v2158 = vsel %vm2151, %v2157, 0.0
          %2159 = vadd.xlane.f32.xlu0 %v2158
          %v2160 = vpop.xlane.xlu0 %2159
          %v2161 = vmul.f32 %v2160, %v587
          %v2162 = vadd.f32 %v2161, 1e-05
          %v2163 = vrsqrt.pop %v2162
          %v2164 = vmul.f32 %v2156, %v2163
          %v2165 = vlaneseq
          %v2166 = vshrl.u32 %v2165, 7
          %v2167 = vsub.s32 0, %v2166
          %v2168 = vrot.slane %v2149, %v2167
          %v2169 = vmul.f32 %v2164, %v2168
          %v2170 = vlaneseq
          %v2171 = vshrl.u32 %v2170, 7
          %v2172 = vsub.s32 0, %v2171
          %v2173 = vrot.slane %v2150, %v2172
          %v2174 = vadd.f32 %v2169, %v2173
          %v2175 = vpack.c.bf16 %v2174, %v2174
          %v2176 = vld [vmem:[%s3] sm:$0xf]
          %v2177 = vld [vmem:[%s3 + $0x4] sm:$0xf]
          %v2178 = vld [vmem:[%s3 + $0x8] sm:$0xf]
          %v2179 = vld [vmem:[%s3 + $0xc] sm:$0xf]
          %v2184 = vunpack.c.l.b16 %v2176
          %v2185 = vunpack.c.l.b16 %v2177
          %v2186 = vunpack.c.l.b16 %v2178
          %v2187 = vunpack.c.l.b16 %v2179
          %v2188 = vpack.c.b16 %v2185, %v2184
          %v2189 = vpack.c.b16 %v2187, %v2186
          %v2193 = vsel %vm577, %v2175, 0
          %2195 = vmatprep.subr.bf16.mxu0 0
          %2196 = vmatpush1.bf16.msra.mxu0 0
          %2197 = vmatprep.subr.bf16.mxu0 0
          %2198 = vmatpush1.bf16.msra.mxu0 0
          %2199 = vmatprep.subr.bf16.mxu0 0
          %2200 = vmatpush1.bf16.msra.mxu0 0
          %2201 = vmatprep.subr.bf16.mxu0 0
          %2202 = vmatpush1.bf16.msra.mxu0 0
          %2203 = vmatprep.subr.bf16.mxu0 0
          %2204 = vmatpush1.bf16.msra.mxu0 0
          %2205 = vmatprep.subr.bf16.mxu0 0
          %2206 = vmatpush1.bf16.msra.mxu0 0
          %2207 = vmatprep.subr.bf16.mxu0 0
          %2208 = vmatpush1.bf16.msra.mxu0 %v2189
          %2209 = vmatprep.subr.bf16.mxu0 0
          %2210 = vmatpush1.bf16.msra.mxu0 %v2188
          %2211 = vmatprep.subr.bf16.mxu0 0
          %2212 = vmatpush2.bf16.msra.mxu0 0
          %2213 = vmatprep.subr.bf16.mxu0 0
          %2214 = vmatpush2.bf16.msra.mxu0 0
          %2215 = vmatprep.subr.bf16.mxu0 0
          %2216 = vmatpush2.bf16.msra.mxu0 0
          %2217 = vmatprep.subr.bf16.mxu0 0
          %2218 = vmatpush2.bf16.msra.mxu0 0
          %2219 = vmatprep.subr.bf16.mxu0 0
          %2220 = vmatpush2.bf16.msra.mxu0 0
          %2221 = vmatprep.subr.bf16.mxu0 0
          %2222 = vmatpush2.bf16.msra.mxu0 0
          %2223 = vmatprep.subr.bf16.mxu0 0
          %2224 = vmatpush2.bf16.msra.mxu0 0
          %2225 = vmatprep.subr.bf16.mxu0 0
          %2226 = vmatpush2.bf16.msra.mxu0 0
          %2227 = vmatprep.mubr.bf16.mxu0 0
          %2228 = vmatmul.mubr.bf16.gmra.mxu0 %v2193
          %v2229 = vpop.f32.mrf.mxu0
          %v2230 = vadd.f32 0.0, %v2229
          %v2231 = vpop.f32.mrf.mxu0
          %v2232 = vpop.f32.mrf.mxu0
          %v2233 = vpop.f32.mrf.mxu0
          %2234 = vdwg.mxu0
          %vm2235 = vcmask 123904
          %2236 = vst.msk [vmem:[#allocation4] sm:$0x3] %vm2235, %v2230
        $region109: #{vision_encoder_forward.1} parent=92 // pred_fallthru
          _
        // Predicated region
        $region110: #{vision_encoder_forward.1} parent=92 // pred_check
          %p2237 = pneg %p257
        $region111: #{vision_encoder_forward.1} parent=92 // pred_check_branch
          %2239 = sbr.rel (%p2237) target = $region113
        $region112: #{vision_encoder_forward.1} parent=92 // pred_region
          %s2241 = ssub.s32 32, 32
          %2242 = vsyncadd [#allocation5], %s2241
          %s2244 = sshll.u32 [#allocation4], 4
          %s2245 = int_to_ptr.vmem [resolvable:$true] %s2244
          %2247 = dma.vmem_to_hbm [thread:$0]  %s2245, 32, %s9, [#allocation5]
        $region113: #{vision_encoder_forward.1} parent=92 // pred_fallthru
          _
        // Predicated region
        $region114: #{vision_encoder_forward.1} parent=92 // pred_check
          %p2248 = pneg %p257
        $region115: #{vision_encoder_forward.1} parent=92 // pred_check_branch
          %2250 = sbr.rel (%p2248) target = $region117
        $region116: #{vision_encoder_forward.1} parent=92 // pred_region
          %2251 = dma.done [#allocation5], 32
        $region117: #{vision_encoder_forward.1} parent=92 // pred_fallthru
          _
      $region93: #{vision_encoder_forward.1} parent=5 // pred_fallthru
        _
      %p2252 = scmp.le.s32.totalorder 2, %s16
      // Predicated region
      $region118: #{vision_encoder_forward.1} parent=5 // pred_check
        %p2253 = pneg %p2252
      $region119: #{vision_encoder_forward.1} parent=5 // pred_check_branch
        %2255 = sbr.rel (%p2253) target = $region121
      $region120: #{vision_encoder_forward.1} parent=5 // pred_region
        %s2256 = ssub.s32 %s16, 2
      $region121: #{vision_encoder_forward.1} parent=5 // pred_fallthru
        _
    $region6: #{vision_encoder_forward.1} parent=1 // loop_footer
      %s20 = sadd.s32 1, %s16
    $region7: #{vision_encoder_forward.1} parent=1 // loop_footer_branch
      %15 = sbr.rel target = $region3
    $region8: #{vision_encoder_forward.1} parent=1 // loop_exit
      _
    %2257 = vsyncpa [#allocation5], 1
    %s2258 = scalar_lea.sflag [#allocation5], 1
    %2259 = vsyncpa %s2258, 1

</llo_original>
